<compile_context>
chip_gen: v5e
topology: v5e:2x2
jax: 0.10.0
libtpu: 0.0.40
codegen_flags: <defaults>
</compile_context>

<pallas_src>
import math

import jax
import jax.numpy as jnp
from jax.experimental import pallas as pl
from jax.experimental.pallas import tpu as pltpu


TILE_N = 256  # column tile of the final 1024 x out_dim layer (multiple of 128)


# ------------------------------- kernel --------------------------------------

def _generator_fused_kernel(
    z_ref,
    w0_ref, b0_ref,
    w1_ref, b1_ref, g1_ref, be1_ref,
    w2_ref, b2_ref, g2_ref, be2_ref,
    w3_ref, b3_ref, g3_ref, be3_ref,
    b4_ref, w4_hbm,
    o_ref,
    w4_buf, sem,
):
    """Whole Generator MLP in one kernel; w4 streamed from HBM in N-tiles."""
    n_tiles = w4_hbm.shape[0]
    tile_n = w4_buf.shape[-1]

    def fetch(t, slot):
        pltpu.make_async_copy(w4_hbm.at[t], w4_buf.at[slot], sem.at[slot]).start()

    # Issue the first w4 tile DMA now so it overlaps layers 0-3 compute.
    fetch(0, 0)

    def linear(x_bf16, w_ref, b_ref):
        # bf16 operands on the MXU, f32 accumulation, f32 bias add.
        return jnp.dot(x_bf16, w_ref[...],
                       preferred_element_type=jnp.float32) + b_ref[...]

    def lrelu(y):
        return jnp.maximum(y, 0.2 * y)

    def bn_lrelu(y, g_ref, beta_ref):
        # Single-pass batch stats (train mode, biased variance, eps = 0.8).
        mean = jnp.mean(y, axis=0, keepdims=True)
        mean_sq = jnp.mean(y * y, axis=0, keepdims=True)
        var = jnp.maximum(mean_sq - mean * mean, 0.0)
        scale = g_ref[...] * jax.lax.rsqrt(var + 0.8)
        shift = beta_ref[...] - mean * scale
        return lrelu(y * scale + shift)

    h = lrelu(linear(z_ref[...].astype(jnp.bfloat16), w0_ref, b0_ref))
    h = bn_lrelu(linear(h.astype(jnp.bfloat16), w1_ref, b1_ref), g1_ref, be1_ref)
    h = bn_lrelu(linear(h.astype(jnp.bfloat16), w2_ref, b2_ref), g2_ref, be2_ref)
    h = bn_lrelu(linear(h.astype(jnp.bfloat16), w3_ref, b3_ref), g3_ref, be3_ref)
    h_bf = h.astype(jnp.bfloat16)  # (B, 1024)

    # Final layer: stream w4 column tiles, double-buffered.
    @pl.loop(0, n_tiles)
    def _(t):
        slot = t & 1
        pltpu.make_async_copy(w4_hbm.at[0], w4_buf.at[slot], sem.at[slot]).wait()

        @pl.when(t + 1 < n_tiles)
        def _():
            fetch(t + 1, 1 - slot)

        start = pl.multiple_of(t * tile_n, tile_n)
        y = jnp.dot(h_bf, w4_buf[slot], preferred_element_type=jnp.float32) \
            + b4_ref[:, pl.ds(start, tile_n)]
        o_ref[:, pl.ds(start, tile_n)] = jnp.tanh(y)


# ------------------------------ parameters -----------------------------------

def _init_linear(key, din, dout):
    """PyTorch nn.Linear default init: U(-1/sqrt(din), 1/sqrt(din)), f32."""
    kw, kb = jax.random.split(key)
    bound = 1.0 / math.sqrt(din)
    w = jax.random.uniform(kw, (din, dout), jnp.float32, -bound, bound)
    b = jax.random.uniform(kb, (1, dout), jnp.float32, -bound, bound)
    return w, b


def init_generator_params(key, latent_dim, img_shape, tile_n=TILE_N):
    out_dim = int(math.prod(img_shape))
    dims = [latent_dim, 128, 256, 512, 1024, out_dim]
    keys = jax.random.split(key, 5)

    params = []
    for i in range(4):
        w, b = _init_linear(keys[i], dims[i], dims[i + 1])
        layer = {"w": w.astype(jnp.bfloat16), "b": b}
        # BN on the 128->256, 256->512, 512->1024 blocks (i == 1, 2, 3).
        if i in (1, 2, 3):
            layer["gamma"] = jnp.ones((1, dims[i + 1]), jnp.float32)
            layer["beta"] = jnp.zeros((1, dims[i + 1]), jnp.float32)
        params.append(layer)

    # Final layer: zero-pad out_dim to a multiple of tile_n and pre-tile w4 to
    # (n_tiles, 1024, tile_n) so each streamed DMA is a contiguous block.
    w4, b4 = _init_linear(keys[4], 1024, out_dim)
    out_pad = ((out_dim + tile_n - 1) // tile_n) * tile_n
    n_tiles = out_pad // tile_n
    w4p = jnp.zeros((1024, out_pad), jnp.float32).at[:, :out_dim].set(w4)
    b4p = jnp.zeros((1, out_pad), jnp.float32).at[:, :out_dim].set(b4)
    w4_tiles = (w4p.reshape(1024, n_tiles, tile_n)
                    .transpose(1, 0, 2)
                    .astype(jnp.bfloat16))
    params.append({"w_tiles": w4_tiles, "b": b4p, "out_dim": out_dim})
    return params


# -------------------------------- forward ------------------------------------

_VMEM = pl.BlockSpec(memory_space=pltpu.MemorySpace.VMEM)


def generator_forward(params, z, img_shape):
    B, latent_dim = z.shape
    last = params[4]
    w4_tiles, b4p = last["w_tiles"], last["b"]
    n_tiles, _, tile_n = w4_tiles.shape
    out_pad = n_tiles * tile_n
    out_dim = int(math.prod(img_shape))
    dims = [latent_dim, 128, 256, 512, 1024, out_dim]

    # VMEM-resident small tensors, in the order the kernel expects.
    flat = []
    for p in params[:4]:
        flat += [p["w"], p["b"]]
        if "gamma" in p:
            flat += [p["gamma"], p["beta"]]
    flat.append(b4p)

    # Explicit VMEM budget (resident weights + w4 double buffer + output +
    # activation headroom), clamped to be safe on every generation.
    resident = sum(int(p["w"].size) * 2 + int(p["b"].size) * 4 for p in params[:4])
    resident += sum((int(p["gamma"].size) + int(p["beta"].size)) * 4
                    for p in params[:4] if "gamma" in p)
    resident += int(b4p.size) * 4
    vmem_est = (resident
                + 2 * 1024 * tile_n * 2            # w4 double buffer (bf16)
                + B * out_pad * 4                  # f32 output block
                + B * latent_dim * 4               # z
                + 2 * B * sum(dims[1:5]) * 4)      # activation headroom
    vmem_limit = int(min(max(vmem_est + (8 << 20), 32 << 20), 64 << 20))

    # Advisory cost estimate for the XLA scheduler.
    flops = 2 * B * sum(dims[i] * dims[i + 1] for i in range(5))
    transcendentals = B * out_pad + (256 + 512 + 1024)  # tanh + rsqrt
    bytes_accessed = (resident + int(w4_tiles.size) * 2
                      + B * (latent_dim + out_pad) * 4)
    cost = pl.CostEstimate(flops=flops, transcendentals=transcendentals,
                           bytes_accessed=bytes_accessed)

    img_flat = pl.pallas_call(
        _generator_fused_kernel,
        out_shape=jax.ShapeDtypeStruct((B, out_pad), jnp.float32),
        in_specs=[_VMEM] * (1 + len(flat)) + [pl.BlockSpec(memory_space=pl.ANY)],
        out_specs=_VMEM,
        scratch_shapes=[
            pltpu.VMEM((2, 1024, tile_n), jnp.bfloat16),  # w4 double buffer
            pltpu.SemaphoreType.DMA((2,)),
        ],
        compiler_params=pltpu.CompilerParams(vmem_limit_bytes=vmem_limit),
        cost_estimate=cost,
    )(z, *flat, w4_tiles)

    # Slice away the lane padding, reshape to the image.
    return img_flat[:, :out_dim].reshape((B,) + tuple(img_shape))


# --------------------------------- main ---------------------------------------

if __name__ == "__main__":
    latent_dim = 32
    img_shape = (1, 28, 28)   # (C, H, W); prod = 784 -> padded to 1024 (4 tiles)
    batch = 16                # multiple of 16 for bf16 sublane packing

    key = jax.random.PRNGKey(0)
    kp, kz = jax.random.split(key)
    params = init_generator_params(kp, latent_dim, img_shape)
    z = jax.random.normal(kz, (batch, latent_dim), jnp.float32)

    img = generator_forward(params, z, img_shape)
    img = jax.block_until_ready(img)

    assert img.shape == (batch,) + img_shape, img.shape
    assert bool(jnp.all(jnp.abs(img) <= 1.0)), "tanh output out of range"
    assert bool(jnp.all(jnp.isfinite(img))), "non-finite output"
    print("KERNEL_OK")
</pallas_src>

<mosaic_0001>
module attributes {stable_mosaic.version = 11 : i64} {
  func.func @_generator_fused_kernel(%arg0: memref<16x32xf32, #tpu.memory_space<vmem>>, %arg1: memref<32x128xbf16, #tpu.memory_space<vmem>>, %arg2: memref<1x128xf32, #tpu.memory_space<vmem>>, %arg3: memref<128x256xbf16, #tpu.memory_space<vmem>>, %arg4: memref<1x256xf32, #tpu.memory_space<vmem>>, %arg5: memref<1x256xf32, #tpu.memory_space<vmem>>, %arg6: memref<1x256xf32, #tpu.memory_space<vmem>>, %arg7: memref<256x512xbf16, #tpu.memory_space<vmem>>, %arg8: memref<1x512xf32, #tpu.memory_space<vmem>>, %arg9: memref<1x512xf32, #tpu.memory_space<vmem>>, %arg10: memref<1x512xf32, #tpu.memory_space<vmem>>, %arg11: memref<512x1024xbf16, #tpu.memory_space<vmem>>, %arg12: memref<1x1024xf32, #tpu.memory_space<vmem>>, %arg13: memref<1x1024xf32, #tpu.memory_space<vmem>>, %arg14: memref<1x1024xf32, #tpu.memory_space<vmem>>, %arg15: memref<1x1024xf32, #tpu.memory_space<vmem>>, %arg16: memref<4x1024x256xbf16, #tpu.memory_space<any>>, %arg17: memref<16x1024xf32, #tpu.memory_space<vmem>>, %arg18: memref<2x1024x256xbf16, #tpu.memory_space<vmem>>, %arg19: memref<2x!tpu.dma_semaphore, #tpu.memory_space<semaphore_mem>>) attributes {dimension_semantics = [], scalar_prefetch = 0 : i64, scratch_operands = 2 : i64, tpu.core_type = #tpu.core_type<tc>} {
    %c0_i32 = arith.constant 0 : i32
    %c0_i32_0 = arith.constant 0 : i32
    %c0_i32_1 = arith.constant 0 : i32
    %c0_i32_2 = arith.constant 0 : i32
    %c0_i32_3 = arith.constant 0 : i32
    %0 = tpu.memref_slice %arg16[%c0_i32, %c0_i32_2, %c0_i32_3] : memref<4x1024x256xbf16, #tpu.memory_space<any>> -> memref<1x1024x256xbf16, #tpu.memory_space<any>>
    %1 = tpu.memref_squeeze %0 : memref<1x1024x256xbf16, #tpu.memory_space<any>> -> memref<1024x256xbf16, #tpu.memory_space<any>>
    %c0_i32_4 = arith.constant 0 : i32
    %c0_i32_5 = arith.constant 0 : i32
    %2 = tpu.memref_slice %arg18[%c0_i32_0, %c0_i32_4, %c0_i32_5] : memref<2x1024x256xbf16, #tpu.memory_space<vmem>> -> memref<1x1024x256xbf16, #tpu.memory_space<vmem>>
    %3 = tpu.memref_squeeze %2 : memref<1x1024x256xbf16, #tpu.memory_space<vmem>> -> memref<1024x256xbf16, #tpu.memory_space<vmem>>
    %4 = tpu.memref_slice %arg19[%c0_i32_1] : memref<2x!tpu.dma_semaphore, #tpu.memory_space<semaphore_mem>> -> memref<1x!tpu.dma_semaphore, #tpu.memory_space<semaphore_mem>>
    %5 = tpu.memref_squeeze %4 : memref<1x!tpu.dma_semaphore, #tpu.memory_space<semaphore_mem>> -> memref<!tpu.dma_semaphore, #tpu.memory_space<semaphore_mem>>
    tpu.enqueue_dma source(%1 : memref<1024x256xbf16, #tpu.memory_space<any>>) target(%3 : memref<1024x256xbf16, #tpu.memory_space<vmem>>) target_semaphore(%5 : memref<!tpu.dma_semaphore, #tpu.memory_space<semaphore_mem>>)
    %c0 = arith.constant 0 : index
    %c0_6 = arith.constant 0 : index
    %6 = vector.load %arg0[%c0, %c0_6] : memref<16x32xf32, #tpu.memory_space<vmem>>, vector<16x32xf32>
    %7 = arith.truncf %6 : vector<16x32xf32> to vector<16x32xbf16>
    %c0_7 = arith.constant 0 : index
    %c0_8 = arith.constant 0 : index
    %8 = vector.load %arg1[%c0_7, %c0_8] : memref<32x128xbf16, #tpu.memory_space<vmem>>, vector<32x128xbf16>
    %cst = arith.constant dense<0.000000e+00> : vector<16x128xf32>
    %9 = tpu.matmul %7, %8, %cst {dimension_numbers = #tpu.dot_dimension_numbers<[1], [0], [0], [1], [0, 0, 1, 1], [], []>} : vector<16x32xbf16>, vector<32x128xbf16>, vector<16x128xf32> -> vector<16x128xf32>
    %c0_9 = arith.constant 0 : index
    %c0_10 = arith.constant 0 : index
    %10 = vector.load %arg2[%c0_9, %c0_10] : memref<1x128xf32, #tpu.memory_space<vmem>>, vector<1x128xf32>
    %11 = vector.broadcast %10 : vector<1x128xf32> to vector<16x128xf32>
    %12 = arith.addf %9, %11 : vector<16x128xf32>
    %cst_11 = arith.constant 2.000000e-01 : f32
    %13 = vector.broadcast %cst_11 : f32 to vector<16x128xf32>
    %14 = arith.mulf %13, %12 : vector<16x128xf32>
    %15 = arith.maximumf %12, %14 : vector<16x128xf32>
    %16 = arith.truncf %15 : vector<16x128xf32> to vector<16x128xbf16>
    %c0_12 = arith.constant 0 : index
    %c0_13 = arith.constant 0 : index
    %17 = vector.load %arg3[%c0_12, %c0_13] : memref<128x256xbf16, #tpu.memory_space<vmem>>, vector<128x256xbf16>
    %cst_14 = arith.constant dense<0.000000e+00> : vector<16x256xf32>
    %18 = tpu.matmul %16, %17, %cst_14 {dimension_numbers = #tpu.dot_dimension_numbers<[1], [0], [0], [1], [0, 0, 1, 1], [], []>} : vector<16x128xbf16>, vector<128x256xbf16>, vector<16x256xf32> -> vector<16x256xf32>
    %c0_15 = arith.constant 0 : index
    %c0_16 = arith.constant 0 : index
    %19 = vector.load %arg4[%c0_15, %c0_16] : memref<1x256xf32, #tpu.memory_space<vmem>>, vector<1x256xf32>
    %20 = vector.broadcast %19 : vector<1x256xf32> to vector<16x256xf32>
    %21 = arith.addf %18, %20 : vector<16x256xf32>
    %cst_17 = arith.constant dense<0.000000e+00> : vector<256xf32>
    %22 = vector.multi_reduction <add>, %21, %cst_17 [0] : vector<16x256xf32> to vector<256xf32>
    %23 = vector.shape_cast %22 : vector<256xf32> to vector<1x256xf32>
    %cst_18 = arith.constant 1.600000e+01 : f32
    %24 = vector.broadcast %cst_18 : f32 to vector<1x256xf32>
    %25 = arith.divf %23, %24 : vector<1x256xf32>
    %26 = arith.mulf %21, %21 : vector<16x256xf32>
    %cst_19 = arith.constant dense<0.000000e+00> : vector<256xf32>
    %27 = vector.multi_reduction <add>, %26, %cst_19 [0] : vector<16x256xf32> to vector<256xf32>
    %28 = vector.shape_cast %27 : vector<256xf32> to vector<1x256xf32>
    %cst_20 = arith.constant 1.600000e+01 : f32
    %29 = vector.broadcast %cst_20 : f32 to vector<1x256xf32>
    %30 = arith.divf %28, %29 : vector<1x256xf32>
    %31 = arith.mulf %25, %25 : vector<1x256xf32>
    %32 = arith.subf %30, %31 : vector<1x256xf32>
    %cst_21 = arith.constant 0.000000e+00 : f32
    %33 = vector.broadcast %cst_21 : f32 to vector<1x256xf32>
    %34 = arith.maximumf %32, %33 : vector<1x256xf32>
    %c0_22 = arith.constant 0 : index
    %c0_23 = arith.constant 0 : index
    %35 = vector.load %arg5[%c0_22, %c0_23] : memref<1x256xf32, #tpu.memory_space<vmem>>, vector<1x256xf32>
    %cst_24 = arith.constant 8.000000e-01 : f32
    %36 = vector.broadcast %cst_24 : f32 to vector<1x256xf32>
    %37 = arith.addf %34, %36 : vector<1x256xf32>
    %38 = math.rsqrt %37 : vector<1x256xf32>
    %39 = arith.mulf %35, %38 : vector<1x256xf32>
    %c0_25 = arith.constant 0 : index
    %c0_26 = arith.constant 0 : index
    %40 = vector.load %arg6[%c0_25, %c0_26] : memref<1x256xf32, #tpu.memory_space<vmem>>, vector<1x256xf32>
    %41 = arith.mulf %25, %39 : vector<1x256xf32>
    %42 = arith.subf %40, %41 : vector<1x256xf32>
    %43 = vector.broadcast %39 : vector<1x256xf32> to vector<16x256xf32>
    %44 = arith.mulf %21, %43 : vector<16x256xf32>
    %45 = vector.broadcast %42 : vector<1x256xf32> to vector<16x256xf32>
    %46 = arith.addf %44, %45 : vector<16x256xf32>
    %cst_27 = arith.constant 2.000000e-01 : f32
    %47 = vector.broadcast %cst_27 : f32 to vector<16x256xf32>
    %48 = arith.mulf %47, %46 : vector<16x256xf32>
    %49 = arith.maximumf %46, %48 : vector<16x256xf32>
    %50 = arith.truncf %49 : vector<16x256xf32> to vector<16x256xbf16>
    %c0_28 = arith.constant 0 : index
    %c0_29 = arith.constant 0 : index
    %51 = vector.load %arg7[%c0_28, %c0_29] : memref<256x512xbf16, #tpu.memory_space<vmem>>, vector<256x512xbf16>
    %cst_30 = arith.constant dense<0.000000e+00> : vector<16x512xf32>
    %52 = tpu.matmul %50, %51, %cst_30 {dimension_numbers = #tpu.dot_dimension_numbers<[1], [0], [0], [1], [0, 0, 1, 1], [], []>} : vector<16x256xbf16>, vector<256x512xbf16>, vector<16x512xf32> -> vector<16x512xf32>
    %c0_31 = arith.constant 0 : index
    %c0_32 = arith.constant 0 : index
    %53 = vector.load %arg8[%c0_31, %c0_32] : memref<1x512xf32, #tpu.memory_space<vmem>>, vector<1x512xf32>
    %54 = vector.broadcast %53 : vector<1x512xf32> to vector<16x512xf32>
    %55 = arith.addf %52, %54 : vector<16x512xf32>
    %cst_33 = arith.constant dense<0.000000e+00> : vector<512xf32>
    %56 = vector.multi_reduction <add>, %55, %cst_33 [0] : vector<16x512xf32> to vector<512xf32>
    %57 = vector.shape_cast %56 : vector<512xf32> to vector<1x512xf32>
    %cst_34 = arith.constant 1.600000e+01 : f32
    %58 = vector.broadcast %cst_34 : f32 to vector<1x512xf32>
    %59 = arith.divf %57, %58 : vector<1x512xf32>
    %60 = arith.mulf %55, %55 : vector<16x512xf32>
    %cst_35 = arith.constant dense<0.000000e+00> : vector<512xf32>
    %61 = vector.multi_reduction <add>, %60, %cst_35 [0] : vector<16x512xf32> to vector<512xf32>
    %62 = vector.shape_cast %61 : vector<512xf32> to vector<1x512xf32>
    %cst_36 = arith.constant 1.600000e+01 : f32
    %63 = vector.broadcast %cst_36 : f32 to vector<1x512xf32>
    %64 = arith.divf %62, %63 : vector<1x512xf32>
    %65 = arith.mulf %59, %59 : vector<1x512xf32>
    %66 = arith.subf %64, %65 : vector<1x512xf32>
    %cst_37 = arith.constant 0.000000e+00 : f32
    %67 = vector.broadcast %cst_37 : f32 to vector<1x512xf32>
    %68 = arith.maximumf %66, %67 : vector<1x512xf32>
    %c0_38 = arith.constant 0 : index
    %c0_39 = arith.constant 0 : index
    %69 = vector.load %arg9[%c0_38, %c0_39] : memref<1x512xf32, #tpu.memory_space<vmem>>, vector<1x512xf32>
    %cst_40 = arith.constant 8.000000e-01 : f32
    %70 = vector.broadcast %cst_40 : f32 to vector<1x512xf32>
    %71 = arith.addf %68, %70 : vector<1x512xf32>
    %72 = math.rsqrt %71 : vector<1x512xf32>
    %73 = arith.mulf %69, %72 : vector<1x512xf32>
    %c0_41 = arith.constant 0 : index
    %c0_42 = arith.constant 0 : index
    %74 = vector.load %arg10[%c0_41, %c0_42] : memref<1x512xf32, #tpu.memory_space<vmem>>, vector<1x512xf32>
    %75 = arith.mulf %59, %73 : vector<1x512xf32>
    %76 = arith.subf %74, %75 : vector<1x512xf32>
    %77 = vector.broadcast %73 : vector<1x512xf32> to vector<16x512xf32>
    %78 = arith.mulf %55, %77 : vector<16x512xf32>
    %79 = vector.broadcast %76 : vector<1x512xf32> to vector<16x512xf32>
    %80 = arith.addf %78, %79 : vector<16x512xf32>
    %cst_43 = arith.constant 2.000000e-01 : f32
    %81 = vector.broadcast %cst_43 : f32 to vector<16x512xf32>
    %82 = arith.mulf %81, %80 : vector<16x512xf32>
    %83 = arith.maximumf %80, %82 : vector<16x512xf32>
    %84 = arith.truncf %83 : vector<16x512xf32> to vector<16x512xbf16>
    %c0_44 = arith.constant 0 : index
    %c0_45 = arith.constant 0 : index
    %85 = vector.load %arg11[%c0_44, %c0_45] : memref<512x1024xbf16, #tpu.memory_space<vmem>>, vector<512x1024xbf16>
    %cst_46 = arith.constant dense<0.000000e+00> : vector<16x1024xf32>
    %86 = tpu.matmul %84, %85, %cst_46 {dimension_numbers = #tpu.dot_dimension_numbers<[1], [0], [0], [1], [0, 0, 1, 1], [], []>} : vector<16x512xbf16>, vector<512x1024xbf16>, vector<16x1024xf32> -> vector<16x1024xf32>
    %c0_47 = arith.constant 0 : index
    %c0_48 = arith.constant 0 : index
    %87 = vector.load %arg12[%c0_47, %c0_48] : memref<1x1024xf32, #tpu.memory_space<vmem>>, vector<1x1024xf32>
    %88 = vector.broadcast %87 : vector<1x1024xf32> to vector<16x1024xf32>
    %89 = arith.addf %86, %88 : vector<16x1024xf32>
    %cst_49 = arith.constant dense<0.000000e+00> : vector<1024xf32>
    %90 = vector.multi_reduction <add>, %89, %cst_49 [0] : vector<16x1024xf32> to vector<1024xf32>
    %91 = vector.shape_cast %90 : vector<1024xf32> to vector<1x1024xf32>
    %cst_50 = arith.constant 1.600000e+01 : f32
    %92 = vector.broadcast %cst_50 : f32 to vector<1x1024xf32>
    %93 = arith.divf %91, %92 : vector<1x1024xf32>
    %94 = arith.mulf %89, %89 : vector<16x1024xf32>
    %cst_51 = arith.constant dense<0.000000e+00> : vector<1024xf32>
    %95 = vector.multi_reduction <add>, %94, %cst_51 [0] : vector<16x1024xf32> to vector<1024xf32>
    %96 = vector.shape_cast %95 : vector<1024xf32> to vector<1x1024xf32>
    %cst_52 = arith.constant 1.600000e+01 : f32
    %97 = vector.broadcast %cst_52 : f32 to vector<1x1024xf32>
    %98 = arith.divf %96, %97 : vector<1x1024xf32>
    %99 = arith.mulf %93, %93 : vector<1x1024xf32>
    %100 = arith.subf %98, %99 : vector<1x1024xf32>
    %cst_53 = arith.constant 0.000000e+00 : f32
    %101 = vector.broadcast %cst_53 : f32 to vector<1x1024xf32>
    %102 = arith.maximumf %100, %101 : vector<1x1024xf32>
    %c0_54 = arith.constant 0 : index
    %c0_55 = arith.constant 0 : index
    %103 = vector.load %arg13[%c0_54, %c0_55] : memref<1x1024xf32, #tpu.memory_space<vmem>>, vector<1x1024xf32>
    %cst_56 = arith.constant 8.000000e-01 : f32
    %104 = vector.broadcast %cst_56 : f32 to vector<1x1024xf32>
    %105 = arith.addf %102, %104 : vector<1x1024xf32>
    %106 = math.rsqrt %105 : vector<1x1024xf32>
    %107 = arith.mulf %103, %106 : vector<1x1024xf32>
    %c0_57 = arith.constant 0 : index
    %c0_58 = arith.constant 0 : index
    %108 = vector.load %arg14[%c0_57, %c0_58] : memref<1x1024xf32, #tpu.memory_space<vmem>>, vector<1x1024xf32>
    %109 = arith.mulf %93, %107 : vector<1x1024xf32>
    %110 = arith.subf %108, %109 : vector<1x1024xf32>
    %111 = vector.broadcast %107 : vector<1x1024xf32> to vector<16x1024xf32>
    %112 = arith.mulf %89, %111 : vector<16x1024xf32>
    %113 = vector.broadcast %110 : vector<1x1024xf32> to vector<16x1024xf32>
    %114 = arith.addf %112, %113 : vector<16x1024xf32>
    %cst_59 = arith.constant 2.000000e-01 : f32
    %115 = vector.broadcast %cst_59 : f32 to vector<16x1024xf32>
    %116 = arith.mulf %115, %114 : vector<16x1024xf32>
    %117 = arith.maximumf %114, %116 : vector<16x1024xf32>
    %118 = arith.truncf %117 : vector<16x1024xf32> to vector<16x1024xbf16>
    %c0_i32_60 = arith.constant 0 : i32
    %c4_i32 = arith.constant 4 : i32
    %119 = arith.addi %c0_i32_60, %c4_i32 : i32
    %c1_i32 = arith.constant 1 : i32
    scf.for %arg20 = %c0_i32_60 to %119 step %c1_i32  : i32 {
      %c1_i32_62 = arith.constant 1 : i32
      %120 = arith.muli %arg20, %c1_i32_62 : i32
      %c0_i32_63 = arith.constant 0 : i32
      %121 = arith.addi %c0_i32_63, %120 : i32
      %c1_i32_64 = arith.constant 1 : i32
      %122 = arith.andi %121, %c1_i32_64 : i32
      %c0_i32_65 = arith.constant 0 : i32
      %c0_i32_66 = arith.constant 0 : i32
      %c0_i32_67 = arith.constant 0 : i32
      %123 = tpu.memref_slice %arg16[%c0_i32_65, %c0_i32_66, %c0_i32_67] : memref<4x1024x256xbf16, #tpu.memory_space<any>> -> memref<1x1024x256xbf16, #tpu.memory_space<any>>
      %124 = tpu.memref_squeeze %123 : memref<1x1024x256xbf16, #tpu.memory_space<any>> -> memref<1024x256xbf16, #tpu.memory_space<any>>
      %c0_i32_68 = arith.constant 0 : i32
      %c0_i32_69 = arith.constant 0 : i32
      %125 = tpu.memref_slice %arg18[%122, %c0_i32_68, %c0_i32_69] : memref<2x1024x256xbf16, #tpu.memory_space<vmem>> -> memref<1x1024x256xbf16, #tpu.memory_space<vmem>>
      %126 = tpu.memref_squeeze %125 : memref<1x1024x256xbf16, #tpu.memory_space<vmem>> -> memref<1024x256xbf16, #tpu.memory_space<vmem>>
      %127 = tpu.memref_slice %arg19[%122] : memref<2x!tpu.dma_semaphore, #tpu.memory_space<semaphore_mem>> -> memref<1x!tpu.dma_semaphore, #tpu.memory_space<semaphore_mem>>
      %128 = tpu.memref_squeeze %127 : memref<1x!tpu.dma_semaphore, #tpu.memory_space<semaphore_mem>> -> memref<!tpu.dma_semaphore, #tpu.memory_space<semaphore_mem>>
      tpu.wait_dma2 semaphore(%128 : memref<!tpu.dma_semaphore, #tpu.memory_space<semaphore_mem>>) src(%124 : memref<1024x256xbf16, #tpu.memory_space<any>>) dst(%126 : memref<1024x256xbf16, #tpu.memory_space<vmem>>)
      %c1_i32_70 = arith.constant 1 : i32
      %129 = arith.addi %121, %c1_i32_70 : i32
      %c4_i32_71 = arith.constant 4 : i32
      %130 = arith.cmpi slt, %129, %c4_i32_71 : i32
      %131 = arith.extui %130 : i1 to i32
      %c0_i32_72 = arith.constant 0 : i32
      %132 = arith.cmpi ne, %131, %c0_i32_72 : i32
      scf.if %132 {
        %c1_i32_78 = arith.constant 1 : i32
        %146 = arith.addi %121, %c1_i32_78 : i32
        %c1_i32_79 = arith.constant 1 : i32
        %147 = arith.subi %c1_i32_79, %122 : i32
        %c0_i32_80 = arith.constant 0 : i32
        %c0_i32_81 = arith.constant 0 : i32
        %148 = tpu.memref_slice %arg16[%146, %c0_i32_80, %c0_i32_81] : memref<4x1024x256xbf16, #tpu.memory_space<any>> -> memref<1x1024x256xbf16, #tpu.memory_space<any>>
        %149 = tpu.memref_squeeze %148 : memref<1x1024x256xbf16, #tpu.memory_space<any>> -> memref<1024x256xbf16, #tpu.memory_space<any>>
        %c0_i32_82 = arith.constant 0 : i32
        %c0_i32_83 = arith.constant 0 : i32
        %150 = tpu.memref_slice %arg18[%147, %c0_i32_82, %c0_i32_83] : memref<2x1024x256xbf16, #tpu.memory_space<vmem>> -> memref<1x1024x256xbf16, #tpu.memory_space<vmem>>
        %151 = tpu.memref_squeeze %150 : memref<1x1024x256xbf16, #tpu.memory_space<vmem>> -> memref<1024x256xbf16, #tpu.memory_space<vmem>>
        %152 = tpu.memref_slice %arg19[%147] : memref<2x!tpu.dma_semaphore, #tpu.memory_space<semaphore_mem>> -> memref<1x!tpu.dma_semaphore, #tpu.memory_space<semaphore_mem>>
        %153 = tpu.memref_squeeze %152 : memref<1x!tpu.dma_semaphore, #tpu.memory_space<semaphore_mem>> -> memref<!tpu.dma_semaphore, #tpu.memory_space<semaphore_mem>>
        tpu.enqueue_dma source(%149 : memref<1024x256xbf16, #tpu.memory_space<any>>) target(%151 : memref<1024x256xbf16, #tpu.memory_space<vmem>>) target_semaphore(%153 : memref<!tpu.dma_semaphore, #tpu.memory_space<semaphore_mem>>)
      } else {
      }
      %c256_i32 = arith.constant 256 : i32
      %133 = arith.muli %121, %c256_i32 : i32
      %134 = tpu.assume_multiple %133, 256 : i32
      %135 = arith.index_cast %122 : i32 to index
      %c0_73 = arith.constant 0 : index
      %c0_74 = arith.constant 0 : index
      %136 = vector.load %arg18[%135, %c0_73, %c0_74] : memref<2x1024x256xbf16, #tpu.memory_space<vmem>>, vector<1x1024x256xbf16>
      %137 = vector.shape_cast %136 : vector<1x1024x256xbf16> to vector<1024x256xbf16>
      %cst_75 = arith.constant dense<0.000000e+00> : vector<16x256xf32>
      %138 = tpu.matmul %118, %137, %cst_75 {dimension_numbers = #tpu.dot_dimension_numbers<[1], [0], [0], [1], [0, 0, 1, 1], [], []>} : vector<16x1024xbf16>, vector<1024x256xbf16>, vector<16x256xf32> -> vector<16x256xf32>
      %c0_76 = arith.constant 0 : index
      %139 = arith.index_cast %134 : i32 to index
      %140 = vector.load %arg15[%c0_76, %139] : memref<1x1024xf32, #tpu.memory_space<vmem>>, vector<1x256xf32>
      %141 = vector.broadcast %140 : vector<1x256xf32> to vector<16x256xf32>
      %142 = arith.addf %138, %141 : vector<16x256xf32>
      %143 = math.tanh %142 : vector<16x256xf32>
      %c0_77 = arith.constant 0 : index
      %144 = arith.index_cast %134 : i32 to index
      %145 = vector.load %arg17[%c0_77, %144] : memref<16x1024xf32, #tpu.memory_space<vmem>>, vector<16x256xf32>
      tpu.vector_store %arg17[%c0_77, %144], %143 {strides = array<i32>} : memref<16x1024xf32, #tpu.memory_space<vmem>>, vector<16x256xf32>,
    }
    %c4_i32_61 = arith.constant 4 : i32
    return
  }
}

</mosaic_0001>

<llo_original>
// kernel: tpu_custom_call.1
$region0: #{tpu_custom_call.1}
  #allocation0 [shape = 'u32[]', space=smem, size = 0x4, offset = 0x4, fixed_abs, tag = 'smem constant byte address 0x4 - core index']
  #allocation1 [shape = 'u32[72,128]{1,0:T(1,128)}', space=vmem, size = 0x9000, scoped, tag = 'internal scratch']
  #allocation2 [shape = 'bf16[2,1024,256]{2,1,0:T(8,128)(2,1)}', space=vmem, size = 0x100000, scoped, tag = 'scratch operand']
  #allocation3 [shape = 's32[2]{0}', space=sflag, size = 0x8, scoped, tag = 'scratch operand']
  #allocation31 [shape = 's32[]', space=sflag, size = 0x4, offset = 0, fixed_abs, tag = 'sflag constant byte address 0x0 - dummy sync flag']
  #allocation32 [shape = 's32[]', space=sflag, size = 0x4, offset = 0, fixed_abs, tag = 'sflag constant byte address 0x0 - dummy sync flag']
  #allocation33 [shape = 'u32[]', space=smem, size = 0x4, offset = 0x44, fixed_abs, tag = 'smem constant byte address 0x44 - assertion arg 0']
  #allocation34 [shape = 'u32[]', space=smem, size = 0x4, offset = 0x48, fixed_abs, tag = 'smem constant byte address 0x48 - assertion arg 1']
  #allocation35 [shape = 's32[]', space=sflag, size = 0x4, offset = 0, fixed_abs, tag = 'sflag constant byte address 0x0 - dummy sync flag']
  #allocation36 [shape = 's32[]', space=sflag, size = 0x4, offset = 0, fixed_abs, tag = 'sflag constant byte address 0x0 - dummy sync flag']
  %s0 = inlined_call_operand.hbm [shape: f32[16,32], index: 0, kind: input, shape index: {}]
  %s1 = inlined_call_operand.hbm [shape: bf16[32,128], index: 1, kind: input, shape index: {}]
  %s2 = inlined_call_operand.hbm [shape: f32[1,128], index: 2, kind: input, shape index: {}]
  %s3 = inlined_call_operand.hbm [shape: bf16[128,256], index: 3, kind: input, shape index: {}]
  %s4 = inlined_call_operand.hbm [shape: f32[1,256], index: 4, kind: input, shape index: {}]
  %s5 = inlined_call_operand.hbm [shape: f32[1,256], index: 5, kind: input, shape index: {}]
  %s6 = inlined_call_operand.hbm [shape: f32[1,256], index: 6, kind: input, shape index: {}]
  %s7 = inlined_call_operand.hbm [shape: bf16[256,512], index: 7, kind: input, shape index: {}]
  %s8 = inlined_call_operand.hbm [shape: f32[1,512], index: 8, kind: input, shape index: {}]
  %s9 = inlined_call_operand.hbm [shape: f32[1,512], index: 9, kind: input, shape index: {}]
  %s10 = inlined_call_operand.hbm [shape: f32[1,512], index: 10, kind: input, shape index: {}]
  %s11 = inlined_call_operand.hbm [shape: bf16[512,1024], index: 11, kind: input, shape index: {}]
  %s12 = inlined_call_operand.hbm [shape: f32[1,1024], index: 12, kind: input, shape index: {}]
  %s13 = inlined_call_operand.hbm [shape: f32[1,1024], index: 13, kind: input, shape index: {}]
  %s14 = inlined_call_operand.hbm [shape: f32[1,1024], index: 14, kind: input, shape index: {}]
  %s15 = inlined_call_operand.hbm [shape: f32[1,1024], index: 15, kind: input, shape index: {}]
  %s16 = inlined_call_operand.hbm [shape: bf16[4,1024,256], index: 16, kind: input, shape index: {}]
  %s17 = inlined_call_operand.hbm [shape: f32[16,1024], index: 17, kind: output, shape index: {}]
  %s18 = sld [smem:[#allocation0]]
  $region157: #{tpu_custom_call.1} parent=0
    _
  %s20 = ssub.s32 1, %s18
  %s21 = scalar_select 0, %s20, %s18
  $region1: #{tpu_custom_call.1} parent=0
    #allocation4 [shape = 'u8[8192]{0}', space=vmem, size = 0x2000, scoped, tag = 'input window, operand 0, single buffered']
    #allocation5 [shape = 's32[1]{0}', space=sflag, size = 0x4, scoped, tag = 'scoped memory for tpu_custom_call.1']
    #allocation6 [shape = 's32[1]{0}', space=sflag, size = 0x4, scoped, tag = 'scoped memory for tpu_custom_call.1']
    #allocation7 [shape = 'u8[8192]{0}', space=vmem, size = 0x2000, scoped, tag = 'input window, operand 1, single buffered']
    #allocation8 [shape = 's32[1]{0}', space=sflag, size = 0x4, scoped, tag = 'scoped memory for tpu_custom_call.1']
    #allocation9 [shape = 'u8[512]{0}', space=vmem, size = 0x400, scoped, tag = 'input window, operand 2, single buffered']
    #allocation10 [shape = 'u8[65536]{0}', space=vmem, size = 0x10000, scoped, tag = 'input window, operand 3, single buffered']
    #allocation11 [shape = 's32[1]{0}', space=sflag, size = 0x4, scoped, tag = 'scoped memory for tpu_custom_call.1']
    #allocation12 [shape = 'u8[1024]{0}', space=vmem, size = 0x400, scoped, tag = 'input window, operand 4, single buffered']
    #allocation13 [shape = 'u8[1024]{0}', space=vmem, size = 0x400, scoped, tag = 'input window, operand 5, single buffered']
    #allocation14 [shape = 's32[1]{0}', space=sflag, size = 0x4, scoped, tag = 'scoped memory for tpu_custom_call.1']
    #allocation15 [shape = 'u8[1024]{0}', space=vmem, size = 0x400, scoped, tag = 'input window, operand 6, single buffered']
    #allocation16 [shape = 'u8[262144]{0}', space=vmem, size = 0x40000, scoped, tag = 'input window, operand 7, single buffered']
    #allocation17 [shape = 's32[1]{0}', space=sflag, size = 0x4, scoped, tag = 'scoped memory for tpu_custom_call.1']
    #allocation18 [shape = 'u8[2048]{0}', space=vmem, size = 0x800, scoped, tag = 'input window, operand 8, single buffered']
    #allocation19 [shape = 'u8[2048]{0}', space=vmem, size = 0x800, scoped, tag = 'input window, operand 9, single buffered']
    #allocation20 [shape = 's32[1]{0}', space=sflag, size = 0x4, scoped, tag = 'scoped memory for tpu_custom_call.1']
    #allocation21 [shape = 'u8[2048]{0}', space=vmem, size = 0x800, scoped, tag = 'input window, operand 10, single buffered']
    #allocation22 [shape = 'u8[1048576]{0}', space=vmem, size = 0x100000, scoped, tag = 'input window, operand 11, single buffered']
    #allocation23 [shape = 's32[1]{0}', space=sflag, size = 0x4, scoped, tag = 'scoped memory for tpu_custom_call.1']
    #allocation24 [shape = 'u8[4096]{0}', space=vmem, size = 0x1000, scoped, tag = 'input window, operand 12, single buffered']
    #allocation25 [shape = 'u8[4096]{0}', space=vmem, size = 0x1000, scoped, tag = 'input window, operand 13, single buffered']
    #allocation26 [shape = 's32[1]{0}', space=sflag, size = 0x4, scoped, tag = 'scoped memory for tpu_custom_call.1']
    #allocation27 [shape = 'u8[4096]{0}', space=vmem, size = 0x1000, scoped, tag = 'input window, operand 14, single buffered']
    #allocation28 [shape = 'u8[4096]{0}', space=vmem, size = 0x1000, scoped, tag = 'input window, operand 15, single buffered']
    #allocation29 [shape = 's32[1]{0}', space=sflag, size = 0x4, scoped, tag = 'scoped memory for tpu_custom_call.1']
    #allocation30 [shape = 'u8[65536]{0}', space=vmem, size = 0x10000, scoped, tag = 'output window, operand 0, single buffered']
    %22 = vsyncpa [#allocation5], 0
    %23 = vsyncpa [#allocation8], 0
    %24 = vsyncpa [#allocation11], 0
    %25 = vsyncpa [#allocation14], 0
    %26 = vsyncpa [#allocation17], 0
    %27 = vsyncpa [#allocation20], 0
    %28 = vsyncpa [#allocation23], 0
    %29 = vsyncpa [#allocation26], 0
    %30 = vsyncpa [#allocation29], 0
    %31 = vsyncpa [#allocation6], 0
    // Predicated region
    $region2: #{tpu_custom_call.1} parent=1 // pred_check
      _
    $region3: #{tpu_custom_call.1} parent=1 // pred_check_branch
      %33 = sbr.rel (0) target = $region5
    $region4: #{tpu_custom_call.1} parent=1 // pred_region
      %35 = vsyncadd [#allocation5], 0
      %s36 = sshll.u32 %s0, 4
      %s37 = int_to_ptr.hbm [resolvable:$true] %s36
      %s38 = sshll.u32 [#allocation4], 4
      %s39 = int_to_ptr.vmem [resolvable:$true] %s38
      %44 = dma.hbm_to_vmem [thread:$0]  %s37, 256, %s39, [#allocation5], 128, 128, 8
    $region5: #{tpu_custom_call.1} parent=1 // pred_fallthru
      _
    // Predicated region
    $region6: #{tpu_custom_call.1} parent=1 // pred_check
      _
    $region7: #{tpu_custom_call.1} parent=1 // pred_check_branch
      %46 = sbr.rel (0) target = $region9
    $region8: #{tpu_custom_call.1} parent=1 // pred_region
      %48 = vsyncadd [#allocation8], 0
      %s49 = sshll.u32 %s1, 4
      %s50 = int_to_ptr.hbm [resolvable:$true] %s49
      %s51 = sshll.u32 [#allocation7], 4
      %s52 = int_to_ptr.vmem [resolvable:$true] %s51
      %57 = dma.hbm_to_vmem [thread:$0]  %s50, 256, %s52, [#allocation8], 64, 64, 4
    $region9: #{tpu_custom_call.1} parent=1 // pred_fallthru
      _
    // Predicated region
    $region10: #{tpu_custom_call.1} parent=1 // pred_check
      _
    $region11: #{tpu_custom_call.1} parent=1 // pred_check_branch
      %59 = sbr.rel (0) target = $region13
    $region12: #{tpu_custom_call.1} parent=1 // pred_region
      %61 = vsyncadd [#allocation8], 0
      %s63 = sshll.u32 %s2, 4
      %s64 = int_to_ptr.hbm [resolvable:$true] %s63
      %s65 = sshll.u32 [#allocation9], 4
      %s66 = int_to_ptr.vmem [resolvable:$true] %s65
      %68 = dma.hbm_to_vmem [thread:$0]  %s64, 16, %s66, [#allocation8]
    $region13: #{tpu_custom_call.1} parent=1 // pred_fallthru
      _
    // Predicated region
    $region14: #{tpu_custom_call.1} parent=1 // pred_check
      _
    $region15: #{tpu_custom_call.1} parent=1 // pred_check_branch
      %70 = sbr.rel (0) target = $region17
    $region16: #{tpu_custom_call.1} parent=1 // pred_region
      %72 = vsyncadd [#allocation11], 0
      %s73 = sshll.u32 %s3, 4
      %s74 = int_to_ptr.hbm [resolvable:$true] %s73
      %s75 = sshll.u32 [#allocation10], 4
      %s76 = int_to_ptr.vmem [resolvable:$true] %s75
      %81 = dma.hbm_to_vmem [thread:$0]  %s74, 2048, %s76, [#allocation11], 128, 128, 8
    $region17: #{tpu_custom_call.1} parent=1 // pred_fallthru
      _
    // Predicated region
    $region18: #{tpu_custom_call.1} parent=1 // pred_check
      _
    $region19: #{tpu_custom_call.1} parent=1 // pred_check_branch
      %83 = sbr.rel (0) target = $region21
    $region20: #{tpu_custom_call.1} parent=1 // pred_region
      %85 = vsyncadd [#allocation11], 0
      %s87 = sshll.u32 %s4, 4
      %s88 = int_to_ptr.hbm [resolvable:$true] %s87
      %s89 = sshll.u32 [#allocation12], 4
      %s90 = int_to_ptr.vmem [resolvable:$true] %s89
      %92 = dma.hbm_to_vmem [thread:$0]  %s88, 32, %s90, [#allocation11]
    $region21: #{tpu_custom_call.1} parent=1 // pred_fallthru
      _
    // Predicated region
    $region22: #{tpu_custom_call.1} parent=1 // pred_check
      _
    $region23: #{tpu_custom_call.1} parent=1 // pred_check_branch
      %94 = sbr.rel (0) target = $region25
    $region24: #{tpu_custom_call.1} parent=1 // pred_region
      %96 = vsyncadd [#allocation14], 0
      %s98 = sshll.u32 %s5, 4
      %s99 = int_to_ptr.hbm [resolvable:$true] %s98
      %s100 = sshll.u32 [#allocation13], 4
      %s101 = int_to_ptr.vmem [resolvable:$true] %s100
      %103 = dma.hbm_to_vmem [thread:$0]  %s99, 32, %s101, [#allocation14]
    $region25: #{tpu_custom_call.1} parent=1 // pred_fallthru
      _
    // Predicated region
    $region26: #{tpu_custom_call.1} parent=1 // pred_check
      _
    $region27: #{tpu_custom_call.1} parent=1 // pred_check_branch
      %105 = sbr.rel (0) target = $region29
    $region28: #{tpu_custom_call.1} parent=1 // pred_region
      %107 = vsyncadd [#allocation14], 0
      %s109 = sshll.u32 %s6, 4
      %s110 = int_to_ptr.hbm [resolvable:$true] %s109
      %s111 = sshll.u32 [#allocation15], 4
      %s112 = int_to_ptr.vmem [resolvable:$true] %s111
      %114 = dma.hbm_to_vmem [thread:$0]  %s110, 32, %s112, [#allocation14]
    $region29: #{tpu_custom_call.1} parent=1 // pred_fallthru
      _
    // Predicated region
    $region30: #{tpu_custom_call.1} parent=1 // pred_check
      _
    $region31: #{tpu_custom_call.1} parent=1 // pred_check_branch
      %116 = sbr.rel (0) target = $region33
    $region32: #{tpu_custom_call.1} parent=1 // pred_region
      %118 = vsyncadd [#allocation17], 0
      %s119 = sshll.u32 %s7, 4
      %s120 = int_to_ptr.hbm [resolvable:$true] %s119
      %s121 = sshll.u32 [#allocation16], 4
      %s122 = int_to_ptr.vmem [resolvable:$true] %s121
      %127 = dma.hbm_to_vmem [thread:$0]  %s120, 8192, %s122, [#allocation17], 256, 256, 16
    $region33: #{tpu_custom_call.1} parent=1 // pred_fallthru
      _
    // Predicated region
    $region34: #{tpu_custom_call.1} parent=1 // pred_check
      _
    $region35: #{tpu_custom_call.1} parent=1 // pred_check_branch
      %129 = sbr.rel (0) target = $region37
    $region36: #{tpu_custom_call.1} parent=1 // pred_region
      %131 = vsyncadd [#allocation17], 0
      %s133 = sshll.u32 %s8, 4
      %s134 = int_to_ptr.hbm [resolvable:$true] %s133
      %s135 = sshll.u32 [#allocation18], 4
      %s136 = int_to_ptr.vmem [resolvable:$true] %s135
      %138 = dma.hbm_to_vmem [thread:$0]  %s134, 64, %s136, [#allocation17]
    $region37: #{tpu_custom_call.1} parent=1 // pred_fallthru
      _
    // Predicated region
    $region38: #{tpu_custom_call.1} parent=1 // pred_check
      _
    $region39: #{tpu_custom_call.1} parent=1 // pred_check_branch
      %140 = sbr.rel (0) target = $region41
    $region40: #{tpu_custom_call.1} parent=1 // pred_region
      %142 = vsyncadd [#allocation20], 0
      %s144 = sshll.u32 %s9, 4
      %s145 = int_to_ptr.hbm [resolvable:$true] %s144
      %s146 = sshll.u32 [#allocation19], 4
      %s147 = int_to_ptr.vmem [resolvable:$true] %s146
      %149 = dma.hbm_to_vmem [thread:$0]  %s145, 64, %s147, [#allocation20]
    $region41: #{tpu_custom_call.1} parent=1 // pred_fallthru
      _
    // Predicated region
    $region42: #{tpu_custom_call.1} parent=1 // pred_check
      _
    $region43: #{tpu_custom_call.1} parent=1 // pred_check_branch
      %151 = sbr.rel (0) target = $region45
    $region44: #{tpu_custom_call.1} parent=1 // pred_region
      %153 = vsyncadd [#allocation20], 0
      %s155 = sshll.u32 %s10, 4
      %s156 = int_to_ptr.hbm [resolvable:$true] %s155
      %s157 = sshll.u32 [#allocation21], 4
      %s158 = int_to_ptr.vmem [resolvable:$true] %s157
      %160 = dma.hbm_to_vmem [thread:$0]  %s156, 64, %s158, [#allocation20]
    $region45: #{tpu_custom_call.1} parent=1 // pred_fallthru
      _
    // Predicated region
    $region46: #{tpu_custom_call.1} parent=1 // pred_check
      _
    $region47: #{tpu_custom_call.1} parent=1 // pred_check_branch
      %162 = sbr.rel (0) target = $region49
    $region48: #{tpu_custom_call.1} parent=1 // pred_region
      %164 = vsyncadd [#allocation23], 0
      %s165 = sshll.u32 %s11, 4
      %s166 = int_to_ptr.hbm [resolvable:$true] %s165
      %s167 = sshll.u32 [#allocation22], 4
      %s168 = int_to_ptr.vmem [resolvable:$true] %s167
      %173 = dma.hbm_to_vmem [thread:$0]  %s166, 32768, %s168, [#allocation23], 512, 512, 32
    $region49: #{tpu_custom_call.1} parent=1 // pred_fallthru
      _
    // Predicated region
    $region50: #{tpu_custom_call.1} parent=1 // pred_check
      _
    $region51: #{tpu_custom_call.1} parent=1 // pred_check_branch
      %175 = sbr.rel (0) target = $region53
    $region52: #{tpu_custom_call.1} parent=1 // pred_region
      %177 = vsyncadd [#allocation23], 0
      %s179 = sshll.u32 %s12, 4
      %s180 = int_to_ptr.hbm [resolvable:$true] %s179
      %s181 = sshll.u32 [#allocation24], 4
      %s182 = int_to_ptr.vmem [resolvable:$true] %s181
      %184 = dma.hbm_to_vmem [thread:$0]  %s180, 128, %s182, [#allocation23]
    $region53: #{tpu_custom_call.1} parent=1 // pred_fallthru
      _
    // Predicated region
    $region54: #{tpu_custom_call.1} parent=1 // pred_check
      _
    $region55: #{tpu_custom_call.1} parent=1 // pred_check_branch
      %186 = sbr.rel (0) target = $region57
    $region56: #{tpu_custom_call.1} parent=1 // pred_region
      %188 = vsyncadd [#allocation26], 0
      %s190 = sshll.u32 %s13, 4
      %s191 = int_to_ptr.hbm [resolvable:$true] %s190
      %s192 = sshll.u32 [#allocation25], 4
      %s193 = int_to_ptr.vmem [resolvable:$true] %s192
      %195 = dma.hbm_to_vmem [thread:$0]  %s191, 128, %s193, [#allocation26]
    $region57: #{tpu_custom_call.1} parent=1 // pred_fallthru
      _
    // Predicated region
    $region58: #{tpu_custom_call.1} parent=1 // pred_check
      _
    $region59: #{tpu_custom_call.1} parent=1 // pred_check_branch
      %197 = sbr.rel (0) target = $region61
    $region60: #{tpu_custom_call.1} parent=1 // pred_region
      %199 = vsyncadd [#allocation26], 0
      %s201 = sshll.u32 %s14, 4
      %s202 = int_to_ptr.hbm [resolvable:$true] %s201
      %s203 = sshll.u32 [#allocation27], 4
      %s204 = int_to_ptr.vmem [resolvable:$true] %s203
      %206 = dma.hbm_to_vmem [thread:$0]  %s202, 128, %s204, [#allocation26]
    $region61: #{tpu_custom_call.1} parent=1 // pred_fallthru
      _
    // Predicated region
    $region62: #{tpu_custom_call.1} parent=1 // pred_check
      _
    $region63: #{tpu_custom_call.1} parent=1 // pred_check_branch
      %208 = sbr.rel (0) target = $region65
    $region64: #{tpu_custom_call.1} parent=1 // pred_region
      %210 = vsyncadd [#allocation29], 0
      %s212 = sshll.u32 %s15, 4
      %s213 = int_to_ptr.hbm [resolvable:$true] %s212
      %s214 = sshll.u32 [#allocation28], 4
      %s215 = int_to_ptr.vmem [resolvable:$true] %s214
      %217 = dma.hbm_to_vmem [thread:$0]  %s213, 128, %s215, [#allocation29]
    $region65: #{tpu_custom_call.1} parent=1 // pred_fallthru
      _
    // Predicated region
    $region66: #{tpu_custom_call.1} parent=1 // pred_check
      _
    $region67: #{tpu_custom_call.1} parent=1 // pred_check_branch
      %219 = sbr.rel (0) target = $region69
    $region68: #{tpu_custom_call.1} parent=1 // pred_region
      %221 = dma.done [#allocation5], 256
    $region69: #{tpu_custom_call.1} parent=1 // pred_fallthru
      _
    // Predicated region
    $region70: #{tpu_custom_call.1} parent=1 // pred_check
      _
    $region71: #{tpu_custom_call.1} parent=1 // pred_check_branch
      %223 = sbr.rel (0) target = $region73
    $region72: #{tpu_custom_call.1} parent=1 // pred_region
      %225 = dma.done [#allocation8], 256
    $region73: #{tpu_custom_call.1} parent=1 // pred_fallthru
      _
    // Predicated region
    $region74: #{tpu_custom_call.1} parent=1 // pred_check
      _
    $region75: #{tpu_custom_call.1} parent=1 // pred_check_branch
      %227 = sbr.rel (0) target = $region77
    $region76: #{tpu_custom_call.1} parent=1 // pred_region
      %229 = dma.done [#allocation8], 16
    $region77: #{tpu_custom_call.1} parent=1 // pred_fallthru
      _
    // Predicated region
    $region78: #{tpu_custom_call.1} parent=1 // pred_check
      _
    $region79: #{tpu_custom_call.1} parent=1 // pred_check_branch
      %231 = sbr.rel (0) target = $region81
    $region80: #{tpu_custom_call.1} parent=1 // pred_region
      %233 = dma.done [#allocation11], 2048
    $region81: #{tpu_custom_call.1} parent=1 // pred_fallthru
      _
    // Predicated region
    $region82: #{tpu_custom_call.1} parent=1 // pred_check
      _
    $region83: #{tpu_custom_call.1} parent=1 // pred_check_branch
      %235 = sbr.rel (0) target = $region85
    $region84: #{tpu_custom_call.1} parent=1 // pred_region
      %237 = dma.done [#allocation11], 32
    $region85: #{tpu_custom_call.1} parent=1 // pred_fallthru
      _
    // Predicated region
    $region86: #{tpu_custom_call.1} parent=1 // pred_check
      _
    $region87: #{tpu_custom_call.1} parent=1 // pred_check_branch
      %239 = sbr.rel (0) target = $region89
    $region88: #{tpu_custom_call.1} parent=1 // pred_region
      %241 = dma.done [#allocation14], 32
    $region89: #{tpu_custom_call.1} parent=1 // pred_fallthru
      _
    // Predicated region
    $region90: #{tpu_custom_call.1} parent=1 // pred_check
      _
    $region91: #{tpu_custom_call.1} parent=1 // pred_check_branch
      %243 = sbr.rel (0) target = $region93
    $region92: #{tpu_custom_call.1} parent=1 // pred_region
      %245 = dma.done [#allocation14], 32
    $region93: #{tpu_custom_call.1} parent=1 // pred_fallthru
      _
    // Predicated region
    $region94: #{tpu_custom_call.1} parent=1 // pred_check
      _
    $region95: #{tpu_custom_call.1} parent=1 // pred_check_branch
      %247 = sbr.rel (0) target = $region97
    $region96: #{tpu_custom_call.1} parent=1 // pred_region
      %249 = dma.done [#allocation17], 8192
    $region97: #{tpu_custom_call.1} parent=1 // pred_fallthru
      _
    // Predicated region
    $region98: #{tpu_custom_call.1} parent=1 // pred_check
      _
    $region99: #{tpu_custom_call.1} parent=1 // pred_check_branch
      %251 = sbr.rel (0) target = $region101
    $region100: #{tpu_custom_call.1} parent=1 // pred_region
      %253 = dma.done [#allocation17], 64
    $region101: #{tpu_custom_call.1} parent=1 // pred_fallthru
      _
    // Predicated region
    $region102: #{tpu_custom_call.1} parent=1 // pred_check
      _
    $region103: #{tpu_custom_call.1} parent=1 // pred_check_branch
      %255 = sbr.rel (0) target = $region105
    $region104: #{tpu_custom_call.1} parent=1 // pred_region
      %257 = dma.done [#allocation20], 64
    $region105: #{tpu_custom_call.1} parent=1 // pred_fallthru
      _
    // Predicated region
    $region106: #{tpu_custom_call.1} parent=1 // pred_check
      _
    $region107: #{tpu_custom_call.1} parent=1 // pred_check_branch
      %259 = sbr.rel (0) target = $region109
    $region108: #{tpu_custom_call.1} parent=1 // pred_region
      %261 = dma.done [#allocation20], 64
    $region109: #{tpu_custom_call.1} parent=1 // pred_fallthru
      _
    // Predicated region
    $region110: #{tpu_custom_call.1} parent=1 // pred_check
      _
    $region111: #{tpu_custom_call.1} parent=1 // pred_check_branch
      %263 = sbr.rel (0) target = $region113
    $region112: #{tpu_custom_call.1} parent=1 // pred_region
      %265 = dma.done [#allocation23], 32768
    $region113: #{tpu_custom_call.1} parent=1 // pred_fallthru
      _
    // Predicated region
    $region114: #{tpu_custom_call.1} parent=1 // pred_check
      _
    $region115: #{tpu_custom_call.1} parent=1 // pred_check_branch
      %267 = sbr.rel (0) target = $region117
    $region116: #{tpu_custom_call.1} parent=1 // pred_region
      %269 = dma.done [#allocation23], 128
    $region117: #{tpu_custom_call.1} parent=1 // pred_fallthru
      _
    // Predicated region
    $region118: #{tpu_custom_call.1} parent=1 // pred_check
      _
    $region119: #{tpu_custom_call.1} parent=1 // pred_check_branch
      %271 = sbr.rel (0) target = $region121
    $region120: #{tpu_custom_call.1} parent=1 // pred_region
      %273 = dma.done [#allocation26], 128
    $region121: #{tpu_custom_call.1} parent=1 // pred_fallthru
      _
    // Predicated region
    $region122: #{tpu_custom_call.1} parent=1 // pred_check
      _
    $region123: #{tpu_custom_call.1} parent=1 // pred_check_branch
      %275 = sbr.rel (0) target = $region125
    $region124: #{tpu_custom_call.1} parent=1 // pred_region
      %277 = dma.done [#allocation26], 128
    $region125: #{tpu_custom_call.1} parent=1 // pred_fallthru
      _
    // Predicated region
    $region126: #{tpu_custom_call.1} parent=1 // pred_check
      _
    $region127: #{tpu_custom_call.1} parent=1 // pred_check_branch
      %279 = sbr.rel (0) target = $region129
    $region128: #{tpu_custom_call.1} parent=1 // pred_region
      %281 = dma.done [#allocation29], 128
    $region129: #{tpu_custom_call.1} parent=1 // pred_fallthru
      _
    // Predicated region
    $region130: #{tpu_custom_call.1} parent=1 // pred_check
      _
    $region131: #{tpu_custom_call.1} parent=1 // pred_check_branch
      %284 = sbr.rel target = $region133
    $region132: #{tpu_custom_call.1} parent=1 // pred_region
      %285 = sst [smem:[#allocation33]] [#allocation32]
      %286 = sst [smem:[#allocation34]] [#allocation31]
    $region133: #{tpu_custom_call.1} parent=1 // pred_fallthru
      _
    %288 = shalt.err (0)
    %s290 = sshll.u32 %s16, 4
    %s291 = int_to_ptr.hbm [resolvable:$true] %s290
    %s292 = sshll.u32 [#allocation2], 4
    %s293 = int_to_ptr.vmem [resolvable:$true] %s292
    %295 = dma.hbm_to_vmem [thread:$0]  %s291, 16384, %s293, [#allocation3]
    %v296 = vld [vmem:[#allocation4] sm:$0xff]
    %v297 = vld [vmem:[#allocation4 + $0x8] sm:$0xff]
    %v298 = vpack.c.bf16 %v297, %v296
    %v299 = vld [vmem:[#allocation7] sm:$0xf]
    %v300 = vld [vmem:[#allocation7 + $0x4] sm:$0xf]
    %v301 = vld [vmem:[#allocation7 + $0x8] sm:$0xf]
    %v302 = vld [vmem:[#allocation7 + $0xc] sm:$0xf]
    %v303 = vld [vmem:[#allocation9] sm:$0x1]
    %v305 = vperm.slane %v303, 0
    %v311 = vunpack.c.l.b16 %v299
    %v312 = vunpack.c.l.b16 %v300
    %v313 = vunpack.c.l.b16 %v301
    %v314 = vunpack.c.l.b16 %v302
    %v315 = vpack.c.b16 %v312, %v311
    %v316 = vpack.c.b16 %v314, %v313
    %vm319 = vcmask 261120
    %v321 = vsel %vm319, %v298, 0
    %323 = vmatpush.bf16.msra.mxu0 0
    %324 = vmatpush.bf16.msra.mxu0 0
    %325 = vmatpush.bf16.msra.mxu0 0
    %326 = vmatpush.bf16.msra.mxu0 0
    %327 = vmatpush.bf16.msra.mxu0 0
    %328 = vmatpush.bf16.msra.mxu0 0
    %329 = vmatpush.bf16.msra.mxu0 %v316
    %330 = vmatpush.bf16.msra.mxu0 %v315
    %331 = vmatmul.bf16.gmra.mxu0 %v321
    %v332 = vpop.f32.mrf.mxu0
    %v333 = vadd.f32 %v305, %v332
    %v334 = vpop.f32.mrf.mxu0
    %v335 = vadd.f32 %v305, %v334
    %336 = vdwg.mxu0
    %v337 = vmul.f32 %v333, 0.2
    %v338 = vmul.f32 %v335, 0.2
    %v339 = vmax.f32 %v333, %v337
    %v340 = vmax.f32 %v335, %v338
    %v341 = vpack.c.bf16 %v340, %v339
    %v342 = vld [vmem:[#allocation10] sm:$0xff]
    %v343 = vld [vmem:[#allocation10 + $0x8] sm:$0xff]
    %v344 = vld [vmem:[#allocation10 + $0x10] sm:$0xff]
    %v345 = vld [vmem:[#allocation10 + $0x18] sm:$0xff]
    %v346 = vld [vmem:[#allocation10 + $0x20] sm:$0xff]
    %v347 = vld [vmem:[#allocation10 + $0x28] sm:$0xff]
    %v348 = vld [vmem:[#allocation10 + $0x30] sm:$0xff]
    %v349 = vld [vmem:[#allocation10 + $0x38] sm:$0xff]
    %v350 = vld [vmem:[#allocation10 + $0x40] sm:$0xff]
    %v351 = vld [vmem:[#allocation10 + $0x48] sm:$0xff]
    %v352 = vld [vmem:[#allocation10 + $0x50] sm:$0xff]
    %v353 = vld [vmem:[#allocation10 + $0x58] sm:$0xff]
    %v354 = vld [vmem:[#allocation10 + $0x60] sm:$0xff]
    %v355 = vld [vmem:[#allocation10 + $0x68] sm:$0xff]
    %v356 = vld [vmem:[#allocation10 + $0x70] sm:$0xff]
    %v357 = vld [vmem:[#allocation10 + $0x78] sm:$0xff]
    %v358 = vld [vmem:[#allocation12] sm:$0x3]
    %v360 = vperm.slane %v358, 0
    %v361 = vperm.slane %v358, 1
    %v380 = vunpack.c.l.b16 %v342
    %v381 = vunpack.c.h.b16 %v342
    %v382 = vunpack.c.l.b16 %v343
    %v383 = vunpack.c.h.b16 %v343
    %v384 = vunpack.c.l.b16 %v344
    %v385 = vunpack.c.h.b16 %v344
    %v386 = vunpack.c.l.b16 %v345
    %v387 = vunpack.c.h.b16 %v345
    %v388 = vunpack.c.l.b16 %v346
    %v389 = vunpack.c.h.b16 %v346
    %v390 = vunpack.c.l.b16 %v347
    %v391 = vunpack.c.h.b16 %v347
    %v392 = vunpack.c.l.b16 %v348
    %v393 = vunpack.c.h.b16 %v348
    %v394 = vunpack.c.l.b16 %v349
    %v395 = vunpack.c.h.b16 %v349
    %v396 = vunpack.c.l.b16 %v350
    %v397 = vunpack.c.h.b16 %v350
    %v398 = vunpack.c.l.b16 %v351
    %v399 = vunpack.c.h.b16 %v351
    %v400 = vunpack.c.l.b16 %v352
    %v401 = vunpack.c.h.b16 %v352
    %v402 = vunpack.c.l.b16 %v353
    %v403 = vunpack.c.h.b16 %v353
    %v404 = vunpack.c.l.b16 %v354
    %v405 = vunpack.c.h.b16 %v354
    %v406 = vunpack.c.l.b16 %v355
    %v407 = vunpack.c.h.b16 %v355
    %v408 = vunpack.c.l.b16 %v356
    %v409 = vunpack.c.h.b16 %v356
    %v410 = vunpack.c.l.b16 %v357
    %v411 = vunpack.c.h.b16 %v357
    %v412 = vpack.c.b16 %v382, %v380
    %v413 = vpack.c.b16 %v383, %v381
    %v414 = vpack.c.b16 %v386, %v384
    %v415 = vpack.c.b16 %v387, %v385
    %v416 = vpack.c.b16 %v390, %v388
    %v417 = vpack.c.b16 %v391, %v389
    %v418 = vpack.c.b16 %v394, %v392
    %v419 = vpack.c.b16 %v395, %v393
    %v420 = vpack.c.b16 %v398, %v396
    %v421 = vpack.c.b16 %v399, %v397
    %v422 = vpack.c.b16 %v402, %v400
    %v423 = vpack.c.b16 %v403, %v401
    %v424 = vpack.c.b16 %v406, %v404
    %v425 = vpack.c.b16 %v407, %v405
    %v426 = vpack.c.b16 %v410, %v408
    %v427 = vpack.c.b16 %v411, %v409
    %444 = vmatpush.bf16.msra.mxu0 %v426
    %445 = vmatpush.bf16.msra.mxu0 %v424
    %446 = vmatpush.bf16.msra.mxu0 %v422
    %447 = vmatpush.bf16.msra.mxu0 %v420
    %448 = vmatpush.bf16.msra.mxu0 %v418
    %449 = vmatpush.bf16.msra.mxu0 %v416
    %450 = vmatpush.bf16.msra.mxu0 %v414
    %451 = vmatpush.bf16.msra.mxu0 %v412
    %452 = vmatmul.bf16.gmra.mxu0 %v341
    %v453 = vpop.f32.mrf.mxu0
    %v454 = vadd.f32 %v360, %v453
    %v455 = vpop.f32.mrf.mxu0
    %v456 = vadd.f32 %v360, %v455
    %457 = vdwg.mxu0
    %458 = vmatpush.bf16.msra.mxu0 %v427
    %459 = vmatpush.bf16.msra.mxu0 %v425
    %460 = vmatpush.bf16.msra.mxu0 %v423
    %461 = vmatpush.bf16.msra.mxu0 %v421
    %462 = vmatpush.bf16.msra.mxu0 %v419
    %463 = vmatpush.bf16.msra.mxu0 %v417
    %464 = vmatpush.bf16.msra.mxu0 %v415
    %465 = vmatpush.bf16.msra.mxu0 %v413
    %466 = vmatmul.bf16.gmra.mxu0 %v341
    %v467 = vpop.f32.mrf.mxu0
    %v468 = vadd.f32 %v361, %v467
    %v469 = vpop.f32.mrf.mxu0
    %v470 = vadd.f32 %v361, %v469
    %471 = vdwg.mxu0
    %v472 = vadd.f32 %v454, %v456
    %v473 = vrot.slane %v472, 4
    %v474 = vadd.f32 %v472, %v473
    %v475 = vrot.slane %v474, 2
    %v476 = vadd.f32 %v474, %v475
    %v477 = vrot.slane %v476, 1
    %v478 = vadd.f32 %v476, %v477
    %v479 = vadd.f32 %v468, %v470
    %v480 = vrot.slane %v479, 4
    %v481 = vadd.f32 %v479, %v480
    %v482 = vrot.slane %v481, 2
    %v483 = vadd.f32 %v481, %v482
    %v484 = vrot.slane %v483, 1
    %v485 = vadd.f32 %v483, %v484
    %v486 = vrcp.pop 16.0
    %v487 = vmul.f32 16.0, %v486
    %v488 = vsub.f32 1.0, %v487
    %v489 = vmul.f32 %v486, %v488
    %v490 = vadd.f32 %v486, %v489
    %vm491 = vweird.f32 %v486
    %v492 = vsel %vm491, %v486, %v490
    %v493 = vmul.f32 %v478, %v492
    %v494 = vmul.f32 %v485, %v492
    %v495 = vmul.f32 %v454, %v454
    %v496 = vmul.f32 %v468, %v468
    %v497 = vmul.f32 %v456, %v456
    %v498 = vmul.f32 %v470, %v470
    %v499 = vadd.f32 %v495, %v497
    %v500 = vrot.slane %v499, 4
    %v501 = vadd.f32 %v499, %v500
    %v502 = vrot.slane %v501, 2
    %v503 = vadd.f32 %v501, %v502
    %v504 = vrot.slane %v503, 1
    %v505 = vadd.f32 %v503, %v504
    %v506 = vadd.f32 %v496, %v498
    %v507 = vrot.slane %v506, 4
    %v508 = vadd.f32 %v506, %v507
    %v509 = vrot.slane %v508, 2
    %v510 = vadd.f32 %v508, %v509
    %v511 = vrot.slane %v510, 1
    %v512 = vadd.f32 %v510, %v511
    %v513 = vmul.f32 %v505, %v492
    %v514 = vmul.f32 %v512, %v492
    %v515 = vmul.f32 %v493, %v493
    %v516 = vmul.f32 %v494, %v494
    %v517 = vsub.f32 %v513, %v515
    %v518 = vsub.f32 %v514, %v516
    %v519 = vmax.f32 %v517, 0.0
    %v520 = vmax.f32 %v518, 0.0
    %v521 = vld [vmem:[#allocation13] sm:$0x3]
    %v522 = vadd.f32 %v519, 0.8
    %v523 = vadd.f32 %v520, 0.8
    %v524 = vrsqrt.pop %v522
    %v525 = vmul.f32 %v524, %v522
    %v526 = vmul.f32 %v525, %v524
    %v527 = vmul.f32 0.5, %v526
    %v528 = vsub.f32 1.5, %v527
    %v529 = vmul.f32 %v524, %v528
    %vm530 = vweird.f32 %v522
    %vm531 = vweird.f32 %v524
    %vm532 = vmor %vm530, %vm531
    %v533 = vsel %vm532, %v524, %v529
    %v534 = vrsqrt.pop %v523
    %v535 = vmul.f32 %v534, %v523
    %v536 = vmul.f32 %v535, %v534
    %v537 = vmul.f32 0.5, %v536
    %v538 = vsub.f32 1.5, %v537
    %v539 = vmul.f32 %v534, %v538
    %vm540 = vweird.f32 %v523
    %vm541 = vweird.f32 %v534
    %vm542 = vmor %vm540, %vm541
    %v543 = vsel %vm542, %v534, %v539
    %v546 = vrot.slane %v543, 7
    %vm547 = vcmask 1040384
    %v548 = vsel %vm547, %v533, %v546
    %v550 = vmul.f32 %v521, %v548
    %v551 = vld [vmem:[#allocation15] sm:$0x3]
    %v553 = vperm.slane %v550, 0
    %v554 = vperm.slane %v550, 1
    %v557 = vmul.f32 %v493, %v553
    %v558 = vmul.f32 %v494, %v554
    %v561 = vrot.slane %v558, 7
    %v562 = vsel %vm547, %v557, %v561
    %v564 = vsub.f32 %v551, %v562
    %v565 = vmul.f32 %v454, %v553
    %v566 = vmul.f32 %v468, %v554
    %v567 = vmul.f32 %v456, %v553
    %v568 = vmul.f32 %v470, %v554
    %v570 = vperm.slane %v564, 0
    %v571 = vperm.slane %v564, 1
    %v574 = vadd.f32 %v565, %v570
    %v575 = vadd.f32 %v566, %v571
    %v576 = vadd.f32 %v567, %v570
    %v577 = vadd.f32 %v568, %v571
    %v578 = vmul.f32 %v574, 0.2
    %v579 = vmul.f32 %v575, 0.2
    %v580 = vmul.f32 %v576, 0.2
    %v581 = vmul.f32 %v577, 0.2
    %v582 = vmax.f32 %v574, %v578
    %v583 = vmax.f32 %v575, %v579
    %v584 = vmax.f32 %v576, %v580
    %v585 = vmax.f32 %v577, %v581
    %v586 = vpack.c.bf16 %v584, %v582
    %v587 = vpack.c.bf16 %v585, %v583
    %v588 = vld [vmem:[#allocation16] sm:$0xff]
    %v589 = vld [vmem:[#allocation16 + $0x8] sm:$0xff]
    %v590 = vld [vmem:[#allocation16 + $0x10] sm:$0xff]
    %v591 = vld [vmem:[#allocation16 + $0x18] sm:$0xff]
    %v592 = vld [vmem:[#allocation16 + $0x20] sm:$0xff]
    %v593 = vld [vmem:[#allocation16 + $0x28] sm:$0xff]
    %v594 = vld [vmem:[#allocation16 + $0x30] sm:$0xff]
    %v595 = vld [vmem:[#allocation16 + $0x38] sm:$0xff]
    %v596 = vld [vmem:[#allocation16 + $0x40] sm:$0xff]
    %v597 = vld [vmem:[#allocation16 + $0x48] sm:$0xff]
    %v598 = vld [vmem:[#allocation16 + $0x50] sm:$0xff]
    %v599 = vld [vmem:[#allocation16 + $0x58] sm:$0xff]
    %v600 = vld [vmem:[#allocation16 + $0x60] sm:$0xff]
    %v601 = vld [vmem:[#allocation16 + $0x68] sm:$0xff]
    %v602 = vld [vmem:[#allocation16 + $0x70] sm:$0xff]
    %v603 = vld [vmem:[#allocation16 + $0x78] sm:$0xff]
    %v604 = vld [vmem:[#allocation16 + $0x80] sm:$0xff]
    %v605 = vld [vmem:[#allocation16 + $0x88] sm:$0xff]
    %v606 = vld [vmem:[#allocation16 + $0x90] sm:$0xff]
    %v607 = vld [vmem:[#allocation16 + $0x98] sm:$0xff]
    %v608 = vld [vmem:[#allocation16 + $0xa0] sm:$0xff]
    %v609 = vld [vmem:[#allocation16 + $0xa8] sm:$0xff]
    %v610 = vld [vmem:[#allocation16 + $0xb0] sm:$0xff]
    %v611 = vld [vmem:[#allocation16 + $0xb8] sm:$0xff]
    %v612 = vld [vmem:[#allocation16 + $0xc0] sm:$0xff]
    %v613 = vld [vmem:[#allocation16 + $0xc8] sm:$0xff]
    %v614 = vld [vmem:[#allocation16 + $0xd0] sm:$0xff]
    %v615 = vld [vmem:[#allocation16 + $0xd8] sm:$0xff]
    %v616 = vld [vmem:[#allocation16 + $0xe0] sm:$0xff]
    %v617 = vld [vmem:[#allocation16 + $0xe8] sm:$0xff]
    %v618 = vld [vmem:[#allocation16 + $0xf0] sm:$0xff]
    %v619 = vld [vmem:[#allocation16 + $0xf8] sm:$0xff]
    %v620 = vld [vmem:[#allocation16 + $0x100] sm:$0xff]
    %v621 = vld [vmem:[#allocation16 + $0x108] sm:$0xff]
    %v622 = vld [vmem:[#allocation16 + $0x110] sm:$0xff]
    %v623 = vld [vmem:[#allocation16 + $0x118] sm:$0xff]
    %v624 = vld [vmem:[#allocation16 + $0x120] sm:$0xff]
    %v625 = vld [vmem:[#allocation16 + $0x128] sm:$0xff]
    %v626 = vld [vmem:[#allocation16 + $0x130] sm:$0xff]
    %v627 = vld [vmem:[#allocation16 + $0x138] sm:$0xff]
    %v628 = vld [vmem:[#allocation16 + $0x140] sm:$0xff]
    %v629 = vld [vmem:[#allocation16 + $0x148] sm:$0xff]
    %v630 = vld [vmem:[#allocation16 + $0x150] sm:$0xff]
    %v631 = vld [vmem:[#allocation16 + $0x158] sm:$0xff]
    %v632 = vld [vmem:[#allocation16 + $0x160] sm:$0xff]
    %v633 = vld [vmem:[#allocation16 + $0x168] sm:$0xff]
    %v634 = vld [vmem:[#allocation16 + $0x170] sm:$0xff]
    %v635 = vld [vmem:[#allocation16 + $0x178] sm:$0xff]
    %v636 = vld [vmem:[#allocation16 + $0x180] sm:$0xff]
    %v637 = vld [vmem:[#allocation16 + $0x188] sm:$0xff]
    %v638 = vld [vmem:[#allocation16 + $0x190] sm:$0xff]
    %v639 = vld [vmem:[#allocation16 + $0x198] sm:$0xff]
    %v640 = vld [vmem:[#allocation16 + $0x1a0] sm:$0xff]
    %v641 = vld [vmem:[#allocation16 + $0x1a8] sm:$0xff]
    %v642 = vld [vmem:[#allocation16 + $0x1b0] sm:$0xff]
    %v643 = vld [vmem:[#allocation16 + $0x1b8] sm:$0xff]
    %v644 = vld [vmem:[#allocation16 + $0x1c0] sm:$0xff]
    %v645 = vld [vmem:[#allocation16 + $0x1c8] sm:$0xff]
    %v646 = vld [vmem:[#allocation16 + $0x1d0] sm:$0xff]
    %v647 = vld [vmem:[#allocation16 + $0x1d8] sm:$0xff]
    %v648 = vld [vmem:[#allocation16 + $0x1e0] sm:$0xff]
    %v649 = vld [vmem:[#allocation16 + $0x1e8] sm:$0xff]
    %v650 = vld [vmem:[#allocation16 + $0x1f0] sm:$0xff]
    %v651 = vld [vmem:[#allocation16 + $0x1f8] sm:$0xff]
    %v652 = vld [vmem:[#allocation18] sm:$0xf]
    %v654 = vperm.slane %v652, 0
    %v655 = vperm.slane %v652, 1
    %v656 = vperm.slane %v652, 2
    %v657 = vperm.slane %v652, 3
    %v726 = vunpack.c.l.b16 %v588
    %v727 = vunpack.c.h.b16 %v588
    %v728 = vunpack.c.l.b16 %v589
    %v729 = vunpack.c.h.b16 %v589
    %v730 = vunpack.c.l.b16 %v590
    %v731 = vunpack.c.h.b16 %v590
    %v732 = vunpack.c.l.b16 %v591
    %v733 = vunpack.c.h.b16 %v591
    %v734 = vunpack.c.l.b16 %v592
    %v735 = vunpack.c.h.b16 %v592
    %v736 = vunpack.c.l.b16 %v593
    %v737 = vunpack.c.h.b16 %v593
    %v738 = vunpack.c.l.b16 %v594
    %v739 = vunpack.c.h.b16 %v594
    %v740 = vunpack.c.l.b16 %v595
    %v741 = vunpack.c.h.b16 %v595
    %v742 = vunpack.c.l.b16 %v596
    %v743 = vunpack.c.h.b16 %v596
    %v744 = vunpack.c.l.b16 %v597
    %v745 = vunpack.c.h.b16 %v597
    %v746 = vunpack.c.l.b16 %v598
    %v747 = vunpack.c.h.b16 %v598
    %v748 = vunpack.c.l.b16 %v599
    %v749 = vunpack.c.h.b16 %v599
    %v750 = vunpack.c.l.b16 %v600
    %v751 = vunpack.c.h.b16 %v600
    %v752 = vunpack.c.l.b16 %v601
    %v753 = vunpack.c.h.b16 %v601
    %v754 = vunpack.c.l.b16 %v602
    %v755 = vunpack.c.h.b16 %v602
    %v756 = vunpack.c.l.b16 %v603
    %v757 = vunpack.c.h.b16 %v603
    %v758 = vunpack.c.l.b16 %v604
    %v759 = vunpack.c.h.b16 %v604
    %v760 = vunpack.c.l.b16 %v605
    %v761 = vunpack.c.h.b16 %v605
    %v762 = vunpack.c.l.b16 %v606
    %v763 = vunpack.c.h.b16 %v606
    %v764 = vunpack.c.l.b16 %v607
    %v765 = vunpack.c.h.b16 %v607
    %v766 = vunpack.c.l.b16 %v608
    %v767 = vunpack.c.h.b16 %v608
    %v768 = vunpack.c.l.b16 %v609
    %v769 = vunpack.c.h.b16 %v609
    %v770 = vunpack.c.l.b16 %v610
    %v771 = vunpack.c.h.b16 %v610
    %v772 = vunpack.c.l.b16 %v611
    %v773 = vunpack.c.h.b16 %v611
    %v774 = vunpack.c.l.b16 %v612
    %v775 = vunpack.c.h.b16 %v612
    %v776 = vunpack.c.l.b16 %v613
    %v777 = vunpack.c.h.b16 %v613
    %v778 = vunpack.c.l.b16 %v614
    %v779 = vunpack.c.h.b16 %v614
    %v780 = vunpack.c.l.b16 %v615
    %v781 = vunpack.c.h.b16 %v615
    %v782 = vunpack.c.l.b16 %v616
    %v783 = vunpack.c.h.b16 %v616
    %v784 = vunpack.c.l.b16 %v617
    %v785 = vunpack.c.h.b16 %v617
    %v786 = vunpack.c.l.b16 %v618
    %v787 = vunpack.c.h.b16 %v618
    %v788 = vunpack.c.l.b16 %v619
    %v789 = vunpack.c.h.b16 %v619
    %v790 = vunpack.c.l.b16 %v620
    %v791 = vunpack.c.h.b16 %v620
    %v792 = vunpack.c.l.b16 %v621
    %v793 = vunpack.c.h.b16 %v621
    %v794 = vunpack.c.l.b16 %v622
    %v795 = vunpack.c.h.b16 %v622
    %v796 = vunpack.c.l.b16 %v623
    %v797 = vunpack.c.h.b16 %v623
    %v798 = vunpack.c.l.b16 %v624
    %v799 = vunpack.c.h.b16 %v624
    %v800 = vunpack.c.l.b16 %v625
    %v801 = vunpack.c.h.b16 %v625
    %v802 = vunpack.c.l.b16 %v626
    %v803 = vunpack.c.h.b16 %v626
    %v804 = vunpack.c.l.b16 %v627
    %v805 = vunpack.c.h.b16 %v627
    %v806 = vunpack.c.l.b16 %v628
    %v807 = vunpack.c.h.b16 %v628
    %v808 = vunpack.c.l.b16 %v629
    %v809 = vunpack.c.h.b16 %v629
    %v810 = vunpack.c.l.b16 %v630
    %v811 = vunpack.c.h.b16 %v630
    %v812 = vunpack.c.l.b16 %v631
    %v813 = vunpack.c.h.b16 %v631
    %v814 = vunpack.c.l.b16 %v632
    %v815 = vunpack.c.h.b16 %v632
    %v816 = vunpack.c.l.b16 %v633
    %v817 = vunpack.c.h.b16 %v633
    %v818 = vunpack.c.l.b16 %v634
    %v819 = vunpack.c.h.b16 %v634
    %v820 = vunpack.c.l.b16 %v635
    %v821 = vunpack.c.h.b16 %v635
    %v822 = vunpack.c.l.b16 %v636
    %v823 = vunpack.c.h.b16 %v636
    %v824 = vunpack.c.l.b16 %v637
    %v825 = vunpack.c.h.b16 %v637
    %v826 = vunpack.c.l.b16 %v638
    %v827 = vunpack.c.h.b16 %v638
    %v828 = vunpack.c.l.b16 %v639
    %v829 = vunpack.c.h.b16 %v639
    %v830 = vunpack.c.l.b16 %v640
    %v831 = vunpack.c.h.b16 %v640
    %v832 = vunpack.c.l.b16 %v641
    %v833 = vunpack.c.h.b16 %v641
    %v834 = vunpack.c.l.b16 %v642
    %v835 = vunpack.c.h.b16 %v642
    %v836 = vunpack.c.l.b16 %v643
    %v837 = vunpack.c.h.b16 %v643
    %v838 = vunpack.c.l.b16 %v644
    %v839 = vunpack.c.h.b16 %v644
    %v840 = vunpack.c.l.b16 %v645
    %v841 = vunpack.c.h.b16 %v645
    %v842 = vunpack.c.l.b16 %v646
    %v843 = vunpack.c.h.b16 %v646
    %v844 = vunpack.c.l.b16 %v647
    %v845 = vunpack.c.h.b16 %v647
    %v846 = vunpack.c.l.b16 %v648
    %v847 = vunpack.c.h.b16 %v648
    %v848 = vunpack.c.l.b16 %v649
    %v849 = vunpack.c.h.b16 %v649
    %v850 = vunpack.c.l.b16 %v650
    %v851 = vunpack.c.h.b16 %v650
    %v852 = vunpack.c.l.b16 %v651
    %v853 = vunpack.c.h.b16 %v651
    %v854 = vpack.c.b16 %v730, %v726
    %v855 = vpack.c.b16 %v731, %v727
    %v856 = vpack.c.b16 %v732, %v728
    %v857 = vpack.c.b16 %v733, %v729
    %v858 = vpack.c.b16 %v738, %v734
    %v859 = vpack.c.b16 %v739, %v735
    %v860 = vpack.c.b16 %v740, %v736
    %v861 = vpack.c.b16 %v741, %v737
    %v862 = vpack.c.b16 %v746, %v742
    %v863 = vpack.c.b16 %v747, %v743
    %v864 = vpack.c.b16 %v748, %v744
    %v865 = vpack.c.b16 %v749, %v745
    %v866 = vpack.c.b16 %v754, %v750
    %v867 = vpack.c.b16 %v755, %v751
    %v868 = vpack.c.b16 %v756, %v752
    %v869 = vpack.c.b16 %v757, %v753
    %v870 = vpack.c.b16 %v762, %v758
    %v871 = vpack.c.b16 %v763, %v759
    %v872 = vpack.c.b16 %v764, %v760
    %v873 = vpack.c.b16 %v765, %v761
    %v874 = vpack.c.b16 %v770, %v766
    %v875 = vpack.c.b16 %v771, %v767
    %v876 = vpack.c.b16 %v772, %v768
    %v877 = vpack.c.b16 %v773, %v769
    %v878 = vpack.c.b16 %v778, %v774
    %v879 = vpack.c.b16 %v779, %v775
    %v880 = vpack.c.b16 %v780, %v776
    %v881 = vpack.c.b16 %v781, %v777
    %v882 = vpack.c.b16 %v786, %v782
    %v883 = vpack.c.b16 %v787, %v783
    %v884 = vpack.c.b16 %v788, %v784
    %v885 = vpack.c.b16 %v789, %v785
    %v886 = vpack.c.b16 %v794, %v790
    %v887 = vpack.c.b16 %v795, %v791
    %v888 = vpack.c.b16 %v796, %v792
    %v889 = vpack.c.b16 %v797, %v793
    %v890 = vpack.c.b16 %v802, %v798
    %v891 = vpack.c.b16 %v803, %v799
    %v892 = vpack.c.b16 %v804, %v800
    %v893 = vpack.c.b16 %v805, %v801
    %v894 = vpack.c.b16 %v810, %v806
    %v895 = vpack.c.b16 %v811, %v807
    %v896 = vpack.c.b16 %v812, %v808
    %v897 = vpack.c.b16 %v813, %v809
    %v898 = vpack.c.b16 %v818, %v814
    %v899 = vpack.c.b16 %v819, %v815
    %v900 = vpack.c.b16 %v820, %v816
    %v901 = vpack.c.b16 %v821, %v817
    %v902 = vpack.c.b16 %v826, %v822
    %v903 = vpack.c.b16 %v827, %v823
    %v904 = vpack.c.b16 %v828, %v824
    %v905 = vpack.c.b16 %v829, %v825
    %v906 = vpack.c.b16 %v834, %v830
    %v907 = vpack.c.b16 %v835, %v831
    %v908 = vpack.c.b16 %v836, %v832
    %v909 = vpack.c.b16 %v837, %v833
    %v910 = vpack.c.b16 %v842, %v838
    %v911 = vpack.c.b16 %v843, %v839
    %v912 = vpack.c.b16 %v844, %v840
    %v913 = vpack.c.b16 %v845, %v841
    %v914 = vpack.c.b16 %v850, %v846
    %v915 = vpack.c.b16 %v851, %v847
    %v916 = vpack.c.b16 %v852, %v848
    %v917 = vpack.c.b16 %v853, %v849
    %982 = vmatpush.bf16.msra.mxu0 %v882
    %983 = vmatpush.bf16.msra.mxu0 %v878
    %984 = vmatpush.bf16.msra.mxu0 %v874
    %985 = vmatpush.bf16.msra.mxu0 %v870
    %986 = vmatpush.bf16.msra.mxu0 %v866
    %987 = vmatpush.bf16.msra.mxu0 %v862
    %988 = vmatpush.bf16.msra.mxu0 %v858
    %989 = vmatpush.bf16.msra.mxu0 %v854
    %990 = vmatmul.bf16.gmra.mxu0 %v586
    %v991 = vpop.f32.mrf.mxu0
    %v992 = vadd.f32 %v654, %v991
    %v993 = vpop.f32.mrf.mxu0
    %v994 = vadd.f32 %v654, %v993
    %995 = vdwg.mxu0
    %996 = vmatpush.bf16.msra.mxu0 %v914
    %997 = vmatpush.bf16.msra.mxu0 %v910
    %998 = vmatpush.bf16.msra.mxu0 %v906
    %999 = vmatpush.bf16.msra.mxu0 %v902
    %1000 = vmatpush.bf16.msra.mxu0 %v898
    %1001 = vmatpush.bf16.msra.mxu0 %v894
    %1002 = vmatpush.bf16.msra.mxu0 %v890
    %1003 = vmatpush.bf16.msra.mxu0 %v886
    %1004 = vmatmul.bf16.gmra.mxu0 %v587
    %v1005 = vpop.f32.mrf.mxu0
    %v1006 = vadd.f32 %v992, %v1005
    %v1007 = vpop.f32.mrf.mxu0
    %v1008 = vadd.f32 %v994, %v1007
    %1009 = vdwg.mxu0
    %1010 = vmatpush.bf16.msra.mxu0 %v883
    %1011 = vmatpush.bf16.msra.mxu0 %v879
    %1012 = vmatpush.bf16.msra.mxu0 %v875
    %1013 = vmatpush.bf16.msra.mxu0 %v871
    %1014 = vmatpush.bf16.msra.mxu0 %v867
    %1015 = vmatpush.bf16.msra.mxu0 %v863
    %1016 = vmatpush.bf16.msra.mxu0 %v859
    %1017 = vmatpush.bf16.msra.mxu0 %v855
    %1018 = vmatmul.bf16.gmra.mxu0 %v586
    %v1019 = vpop.f32.mrf.mxu0
    %v1020 = vadd.f32 %v655, %v1019
    %v1021 = vpop.f32.mrf.mxu0
    %v1022 = vadd.f32 %v655, %v1021
    %1023 = vdwg.mxu0
    %1024 = vmatpush.bf16.msra.mxu0 %v915
    %1025 = vmatpush.bf16.msra.mxu0 %v911
    %1026 = vmatpush.bf16.msra.mxu0 %v907
    %1027 = vmatpush.bf16.msra.mxu0 %v903
    %1028 = vmatpush.bf16.msra.mxu0 %v899
    %1029 = vmatpush.bf16.msra.mxu0 %v895
    %1030 = vmatpush.bf16.msra.mxu0 %v891
    %1031 = vmatpush.bf16.msra.mxu0 %v887
    %1032 = vmatmul.bf16.gmra.mxu0 %v587
    %v1033 = vpop.f32.mrf.mxu0
    %v1034 = vadd.f32 %v1020, %v1033
    %v1035 = vpop.f32.mrf.mxu0
    %v1036 = vadd.f32 %v1022, %v1035
    %1037 = vdwg.mxu0
    %1038 = vmatpush.bf16.msra.mxu0 %v884
    %1039 = vmatpush.bf16.msra.mxu0 %v880
    %1040 = vmatpush.bf16.msra.mxu0 %v876
    %1041 = vmatpush.bf16.msra.mxu0 %v872
    %1042 = vmatpush.bf16.msra.mxu0 %v868
    %1043 = vmatpush.bf16.msra.mxu0 %v864
    %1044 = vmatpush.bf16.msra.mxu0 %v860
    %1045 = vmatpush.bf16.msra.mxu0 %v856
    %1046 = vmatmul.bf16.gmra.mxu0 %v586
    %v1047 = vpop.f32.mrf.mxu0
    %v1048 = vadd.f32 %v656, %v1047
    %v1049 = vpop.f32.mrf.mxu0
    %v1050 = vadd.f32 %v656, %v1049
    %1051 = vdwg.mxu0
    %1052 = vmatpush.bf16.msra.mxu0 %v916
    %1053 = vmatpush.bf16.msra.mxu0 %v912
    %1054 = vmatpush.bf16.msra.mxu0 %v908
    %1055 = vmatpush.bf16.msra.mxu0 %v904
    %1056 = vmatpush.bf16.msra.mxu0 %v900
    %1057 = vmatpush.bf16.msra.mxu0 %v896
    %1058 = vmatpush.bf16.msra.mxu0 %v892
    %1059 = vmatpush.bf16.msra.mxu0 %v888
    %1060 = vmatmul.bf16.gmra.mxu0 %v587
    %v1061 = vpop.f32.mrf.mxu0
    %v1062 = vadd.f32 %v1048, %v1061
    %v1063 = vpop.f32.mrf.mxu0
    %v1064 = vadd.f32 %v1050, %v1063
    %1065 = vdwg.mxu0
    %1066 = vmatpush.bf16.msra.mxu0 %v885
    %1067 = vmatpush.bf16.msra.mxu0 %v881
    %1068 = vmatpush.bf16.msra.mxu0 %v877
    %1069 = vmatpush.bf16.msra.mxu0 %v873
    %1070 = vmatpush.bf16.msra.mxu0 %v869
    %1071 = vmatpush.bf16.msra.mxu0 %v865
    %1072 = vmatpush.bf16.msra.mxu0 %v861
    %1073 = vmatpush.bf16.msra.mxu0 %v857
    %1074 = vmatmul.bf16.gmra.mxu0 %v586
    %v1075 = vpop.f32.mrf.mxu0
    %v1076 = vadd.f32 %v657, %v1075
    %v1077 = vpop.f32.mrf.mxu0
    %v1078 = vadd.f32 %v657, %v1077
    %1079 = vdwg.mxu0
    %1080 = vmatpush.bf16.msra.mxu0 %v917
    %1081 = vmatpush.bf16.msra.mxu0 %v913
    %1082 = vmatpush.bf16.msra.mxu0 %v909
    %1083 = vmatpush.bf16.msra.mxu0 %v905
    %1084 = vmatpush.bf16.msra.mxu0 %v901
    %1085 = vmatpush.bf16.msra.mxu0 %v897
    %1086 = vmatpush.bf16.msra.mxu0 %v893
    %1087 = vmatpush.bf16.msra.mxu0 %v889
    %1088 = vmatmul.bf16.gmra.mxu0 %v587
    %v1089 = vpop.f32.mrf.mxu0
    %v1090 = vadd.f32 %v1076, %v1089
    %v1091 = vpop.f32.mrf.mxu0
    %v1092 = vadd.f32 %v1078, %v1091
    %1093 = vdwg.mxu0
    %v1094 = vadd.f32 %v1006, %v1008
    %v1095 = vrot.slane %v1094, 4
    %v1096 = vadd.f32 %v1094, %v1095
    %v1097 = vrot.slane %v1096, 2
    %v1098 = vadd.f32 %v1096, %v1097
    %v1099 = vrot.slane %v1098, 1
    %v1100 = vadd.f32 %v1098, %v1099
    %v1101 = vadd.f32 %v1034, %v1036
    %v1102 = vrot.slane %v1101, 4
    %v1103 = vadd.f32 %v1101, %v1102
    %v1104 = vrot.slane %v1103, 2
    %v1105 = vadd.f32 %v1103, %v1104
    %v1106 = vrot.slane %v1105, 1
    %v1107 = vadd.f32 %v1105, %v1106
    %v1108 = vadd.f32 %v1062, %v1064
    %v1109 = vrot.slane %v1108, 4
    %v1110 = vadd.f32 %v1108, %v1109
    %v1111 = vrot.slane %v1110, 2
    %v1112 = vadd.f32 %v1110, %v1111
    %v1113 = vrot.slane %v1112, 1
    %v1114 = vadd.f32 %v1112, %v1113
    %v1115 = vadd.f32 %v1090, %v1092
    %v1116 = vrot.slane %v1115, 4
    %v1117 = vadd.f32 %v1115, %v1116
    %v1118 = vrot.slane %v1117, 2
    %v1119 = vadd.f32 %v1117, %v1118
    %v1120 = vrot.slane %v1119, 1
    %v1121 = vadd.f32 %v1119, %v1120
    %v1122 = vmul.f32 %v1100, %v492
    %v1123 = vmul.f32 %v1107, %v492
    %v1124 = vmul.f32 %v1114, %v492
    %v1125 = vmul.f32 %v1121, %v492
    %v1126 = vmul.f32 %v1006, %v1006
    %v1127 = vmul.f32 %v1034, %v1034
    %v1128 = vmul.f32 %v1062, %v1062
    %v1129 = vmul.f32 %v1090, %v1090
    %v1130 = vmul.f32 %v1008, %v1008
    %v1131 = vmul.f32 %v1036, %v1036
    %v1132 = vmul.f32 %v1064, %v1064
    %v1133 = vmul.f32 %v1092, %v1092
    %v1134 = vadd.f32 %v1126, %v1130
    %v1135 = vrot.slane %v1134, 4
    %v1136 = vadd.f32 %v1134, %v1135
    %v1137 = vrot.slane %v1136, 2
    %v1138 = vadd.f32 %v1136, %v1137
    %v1139 = vrot.slane %v1138, 1
    %v1140 = vadd.f32 %v1138, %v1139
    %v1141 = vadd.f32 %v1127, %v1131
    %v1142 = vrot.slane %v1141, 4
    %v1143 = vadd.f32 %v1141, %v1142
    %v1144 = vrot.slane %v1143, 2
    %v1145 = vadd.f32 %v1143, %v1144
    %v1146 = vrot.slane %v1145, 1
    %v1147 = vadd.f32 %v1145, %v1146
    %v1148 = vadd.f32 %v1128, %v1132
    %v1149 = vrot.slane %v1148, 4
    %v1150 = vadd.f32 %v1148, %v1149
    %v1151 = vrot.slane %v1150, 2
    %v1152 = vadd.f32 %v1150, %v1151
    %v1153 = vrot.slane %v1152, 1
    %v1154 = vadd.f32 %v1152, %v1153
    %v1155 = vadd.f32 %v1129, %v1133
    %v1156 = vrot.slane %v1155, 4
    %v1157 = vadd.f32 %v1155, %v1156
    %v1158 = vrot.slane %v1157, 2
    %v1159 = vadd.f32 %v1157, %v1158
    %v1160 = vrot.slane %v1159, 1
    %v1161 = vadd.f32 %v1159, %v1160
    %v1162 = vmul.f32 %v1140, %v492
    %v1163 = vmul.f32 %v1147, %v492
    %v1164 = vmul.f32 %v1154, %v492
    %v1165 = vmul.f32 %v1161, %v492
    %v1166 = vmul.f32 %v1122, %v1122
    %v1167 = vmul.f32 %v1123, %v1123
    %v1168 = vmul.f32 %v1124, %v1124
    %v1169 = vmul.f32 %v1125, %v1125
    %v1170 = vsub.f32 %v1162, %v1166
    %v1171 = vsub.f32 %v1163, %v1167
    %v1172 = vsub.f32 %v1164, %v1168
    %v1173 = vsub.f32 %v1165, %v1169
    %v1174 = vmax.f32 %v1170, 0.0
    %v1175 = vmax.f32 %v1171, 0.0
    %v1176 = vmax.f32 %v1172, 0.0
    %v1177 = vmax.f32 %v1173, 0.0
    %v1178 = vld [vmem:[#allocation19] sm:$0xf]
    %v1179 = vadd.f32 %v1174, 0.8
    %v1180 = vadd.f32 %v1175, 0.8
    %v1181 = vadd.f32 %v1176, 0.8
    %v1182 = vadd.f32 %v1177, 0.8
    %v1183 = vrsqrt.pop %v1179
    %v1184 = vmul.f32 %v1183, %v1179
    %v1185 = vmul.f32 %v1184, %v1183
    %v1186 = vmul.f32 0.5, %v1185
    %v1187 = vsub.f32 1.5, %v1186
    %v1188 = vmul.f32 %v1183, %v1187
    %vm1189 = vweird.f32 %v1179
    %vm1190 = vweird.f32 %v1183
    %vm1191 = vmor %vm1189, %vm1190
    %v1192 = vsel %vm1191, %v1183, %v1188
    %v1193 = vrsqrt.pop %v1180
    %v1194 = vmul.f32 %v1193, %v1180
    %v1195 = vmul.f32 %v1194, %v1193
    %v1196 = vmul.f32 0.5, %v1195
    %v1197 = vsub.f32 1.5, %v1196
    %v1198 = vmul.f32 %v1193, %v1197
    %vm1199 = vweird.f32 %v1180
    %vm1200 = vweird.f32 %v1193
    %vm1201 = vmor %vm1199, %vm1200
    %v1202 = vsel %vm1201, %v1193, %v1198
    %v1203 = vrsqrt.pop %v1181
    %v1204 = vmul.f32 %v1203, %v1181
    %v1205 = vmul.f32 %v1204, %v1203
    %v1206 = vmul.f32 0.5, %v1205
    %v1207 = vsub.f32 1.5, %v1206
    %v1208 = vmul.f32 %v1203, %v1207
    %vm1209 = vweird.f32 %v1181
    %vm1210 = vweird.f32 %v1203
    %vm1211 = vmor %vm1209, %vm1210
    %v1212 = vsel %vm1211, %v1203, %v1208
    %v1213 = vrsqrt.pop %v1182
    %v1214 = vmul.f32 %v1213, %v1182
    %v1215 = vmul.f32 %v1214, %v1213
    %v1216 = vmul.f32 0.5, %v1215
    %v1217 = vsub.f32 1.5, %v1216
    %v1218 = vmul.f32 %v1213, %v1217
    %vm1219 = vweird.f32 %v1182
    %vm1220 = vweird.f32 %v1213
    %vm1221 = vmor %vm1219, %vm1220
    %v1222 = vsel %vm1221, %v1213, %v1218
    %v1227 = vrot.slane %v1202, 7
    %v1228 = vrot.slane %v1212, 6
    %v1229 = vrot.slane %v1222, 5
    %v1230 = vsel %vm547, %v1192, %v1227
    %vm1231 = vcmask 1042434
    %v1232 = vsel %vm1231, %v1228, %v1229
    %vm1233 = vcmask 1041408
    %v1234 = vsel %vm1233, %v1230, %v1232
    %v1236 = vmul.f32 %v1178, %v1234
    %v1237 = vld [vmem:[#allocation21] sm:$0xf]
    %v1239 = vperm.slane %v1236, 0
    %v1240 = vperm.slane %v1236, 1
    %v1241 = vperm.slane %v1236, 2
    %v1242 = vperm.slane %v1236, 3
    %v1247 = vmul.f32 %v1122, %v1239
    %v1248 = vmul.f32 %v1123, %v1240
    %v1249 = vmul.f32 %v1124, %v1241
    %v1250 = vmul.f32 %v1125, %v1242
    %v1255 = vrot.slane %v1248, 7
    %v1256 = vrot.slane %v1249, 6
    %v1257 = vrot.slane %v1250, 5
    %v1258 = vsel %vm547, %v1247, %v1255
    %v1259 = vsel %vm1231, %v1256, %v1257
    %v1260 = vsel %vm1233, %v1258, %v1259
    %v1262 = vsub.f32 %v1237, %v1260
    %v1263 = vmul.f32 %v1006, %v1239
    %v1264 = vmul.f32 %v1034, %v1240
    %v1265 = vmul.f32 %v1062, %v1241
    %v1266 = vmul.f32 %v1090, %v1242
    %v1267 = vmul.f32 %v1008, %v1239
    %v1268 = vmul.f32 %v1036, %v1240
    %v1269 = vmul.f32 %v1064, %v1241
    %v1270 = vmul.f32 %v1092, %v1242
    %v1272 = vperm.slane %v1262, 0
    %v1273 = vperm.slane %v1262, 1
    %v1274 = vperm.slane %v1262, 2
    %v1275 = vperm.slane %v1262, 3
    %v1280 = vadd.f32 %v1263, %v1272
    %v1281 = vadd.f32 %v1264, %v1273
    %v1282 = vadd.f32 %v1265, %v1274
    %v1283 = vadd.f32 %v1266, %v1275
    %v1284 = vadd.f32 %v1267, %v1272
    %v1285 = vadd.f32 %v1268, %v1273
    %v1286 = vadd.f32 %v1269, %v1274
    %v1287 = vadd.f32 %v1270, %v1275
    %v1288 = vmul.f32 %v1280, 0.2
    %v1289 = vmul.f32 %v1281, 0.2
    %v1290 = vmul.f32 %v1282, 0.2
    %v1291 = vmul.f32 %v1283, 0.2
    %v1292 = vmul.f32 %v1284, 0.2
    %v1293 = vmul.f32 %v1285, 0.2
    %v1294 = vmul.f32 %v1286, 0.2
    %v1295 = vmul.f32 %v1287, 0.2
    %v1296 = vmax.f32 %v1280, %v1288
    %v1297 = vmax.f32 %v1281, %v1289
    %v1298 = vmax.f32 %v1282, %v1290
    %v1299 = vmax.f32 %v1283, %v1291
    %v1300 = vmax.f32 %v1284, %v1292
    %v1301 = vmax.f32 %v1285, %v1293
    %v1302 = vmax.f32 %v1286, %v1294
    %v1303 = vmax.f32 %v1287, %v1295
    %v1304 = vpack.c.bf16 %v1300, %v1296
    %v1305 = vpack.c.bf16 %v1301, %v1297
    %v1306 = vpack.c.bf16 %v1302, %v1298
    %v1307 = vpack.c.bf16 %v1303, %v1299
    %v1308 = vld [vmem:[#allocation22] sm:$0xff]
    %v1309 = vld [vmem:[#allocation22 + $0x8] sm:$0xff]
    %v1310 = vld [vmem:[#allocation22 + $0x10] sm:$0xff]
    %v1311 = vld [vmem:[#allocation22 + $0x18] sm:$0xff]
    %v1312 = vld [vmem:[#allocation22 + $0x20] sm:$0xff]
    %v1313 = vld [vmem:[#allocation22 + $0x28] sm:$0xff]
    %v1314 = vld [vmem:[#allocation22 + $0x30] sm:$0xff]
    %v1315 = vld [vmem:[#allocation22 + $0x38] sm:$0xff]
    %v1316 = vld [vmem:[#allocation22 + $0x40] sm:$0xff]
    %v1317 = vld [vmem:[#allocation22 + $0x48] sm:$0xff]
    %v1318 = vld [vmem:[#allocation22 + $0x50] sm:$0xff]
    %v1319 = vld [vmem:[#allocation22 + $0x58] sm:$0xff]
    %v1320 = vld [vmem:[#allocation22 + $0x60] sm:$0xff]
    %v1321 = vld [vmem:[#allocation22 + $0x68] sm:$0xff]
    %v1322 = vld [vmem:[#allocation22 + $0x70] sm:$0xff]
    %v1323 = vld [vmem:[#allocation22 + $0x78] sm:$0xff]
    %v1324 = vld [vmem:[#allocation22 + $0x80] sm:$0xff]
    %v1325 = vld [vmem:[#allocation22 + $0x88] sm:$0xff]
    %v1326 = vld [vmem:[#allocation22 + $0x90] sm:$0xff]
    %v1327 = vld [vmem:[#allocation22 + $0x98] sm:$0xff]
    %v1328 = vld [vmem:[#allocation22 + $0xa0] sm:$0xff]
    %v1329 = vld [vmem:[#allocation22 + $0xa8] sm:$0xff]
    %v1330 = vld [vmem:[#allocation22 + $0xb0] sm:$0xff]
    %v1331 = vld [vmem:[#allocation22 + $0xb8] sm:$0xff]
    %v1332 = vld [vmem:[#allocation22 + $0xc0] sm:$0xff]
    %v1333 = vld [vmem:[#allocation22 + $0xc8] sm:$0xff]
    %v1334 = vld [vmem:[#allocation22 + $0xd0] sm:$0xff]
    %v1335 = vld [vmem:[#allocation22 + $0xd8] sm:$0xff]
    %v1336 = vld [vmem:[#allocation22 + $0xe0] sm:$0xff]
    %v1337 = vld [vmem:[#allocation22 + $0xe8] sm:$0xff]
    %v1338 = vld [vmem:[#allocation22 + $0xf0] sm:$0xff]
    %v1339 = vld [vmem:[#allocation22 + $0xf8] sm:$0xff]
    %v1340 = vld [vmem:[#allocation22 + $0x100] sm:$0xff]
    %v1341 = vld [vmem:[#allocation22 + $0x108] sm:$0xff]
    %v1342 = vld [vmem:[#allocation22 + $0x110] sm:$0xff]
    %v1343 = vld [vmem:[#allocation22 + $0x118] sm:$0xff]
    %v1344 = vld [vmem:[#allocation22 + $0x120] sm:$0xff]
    %v1345 = vld [vmem:[#allocation22 + $0x128] sm:$0xff]
    %v1346 = vld [vmem:[#allocation22 + $0x130] sm:$0xff]
    %v1347 = vld [vmem:[#allocation22 + $0x138] sm:$0xff]
    %v1348 = vld [vmem:[#allocation22 + $0x140] sm:$0xff]
    %v1349 = vld [vmem:[#allocation22 + $0x148] sm:$0xff]
    %v1350 = vld [vmem:[#allocation22 + $0x150] sm:$0xff]
    %v1351 = vld [vmem:[#allocation22 + $0x158] sm:$0xff]
    %v1352 = vld [vmem:[#allocation22 + $0x160] sm:$0xff]
    %v1353 = vld [vmem:[#allocation22 + $0x168] sm:$0xff]
    %v1354 = vld [vmem:[#allocation22 + $0x170] sm:$0xff]
    %v1355 = vld [vmem:[#allocation22 + $0x178] sm:$0xff]
    %v1356 = vld [vmem:[#allocation22 + $0x180] sm:$0xff]
    %v1357 = vld [vmem:[#allocation22 + $0x188] sm:$0xff]
    %v1358 = vld [vmem:[#allocation22 + $0x190] sm:$0xff]
    %v1359 = vld [vmem:[#allocation22 + $0x198] sm:$0xff]
    %v1360 = vld [vmem:[#allocation22 + $0x1a0] sm:$0xff]
    %v1361 = vld [vmem:[#allocation22 + $0x1a8] sm:$0xff]
    %v1362 = vld [vmem:[#allocation22 + $0x1b0] sm:$0xff]
    %v1363 = vld [vmem:[#allocation22 + $0x1b8] sm:$0xff]
    %v1364 = vld [vmem:[#allocation22 + $0x1c0] sm:$0xff]
    %v1365 = vld [vmem:[#allocation22 + $0x1c8] sm:$0xff]
    %v1366 = vld [vmem:[#allocation22 + $0x1d0] sm:$0xff]
    %v1367 = vld [vmem:[#allocation22 + $0x1d8] sm:$0xff]
    %v1368 = vld [vmem:[#allocation22 + $0x1e0] sm:$0xff]
    %v1369 = vld [vmem:[#allocation22 + $0x1e8] sm:$0xff]
    %v1370 = vld [vmem:[#allocation22 + $0x1f0] sm:$0xff]
    %v1371 = vld [vmem:[#allocation22 + $0x1f8] sm:$0xff]
    %v1372 = vld [vmem:[#allocation22 + $0x200] sm:$0xff]
    %v1373 = vld [vmem:[#allocation22 + $0x208] sm:$0xff]
    %v1374 = vld [vmem:[#allocation22 + $0x210] sm:$0xff]
    %v1375 = vld [vmem:[#allocation22 + $0x218] sm:$0xff]
    %v1376 = vld [vmem:[#allocation22 + $0x220] sm:$0xff]
    %v1377 = vld [vmem:[#allocation22 + $0x228] sm:$0xff]
    %v1378 = vld [vmem:[#allocation22 + $0x230] sm:$0xff]
    %v1379 = vld [vmem:[#allocation22 + $0x238] sm:$0xff]
    %v1380 = vld [vmem:[#allocation22 + $0x240] sm:$0xff]
    %v1381 = vld [vmem:[#allocation22 + $0x248] sm:$0xff]
    %v1382 = vld [vmem:[#allocation22 + $0x250] sm:$0xff]
    %v1383 = vld [vmem:[#allocation22 + $0x258] sm:$0xff]
    %v1384 = vld [vmem:[#allocation22 + $0x260] sm:$0xff]
    %v1385 = vld [vmem:[#allocation22 + $0x268] sm:$0xff]
    %v1386 = vld [vmem:[#allocation22 + $0x270] sm:$0xff]
    %v1387 = vld [vmem:[#allocation22 + $0x278] sm:$0xff]
    %v1388 = vld [vmem:[#allocation22 + $0x280] sm:$0xff]
    %v1389 = vld [vmem:[#allocation22 + $0x288] sm:$0xff]
    %v1390 = vld [vmem:[#allocation22 + $0x290] sm:$0xff]
    %v1391 = vld [vmem:[#allocation22 + $0x298] sm:$0xff]
    %v1392 = vld [vmem:[#allocation22 + $0x2a0] sm:$0xff]
    %v1393 = vld [vmem:[#allocation22 + $0x2a8] sm:$0xff]
    %v1394 = vld [vmem:[#allocation22 + $0x2b0] sm:$0xff]
    %v1395 = vld [vmem:[#allocation22 + $0x2b8] sm:$0xff]
    %v1396 = vld [vmem:[#allocation22 + $0x2c0] sm:$0xff]
    %v1397 = vld [vmem:[#allocation22 + $0x2c8] sm:$0xff]
    %v1398 = vld [vmem:[#allocation22 + $0x2d0] sm:$0xff]
    %v1399 = vld [vmem:[#allocation22 + $0x2d8] sm:$0xff]
    %v1400 = vld [vmem:[#allocation22 + $0x2e0] sm:$0xff]
    %v1401 = vld [vmem:[#allocation22 + $0x2e8] sm:$0xff]
    %v1402 = vld [vmem:[#allocation22 + $0x2f0] sm:$0xff]
    %v1403 = vld [vmem:[#allocation22 + $0x2f8] sm:$0xff]
    %v1404 = vld [vmem:[#allocation22 + $0x300] sm:$0xff]
    %v1405 = vld [vmem:[#allocation22 + $0x308] sm:$0xff]
    %v1406 = vld [vmem:[#allocation22 + $0x310] sm:$0xff]
    %v1407 = vld [vmem:[#allocation22 + $0x318] sm:$0xff]
    %v1408 = vld [vmem:[#allocation22 + $0x320] sm:$0xff]
    %v1409 = vld [vmem:[#allocation22 + $0x328] sm:$0xff]
    %v1410 = vld [vmem:[#allocation22 + $0x330] sm:$0xff]
    %v1411 = vld [vmem:[#allocation22 + $0x338] sm:$0xff]
    %v1412 = vld [vmem:[#allocation22 + $0x340] sm:$0xff]
    %v1413 = vld [vmem:[#allocation22 + $0x348] sm:$0xff]
    %v1414 = vld [vmem:[#allocation22 + $0x350] sm:$0xff]
    %v1415 = vld [vmem:[#allocation22 + $0x358] sm:$0xff]
    %v1416 = vld [vmem:[#allocation22 + $0x360] sm:$0xff]
    %v1417 = vld [vmem:[#allocation22 + $0x368] sm:$0xff]
    %v1418 = vld [vmem:[#allocation22 + $0x370] sm:$0xff]
    %v1419 = vld [vmem:[#allocation22 + $0x378] sm:$0xff]
    %v1420 = vld [vmem:[#allocation22 + $0x380] sm:$0xff]
    %v1421 = vld [vmem:[#allocation22 + $0x388] sm:$0xff]
    %v1422 = vld [vmem:[#allocation22 + $0x390] sm:$0xff]
    %v1423 = vld [vmem:[#allocation22 + $0x398] sm:$0xff]
    %v1424 = vld [vmem:[#allocation22 + $0x3a0] sm:$0xff]
    %v1425 = vld [vmem:[#allocation22 + $0x3a8] sm:$0xff]
    %v1426 = vld [vmem:[#allocation22 + $0x3b0] sm:$0xff]
    %v1427 = vld [vmem:[#allocation22 + $0x3b8] sm:$0xff]
    %v1428 = vld [vmem:[#allocation22 + $0x3c0] sm:$0xff]
    %v1429 = vld [vmem:[#allocation22 + $0x3c8] sm:$0xff]
    %v1430 = vld [vmem:[#allocation22 + $0x3d0] sm:$0xff]
    %v1431 = vld [vmem:[#allocation22 + $0x3d8] sm:$0xff]
    %v1432 = vld [vmem:[#allocation22 + $0x3e0] sm:$0xff]
    %v1433 = vld [vmem:[#allocation22 + $0x3e8] sm:$0xff]
    %v1434 = vld [vmem:[#allocation22 + $0x3f0] sm:$0xff]
    %v1435 = vld [vmem:[#allocation22 + $0x3f8] sm:$0xff]
    %v1436 = vld [vmem:[#allocation22 + $0x400] sm:$0xff]
    %v1437 = vld [vmem:[#allocation22 + $0x408] sm:$0xff]
    %v1438 = vld [vmem:[#allocation22 + $0x410] sm:$0xff]
    %v1439 = vld [vmem:[#allocation22 + $0x418] sm:$0xff]
    %v1440 = vld [vmem:[#allocation22 + $0x420] sm:$0xff]
    %v1441 = vld [vmem:[#allocation22 + $0x428] sm:$0xff]
    %v1442 = vld [vmem:[#allocation22 + $0x430] sm:$0xff]
    %v1443 = vld [vmem:[#allocation22 + $0x438] sm:$0xff]
    %v1444 = vld [vmem:[#allocation22 + $0x440] sm:$0xff]
    %v1445 = vld [vmem:[#allocation22 + $0x448] sm:$0xff]
    %v1446 = vld [vmem:[#allocation22 + $0x450] sm:$0xff]
    %v1447 = vld [vmem:[#allocation22 + $0x458] sm:$0xff]
    %v1448 = vld [vmem:[#allocation22 + $0x460] sm:$0xff]
    %v1449 = vld [vmem:[#allocation22 + $0x468] sm:$0xff]
    %v1450 = vld [vmem:[#allocation22 + $0x470] sm:$0xff]
    %v1451 = vld [vmem:[#allocation22 + $0x478] sm:$0xff]
    %v1452 = vld [vmem:[#allocation22 + $0x480] sm:$0xff]
    %v1453 = vld [vmem:[#allocation22 + $0x488] sm:$0xff]
    %v1454 = vld [vmem:[#allocation22 + $0x490] sm:$0xff]
    %v1455 = vld [vmem:[#allocation22 + $0x498] sm:$0xff]
    %v1456 = vld [vmem:[#allocation22 + $0x4a0] sm:$0xff]
    %v1457 = vld [vmem:[#allocation22 + $0x4a8] sm:$0xff]
    %v1458 = vld [vmem:[#allocation22 + $0x4b0] sm:$0xff]
    %v1459 = vld [vmem:[#allocation22 + $0x4b8] sm:$0xff]
    %v1460 = vld [vmem:[#allocation22 + $0x4c0] sm:$0xff]
    %v1461 = vld [vmem:[#allocation22 + $0x4c8] sm:$0xff]
    %v1462 = vld [vmem:[#allocation22 + $0x4d0] sm:$0xff]
    %v1463 = vld [vmem:[#allocation22 + $0x4d8] sm:$0xff]
    %v1464 = vld [vmem:[#allocation22 + $0x4e0] sm:$0xff]
    %v1465 = vld [vmem:[#allocation22 + $0x4e8] sm:$0xff]
    %v1466 = vld [vmem:[#allocation22 + $0x4f0] sm:$0xff]
    %v1467 = vld [vmem:[#allocation22 + $0x4f8] sm:$0xff]
    %v1468 = vld [vmem:[#allocation22 + $0x500] sm:$0xff]
    %v1469 = vld [vmem:[#allocation22 + $0x508] sm:$0xff]
    %v1470 = vld [vmem:[#allocation22 + $0x510] sm:$0xff]
    %v1471 = vld [vmem:[#allocation22 + $0x518] sm:$0xff]
    %v1472 = vld [vmem:[#allocation22 + $0x520] sm:$0xff]
    %v1473 = vld [vmem:[#allocation22 + $0x528] sm:$0xff]
    %v1474 = vld [vmem:[#allocation22 + $0x530] sm:$0xff]
    %v1475 = vld [vmem:[#allocation22 + $0x538] sm:$0xff]
    %v1476 = vld [vmem:[#allocation22 + $0x540] sm:$0xff]
    %v1477 = vld [vmem:[#allocation22 + $0x548] sm:$0xff]
    %v1478 = vld [vmem:[#allocation22 + $0x550] sm:$0xff]
    %v1479 = vld [vmem:[#allocation22 + $0x558] sm:$0xff]
    %v1480 = vld [vmem:[#allocation22 + $0x560] sm:$0xff]
    %v1481 = vld [vmem:[#allocation22 + $0x568] sm:$0xff]
    %v1482 = vld [vmem:[#allocation22 + $0x570] sm:$0xff]
    %v1483 = vld [vmem:[#allocation22 + $0x578] sm:$0xff]
    %v1484 = vld [vmem:[#allocation22 + $0x580] sm:$0xff]
    %v1485 = vld [vmem:[#allocation22 + $0x588] sm:$0xff]
    %v1486 = vld [vmem:[#allocation22 + $0x590] sm:$0xff]
    %v1487 = vld [vmem:[#allocation22 + $0x598] sm:$0xff]
    %v1488 = vld [vmem:[#allocation22 + $0x5a0] sm:$0xff]
    %v1489 = vld [vmem:[#allocation22 + $0x5a8] sm:$0xff]
    %v1490 = vld [vmem:[#allocation22 + $0x5b0] sm:$0xff]
    %v1491 = vld [vmem:[#allocation22 + $0x5b8] sm:$0xff]
    %v1492 = vld [vmem:[#allocation22 + $0x5c0] sm:$0xff]
    %v1493 = vld [vmem:[#allocation22 + $0x5c8] sm:$0xff]
    %v1494 = vld [vmem:[#allocation22 + $0x5d0] sm:$0xff]
    %v1495 = vld [vmem:[#allocation22 + $0x5d8] sm:$0xff]
    %v1496 = vld [vmem:[#allocation22 + $0x5e0] sm:$0xff]
    %v1497 = vld [vmem:[#allocation22 + $0x5e8] sm:$0xff]
    %v1498 = vld [vmem:[#allocation22 + $0x5f0] sm:$0xff]
    %v1499 = vld [vmem:[#allocation22 + $0x5f8] sm:$0xff]
    %v1500 = vld [vmem:[#allocation22 + $0x600] sm:$0xff]
    %v1501 = vld [vmem:[#allocation22 + $0x608] sm:$0xff]
    %v1502 = vld [vmem:[#allocation22 + $0x610] sm:$0xff]
    %v1503 = vld [vmem:[#allocation22 + $0x618] sm:$0xff]
    %v1504 = vld [vmem:[#allocation22 + $0x620] sm:$0xff]
    %v1505 = vld [vmem:[#allocation22 + $0x628] sm:$0xff]
    %v1506 = vld [vmem:[#allocation22 + $0x630] sm:$0xff]
    %v1507 = vld [vmem:[#allocation22 + $0x638] sm:$0xff]
    %v1508 = vld [vmem:[#allocation22 + $0x640] sm:$0xff]
    %v1509 = vld [vmem:[#allocation22 + $0x648] sm:$0xff]
    %v1510 = vld [vmem:[#allocation22 + $0x650] sm:$0xff]
    %v1511 = vld [vmem:[#allocation22 + $0x658] sm:$0xff]
    %v1512 = vld [vmem:[#allocation22 + $0x660] sm:$0xff]
    %v1513 = vld [vmem:[#allocation22 + $0x668] sm:$0xff]
    %v1514 = vld [vmem:[#allocation22 + $0x670] sm:$0xff]
    %v1515 = vld [vmem:[#allocation22 + $0x678] sm:$0xff]
    %v1516 = vld [vmem:[#allocation22 + $0x680] sm:$0xff]
    %v1517 = vld [vmem:[#allocation22 + $0x688] sm:$0xff]
    %v1518 = vld [vmem:[#allocation22 + $0x690] sm:$0xff]
    %v1519 = vld [vmem:[#allocation22 + $0x698] sm:$0xff]
    %v1520 = vld [vmem:[#allocation22 + $0x6a0] sm:$0xff]
    %v1521 = vld [vmem:[#allocation22 + $0x6a8] sm:$0xff]
    %v1522 = vld [vmem:[#allocation22 + $0x6b0] sm:$0xff]
    %v1523 = vld [vmem:[#allocation22 + $0x6b8] sm:$0xff]
    %v1524 = vld [vmem:[#allocation22 + $0x6c0] sm:$0xff]
    %v1525 = vld [vmem:[#allocation22 + $0x6c8] sm:$0xff]
    %v1526 = vld [vmem:[#allocation22 + $0x6d0] sm:$0xff]
    %v1527 = vld [vmem:[#allocation22 + $0x6d8] sm:$0xff]
    %v1528 = vld [vmem:[#allocation22 + $0x6e0] sm:$0xff]
    %v1529 = vld [vmem:[#allocation22 + $0x6e8] sm:$0xff]
    %v1530 = vld [vmem:[#allocation22 + $0x6f0] sm:$0xff]
    %v1531 = vld [vmem:[#allocation22 + $0x6f8] sm:$0xff]
    %v1532 = vld [vmem:[#allocation22 + $0x700] sm:$0xff]
    %v1533 = vld [vmem:[#allocation22 + $0x708] sm:$0xff]
    %v1534 = vld [vmem:[#allocation22 + $0x710] sm:$0xff]
    %v1535 = vld [vmem:[#allocation22 + $0x718] sm:$0xff]
    %v1536 = vld [vmem:[#allocation22 + $0x720] sm:$0xff]
    %v1537 = vld [vmem:[#allocation22 + $0x728] sm:$0xff]
    %v1538 = vld [vmem:[#allocation22 + $0x730] sm:$0xff]
    %v1539 = vld [vmem:[#allocation22 + $0x738] sm:$0xff]
    %v1540 = vld [vmem:[#allocation22 + $0x740] sm:$0xff]
    %v1541 = vld [vmem:[#allocation22 + $0x748] sm:$0xff]
    %v1542 = vld [vmem:[#allocation22 + $0x750] sm:$0xff]
    %v1543 = vld [vmem:[#allocation22 + $0x758] sm:$0xff]
    %v1544 = vld [vmem:[#allocation22 + $0x760] sm:$0xff]
    %v1545 = vld [vmem:[#allocation22 + $0x768] sm:$0xff]
    %v1546 = vld [vmem:[#allocation22 + $0x770] sm:$0xff]
    %v1547 = vld [vmem:[#allocation22 + $0x778] sm:$0xff]
    %v1548 = vld [vmem:[#allocation22 + $0x780] sm:$0xff]
    %v1549 = vld [vmem:[#allocation22 + $0x788] sm:$0xff]
    %v1550 = vld [vmem:[#allocation22 + $0x790] sm:$0xff]
    %v1551 = vld [vmem:[#allocation22 + $0x798] sm:$0xff]
    %v1552 = vld [vmem:[#allocation22 + $0x7a0] sm:$0xff]
    %v1553 = vld [vmem:[#allocation22 + $0x7a8] sm:$0xff]
    %v1554 = vld [vmem:[#allocation22 + $0x7b0] sm:$0xff]
    %v1555 = vld [vmem:[#allocation22 + $0x7b8] sm:$0xff]
    %v1556 = vld [vmem:[#allocation22 + $0x7c0] sm:$0xff]
    %v1557 = vld [vmem:[#allocation22 + $0x7c8] sm:$0xff]
    %v1558 = vld [vmem:[#allocation22 + $0x7d0] sm:$0xff]
    %v1559 = vld [vmem:[#allocation22 + $0x7d8] sm:$0xff]
    %v1560 = vld [vmem:[#allocation22 + $0x7e0] sm:$0xff]
    %v1561 = vld [vmem:[#allocation22 + $0x7e8] sm:$0xff]
    %v1562 = vld [vmem:[#allocation22 + $0x7f0] sm:$0xff]
    %v1563 = vld [vmem:[#allocation22 + $0x7f8] sm:$0xff]
    %v1564 = vld [vmem:[#allocation24] sm:$0xff]
    %v1566 = vperm.slane %v1564, 0
    %v1567 = vperm.slane %v1564, 1
    %v1568 = vperm.slane %v1564, 2
    %v1569 = vperm.slane %v1564, 3
    %v1570 = vperm.slane %v1564, 4
    %v1571 = vperm.slane %v1564, 5
    %v1572 = vperm.slane %v1564, 6
    %v1573 = vperm.slane %v1564, 7
    %v1838 = vunpack.c.l.b16 %v1308
    %v1839 = vunpack.c.h.b16 %v1308
    %v1840 = vunpack.c.l.b16 %v1309
    %v1841 = vunpack.c.h.b16 %v1309
    %v1842 = vunpack.c.l.b16 %v1310
    %v1843 = vunpack.c.h.b16 %v1310
    %v1844 = vunpack.c.l.b16 %v1311
    %v1845 = vunpack.c.h.b16 %v1311
    %v1846 = vunpack.c.l.b16 %v1312
    %v1847 = vunpack.c.h.b16 %v1312
    %v1848 = vunpack.c.l.b16 %v1313
    %v1849 = vunpack.c.h.b16 %v1313
    %v1850 = vunpack.c.l.b16 %v1314
    %v1851 = vunpack.c.h.b16 %v1314
    %v1852 = vunpack.c.l.b16 %v1315
    %v1853 = vunpack.c.h.b16 %v1315
    %v1854 = vunpack.c.l.b16 %v1316
    %v1855 = vunpack.c.h.b16 %v1316
    %v1856 = vunpack.c.l.b16 %v1317
    %v1857 = vunpack.c.h.b16 %v1317
    %v1858 = vunpack.c.l.b16 %v1318
    %v1859 = vunpack.c.h.b16 %v1318
    %v1860 = vunpack.c.l.b16 %v1319
    %v1861 = vunpack.c.h.b16 %v1319
    %v1862 = vunpack.c.l.b16 %v1320
    %v1863 = vunpack.c.h.b16 %v1320
    %v1864 = vunpack.c.l.b16 %v1321
    %v1865 = vunpack.c.h.b16 %v1321
    %v1866 = vunpack.c.l.b16 %v1322
    %v1867 = vunpack.c.h.b16 %v1322
    %v1868 = vunpack.c.l.b16 %v1323
    %v1869 = vunpack.c.h.b16 %v1323
    %v1870 = vunpack.c.l.b16 %v1324
    %v1871 = vunpack.c.h.b16 %v1324
    %v1872 = vunpack.c.l.b16 %v1325
    %v1873 = vunpack.c.h.b16 %v1325
    %v1874 = vunpack.c.l.b16 %v1326
    %v1875 = vunpack.c.h.b16 %v1326
    %v1876 = vunpack.c.l.b16 %v1327
    %v1877 = vunpack.c.h.b16 %v1327
    %v1878 = vunpack.c.l.b16 %v1328
    %v1879 = vunpack.c.h.b16 %v1328
    %v1880 = vunpack.c.l.b16 %v1329
    %v1881 = vunpack.c.h.b16 %v1329
    %v1882 = vunpack.c.l.b16 %v1330
    %v1883 = vunpack.c.h.b16 %v1330
    %v1884 = vunpack.c.l.b16 %v1331
    %v1885 = vunpack.c.h.b16 %v1331
    %v1886 = vunpack.c.l.b16 %v1332
    %v1887 = vunpack.c.h.b16 %v1332
    %v1888 = vunpack.c.l.b16 %v1333
    %v1889 = vunpack.c.h.b16 %v1333
    %v1890 = vunpack.c.l.b16 %v1334
    %v1891 = vunpack.c.h.b16 %v1334
    %v1892 = vunpack.c.l.b16 %v1335
    %v1893 = vunpack.c.h.b16 %v1335
    %v1894 = vunpack.c.l.b16 %v1336
    %v1895 = vunpack.c.h.b16 %v1336
    %v1896 = vunpack.c.l.b16 %v1337
    %v1897 = vunpack.c.h.b16 %v1337
    %v1898 = vunpack.c.l.b16 %v1338
    %v1899 = vunpack.c.h.b16 %v1338
    %v1900 = vunpack.c.l.b16 %v1339
    %v1901 = vunpack.c.h.b16 %v1339
    %v1902 = vunpack.c.l.b16 %v1340
    %v1903 = vunpack.c.h.b16 %v1340
    %v1904 = vunpack.c.l.b16 %v1341
    %v1905 = vunpack.c.h.b16 %v1341
    %v1906 = vunpack.c.l.b16 %v1342
    %v1907 = vunpack.c.h.b16 %v1342
    %v1908 = vunpack.c.l.b16 %v1343
    %v1909 = vunpack.c.h.b16 %v1343
    %v1910 = vunpack.c.l.b16 %v1344
    %v1911 = vunpack.c.h.b16 %v1344
    %v1912 = vunpack.c.l.b16 %v1345
    %v1913 = vunpack.c.h.b16 %v1345
    %v1914 = vunpack.c.l.b16 %v1346
    %v1915 = vunpack.c.h.b16 %v1346
    %v1916 = vunpack.c.l.b16 %v1347
    %v1917 = vunpack.c.h.b16 %v1347
    %v1918 = vunpack.c.l.b16 %v1348
    %v1919 = vunpack.c.h.b16 %v1348
    %v1920 = vunpack.c.l.b16 %v1349
    %v1921 = vunpack.c.h.b16 %v1349
    %v1922 = vunpack.c.l.b16 %v1350
    %v1923 = vunpack.c.h.b16 %v1350
    %v1924 = vunpack.c.l.b16 %v1351
    %v1925 = vunpack.c.h.b16 %v1351
    %v1926 = vunpack.c.l.b16 %v1352
    %v1927 = vunpack.c.h.b16 %v1352
    %v1928 = vunpack.c.l.b16 %v1353
    %v1929 = vunpack.c.h.b16 %v1353
    %v1930 = vunpack.c.l.b16 %v1354
    %v1931 = vunpack.c.h.b16 %v1354
    %v1932 = vunpack.c.l.b16 %v1355
    %v1933 = vunpack.c.h.b16 %v1355
    %v1934 = vunpack.c.l.b16 %v1356
    %v1935 = vunpack.c.h.b16 %v1356
    %v1936 = vunpack.c.l.b16 %v1357
    %v1937 = vunpack.c.h.b16 %v1357
    %v1938 = vunpack.c.l.b16 %v1358
    %v1939 = vunpack.c.h.b16 %v1358
    %v1940 = vunpack.c.l.b16 %v1359
    %v1941 = vunpack.c.h.b16 %v1359
    %v1942 = vunpack.c.l.b16 %v1360
    %v1943 = vunpack.c.h.b16 %v1360
    %v1944 = vunpack.c.l.b16 %v1361
    %v1945 = vunpack.c.h.b16 %v1361
    %v1946 = vunpack.c.l.b16 %v1362
    %v1947 = vunpack.c.h.b16 %v1362
    %v1948 = vunpack.c.l.b16 %v1363
    %v1949 = vunpack.c.h.b16 %v1363
    %v1950 = vunpack.c.l.b16 %v1364
    %v1951 = vunpack.c.h.b16 %v1364
    %v1952 = vunpack.c.l.b16 %v1365
    %v1953 = vunpack.c.h.b16 %v1365
    %v1954 = vunpack.c.l.b16 %v1366
    %v1955 = vunpack.c.h.b16 %v1366
    %v1956 = vunpack.c.l.b16 %v1367
    %v1957 = vunpack.c.h.b16 %v1367
    %v1958 = vunpack.c.l.b16 %v1368
    %v1959 = vunpack.c.h.b16 %v1368
    %v1960 = vunpack.c.l.b16 %v1369
    %v1961 = vunpack.c.h.b16 %v1369
    %v1962 = vunpack.c.l.b16 %v1370
    %v1963 = vunpack.c.h.b16 %v1370
    %v1964 = vunpack.c.l.b16 %v1371
    %v1965 = vunpack.c.h.b16 %v1371
    %v1966 = vunpack.c.l.b16 %v1372
    %v1967 = vunpack.c.h.b16 %v1372
    %v1968 = vunpack.c.l.b16 %v1373
    %v1969 = vunpack.c.h.b16 %v1373
    %v1970 = vunpack.c.l.b16 %v1374
    %v1971 = vunpack.c.h.b16 %v1374
    %v1972 = vunpack.c.l.b16 %v1375
    %v1973 = vunpack.c.h.b16 %v1375
    %v1974 = vunpack.c.l.b16 %v1376
    %v1975 = vunpack.c.h.b16 %v1376
    %v1976 = vunpack.c.l.b16 %v1377
    %v1977 = vunpack.c.h.b16 %v1377
    %v1978 = vunpack.c.l.b16 %v1378
    %v1979 = vunpack.c.h.b16 %v1378
    %v1980 = vunpack.c.l.b16 %v1379
    %v1981 = vunpack.c.h.b16 %v1379
    %v1982 = vunpack.c.l.b16 %v1380
    %v1983 = vunpack.c.h.b16 %v1380
    %v1984 = vunpack.c.l.b16 %v1381
    %v1985 = vunpack.c.h.b16 %v1381
    %v1986 = vunpack.c.l.b16 %v1382
    %v1987 = vunpack.c.h.b16 %v1382
    %v1988 = vunpack.c.l.b16 %v1383
    %v1989 = vunpack.c.h.b16 %v1383
    %v1990 = vunpack.c.l.b16 %v1384
    %v1991 = vunpack.c.h.b16 %v1384
    %v1992 = vunpack.c.l.b16 %v1385
    %v1993 = vunpack.c.h.b16 %v1385
    %v1994 = vunpack.c.l.b16 %v1386
    %v1995 = vunpack.c.h.b16 %v1386
    %v1996 = vunpack.c.l.b16 %v1387
    %v1997 = vunpack.c.h.b16 %v1387
    %v1998 = vunpack.c.l.b16 %v1388
    %v1999 = vunpack.c.h.b16 %v1388
    %v2000 = vunpack.c.l.b16 %v1389
    %v2001 = vunpack.c.h.b16 %v1389
    %v2002 = vunpack.c.l.b16 %v1390
    %v2003 = vunpack.c.h.b16 %v1390
    %v2004 = vunpack.c.l.b16 %v1391
    %v2005 = vunpack.c.h.b16 %v1391
    %v2006 = vunpack.c.l.b16 %v1392
    %v2007 = vunpack.c.h.b16 %v1392
    %v2008 = vunpack.c.l.b16 %v1393
    %v2009 = vunpack.c.h.b16 %v1393
    %v2010 = vunpack.c.l.b16 %v1394
    %v2011 = vunpack.c.h.b16 %v1394
    %v2012 = vunpack.c.l.b16 %v1395
    %v2013 = vunpack.c.h.b16 %v1395
    %v2014 = vunpack.c.l.b16 %v1396
    %v2015 = vunpack.c.h.b16 %v1396
    %v2016 = vunpack.c.l.b16 %v1397
    %v2017 = vunpack.c.h.b16 %v1397
    %v2018 = vunpack.c.l.b16 %v1398
    %v2019 = vunpack.c.h.b16 %v1398
    %v2020 = vunpack.c.l.b16 %v1399
    %v2021 = vunpack.c.h.b16 %v1399
    %v2022 = vunpack.c.l.b16 %v1400
    %v2023 = vunpack.c.h.b16 %v1400
    %v2024 = vunpack.c.l.b16 %v1401
    %v2025 = vunpack.c.h.b16 %v1401
    %v2026 = vunpack.c.l.b16 %v1402
    %v2027 = vunpack.c.h.b16 %v1402
    %v2028 = vunpack.c.l.b16 %v1403
    %v2029 = vunpack.c.h.b16 %v1403
    %v2030 = vunpack.c.l.b16 %v1404
    %v2031 = vunpack.c.h.b16 %v1404
    %v2032 = vunpack.c.l.b16 %v1405
    %v2033 = vunpack.c.h.b16 %v1405
    %v2034 = vunpack.c.l.b16 %v1406
    %v2035 = vunpack.c.h.b16 %v1406
    %v2036 = vunpack.c.l.b16 %v1407
    %v2037 = vunpack.c.h.b16 %v1407
    %v2038 = vunpack.c.l.b16 %v1408
    %v2039 = vunpack.c.h.b16 %v1408
    %v2040 = vunpack.c.l.b16 %v1409
    %v2041 = vunpack.c.h.b16 %v1409
    %v2042 = vunpack.c.l.b16 %v1410
    %v2043 = vunpack.c.h.b16 %v1410
    %v2044 = vunpack.c.l.b16 %v1411
    %v2045 = vunpack.c.h.b16 %v1411
    %v2046 = vunpack.c.l.b16 %v1412
    %v2047 = vunpack.c.h.b16 %v1412
    %v2048 = vunpack.c.l.b16 %v1413
    %v2049 = vunpack.c.h.b16 %v1413
    %v2050 = vunpack.c.l.b16 %v1414
    %v2051 = vunpack.c.h.b16 %v1414
    %v2052 = vunpack.c.l.b16 %v1415
    %v2053 = vunpack.c.h.b16 %v1415
    %v2054 = vunpack.c.l.b16 %v1416
    %v2055 = vunpack.c.h.b16 %v1416
    %v2056 = vunpack.c.l.b16 %v1417
    %v2057 = vunpack.c.h.b16 %v1417
    %v2058 = vunpack.c.l.b16 %v1418
    %v2059 = vunpack.c.h.b16 %v1418
    %v2060 = vunpack.c.l.b16 %v1419
    %v2061 = vunpack.c.h.b16 %v1419
    %v2062 = vunpack.c.l.b16 %v1420
    %v2063 = vunpack.c.h.b16 %v1420
    %v2064 = vunpack.c.l.b16 %v1421
    %v2065 = vunpack.c.h.b16 %v1421
    %v2066 = vunpack.c.l.b16 %v1422
    %v2067 = vunpack.c.h.b16 %v1422
    %v2068 = vunpack.c.l.b16 %v1423
    %v2069 = vunpack.c.h.b16 %v1423
    %v2070 = vunpack.c.l.b16 %v1424
    %v2071 = vunpack.c.h.b16 %v1424
    %v2072 = vunpack.c.l.b16 %v1425
    %v2073 = vunpack.c.h.b16 %v1425
    %v2074 = vunpack.c.l.b16 %v1426
    %v2075 = vunpack.c.h.b16 %v1426
    %v2076 = vunpack.c.l.b16 %v1427
    %v2077 = vunpack.c.h.b16 %v1427
    %v2078 = vunpack.c.l.b16 %v1428
    %v2079 = vunpack.c.h.b16 %v1428
    %v2080 = vunpack.c.l.b16 %v1429
    %v2081 = vunpack.c.h.b16 %v1429
    %v2082 = vunpack.c.l.b16 %v1430
    %v2083 = vunpack.c.h.b16 %v1430
    %v2084 = vunpack.c.l.b16 %v1431
    %v2085 = vunpack.c.h.b16 %v1431
    %v2086 = vunpack.c.l.b16 %v1432
    %v2087 = vunpack.c.h.b16 %v1432
    %v2088 = vunpack.c.l.b16 %v1433
    %v2089 = vunpack.c.h.b16 %v1433
    %v2090 = vunpack.c.l.b16 %v1434
    %v2091 = vunpack.c.h.b16 %v1434
    %v2092 = vunpack.c.l.b16 %v1435
    %v2093 = vunpack.c.h.b16 %v1435
    %v2094 = vunpack.c.l.b16 %v1436
    %v2095 = vunpack.c.h.b16 %v1436
    %v2096 = vunpack.c.l.b16 %v1437
    %v2097 = vunpack.c.h.b16 %v1437
    %v2098 = vunpack.c.l.b16 %v1438
    %v2099 = vunpack.c.h.b16 %v1438
    %v2100 = vunpack.c.l.b16 %v1439
    %v2101 = vunpack.c.h.b16 %v1439
    %v2102 = vunpack.c.l.b16 %v1440
    %v2103 = vunpack.c.h.b16 %v1440
    %v2104 = vunpack.c.l.b16 %v1441
    %v2105 = vunpack.c.h.b16 %v1441
    %v2106 = vunpack.c.l.b16 %v1442
    %v2107 = vunpack.c.h.b16 %v1442
    %v2108 = vunpack.c.l.b16 %v1443
    %v2109 = vunpack.c.h.b16 %v1443
    %v2110 = vunpack.c.l.b16 %v1444
    %v2111 = vunpack.c.h.b16 %v1444
    %v2112 = vunpack.c.l.b16 %v1445
    %v2113 = vunpack.c.h.b16 %v1445
    %v2114 = vunpack.c.l.b16 %v1446
    %v2115 = vunpack.c.h.b16 %v1446
    %v2116 = vunpack.c.l.b16 %v1447
    %v2117 = vunpack.c.h.b16 %v1447
    %v2118 = vunpack.c.l.b16 %v1448
    %v2119 = vunpack.c.h.b16 %v1448
    %v2120 = vunpack.c.l.b16 %v1449
    %v2121 = vunpack.c.h.b16 %v1449
    %v2122 = vunpack.c.l.b16 %v1450
    %v2123 = vunpack.c.h.b16 %v1450
    %v2124 = vunpack.c.l.b16 %v1451
    %v2125 = vunpack.c.h.b16 %v1451
    %v2126 = vunpack.c.l.b16 %v1452
    %v2127 = vunpack.c.h.b16 %v1452
    %v2128 = vunpack.c.l.b16 %v1453
    %v2129 = vunpack.c.h.b16 %v1453
    %v2130 = vunpack.c.l.b16 %v1454
    %v2131 = vunpack.c.h.b16 %v1454
    %v2132 = vunpack.c.l.b16 %v1455
    %v2133 = vunpack.c.h.b16 %v1455
    %v2134 = vunpack.c.l.b16 %v1456
    %v2135 = vunpack.c.h.b16 %v1456
    %v2136 = vunpack.c.l.b16 %v1457
    %v2137 = vunpack.c.h.b16 %v1457
    %v2138 = vunpack.c.l.b16 %v1458
    %v2139 = vunpack.c.h.b16 %v1458
    %v2140 = vunpack.c.l.b16 %v1459
    %v2141 = vunpack.c.h.b16 %v1459
    %v2142 = vunpack.c.l.b16 %v1460
    %v2143 = vunpack.c.h.b16 %v1460
    %v2144 = vunpack.c.l.b16 %v1461
    %v2145 = vunpack.c.h.b16 %v1461
    %v2146 = vunpack.c.l.b16 %v1462
    %v2147 = vunpack.c.h.b16 %v1462
    %v2148 = vunpack.c.l.b16 %v1463
    %v2149 = vunpack.c.h.b16 %v1463
    %v2150 = vunpack.c.l.b16 %v1464
    %v2151 = vunpack.c.h.b16 %v1464
    %v2152 = vunpack.c.l.b16 %v1465
    %v2153 = vunpack.c.h.b16 %v1465
    %v2154 = vunpack.c.l.b16 %v1466
    %v2155 = vunpack.c.h.b16 %v1466
    %v2156 = vunpack.c.l.b16 %v1467
    %v2157 = vunpack.c.h.b16 %v1467
    %v2158 = vunpack.c.l.b16 %v1468
    %v2159 = vunpack.c.h.b16 %v1468
    %v2160 = vunpack.c.l.b16 %v1469
    %v2161 = vunpack.c.h.b16 %v1469
    %v2162 = vunpack.c.l.b16 %v1470
    %v2163 = vunpack.c.h.b16 %v1470
    %v2164 = vunpack.c.l.b16 %v1471
    %v2165 = vunpack.c.h.b16 %v1471
    %v2166 = vunpack.c.l.b16 %v1472
    %v2167 = vunpack.c.h.b16 %v1472
    %v2168 = vunpack.c.l.b16 %v1473
    %v2169 = vunpack.c.h.b16 %v1473
    %v2170 = vunpack.c.l.b16 %v1474
    %v2171 = vunpack.c.h.b16 %v1474
    %v2172 = vunpack.c.l.b16 %v1475
    %v2173 = vunpack.c.h.b16 %v1475
    %v2174 = vunpack.c.l.b16 %v1476
    %v2175 = vunpack.c.h.b16 %v1476
    %v2176 = vunpack.c.l.b16 %v1477
    %v2177 = vunpack.c.h.b16 %v1477
    %v2178 = vunpack.c.l.b16 %v1478
    %v2179 = vunpack.c.h.b16 %v1478
    %v2180 = vunpack.c.l.b16 %v1479
    %v2181 = vunpack.c.h.b16 %v1479
    %v2182 = vunpack.c.l.b16 %v1480
    %v2183 = vunpack.c.h.b16 %v1480
    %v2184 = vunpack.c.l.b16 %v1481
    %v2185 = vunpack.c.h.b16 %v1481
    %v2186 = vunpack.c.l.b16 %v1482
    %v2187 = vunpack.c.h.b16 %v1482
    %v2188 = vunpack.c.l.b16 %v1483
    %v2189 = vunpack.c.h.b16 %v1483
    %v2190 = vunpack.c.l.b16 %v1484
    %v2191 = vunpack.c.h.b16 %v1484
    %v2192 = vunpack.c.l.b16 %v1485
    %v2193 = vunpack.c.h.b16 %v1485
    %v2194 = vunpack.c.l.b16 %v1486
    %v2195 = vunpack.c.h.b16 %v1486
    %v2196 = vunpack.c.l.b16 %v1487
    %v2197 = vunpack.c.h.b16 %v1487
    %v2198 = vunpack.c.l.b16 %v1488
    %v2199 = vunpack.c.h.b16 %v1488
    %v2200 = vunpack.c.l.b16 %v1489
    %v2201 = vunpack.c.h.b16 %v1489
    %v2202 = vunpack.c.l.b16 %v1490
    %v2203 = vunpack.c.h.b16 %v1490
    %v2204 = vunpack.c.l.b16 %v1491
    %v2205 = vunpack.c.h.b16 %v1491
    %v2206 = vunpack.c.l.b16 %v1492
    %v2207 = vunpack.c.h.b16 %v1492
    %v2208 = vunpack.c.l.b16 %v1493
    %v2209 = vunpack.c.h.b16 %v1493
    %v2210 = vunpack.c.l.b16 %v1494
    %v2211 = vunpack.c.h.b16 %v1494
    %v2212 = vunpack.c.l.b16 %v1495
    %v2213 = vunpack.c.h.b16 %v1495
    %v2214 = vunpack.c.l.b16 %v1496
    %v2215 = vunpack.c.h.b16 %v1496
    %v2216 = vunpack.c.l.b16 %v1497
    %v2217 = vunpack.c.h.b16 %v1497
    %v2218 = vunpack.c.l.b16 %v1498
    %v2219 = vunpack.c.h.b16 %v1498
    %v2220 = vunpack.c.l.b16 %v1499
    %v2221 = vunpack.c.h.b16 %v1499
    %v2222 = vunpack.c.l.b16 %v1500
    %v2223 = vunpack.c.h.b16 %v1500
    %v2224 = vunpack.c.l.b16 %v1501
    %v2225 = vunpack.c.h.b16 %v1501
    %v2226 = vunpack.c.l.b16 %v1502
    %v2227 = vunpack.c.h.b16 %v1502
    %v2228 = vunpack.c.l.b16 %v1503
    %v2229 = vunpack.c.h.b16 %v1503
    %v2230 = vunpack.c.l.b16 %v1504
    %v2231 = vunpack.c.h.b16 %v1504
    %v2232 = vunpack.c.l.b16 %v1505
    %v2233 = vunpack.c.h.b16 %v1505
    %v2234 = vunpack.c.l.b16 %v1506
    %v2235 = vunpack.c.h.b16 %v1506
    %v2236 = vunpack.c.l.b16 %v1507
    %v2237 = vunpack.c.h.b16 %v1507
    %v2238 = vunpack.c.l.b16 %v1508
    %v2239 = vunpack.c.h.b16 %v1508
    %v2240 = vunpack.c.l.b16 %v1509
    %v2241 = vunpack.c.h.b16 %v1509
    %v2242 = vunpack.c.l.b16 %v1510
    %v2243 = vunpack.c.h.b16 %v1510
    %v2244 = vunpack.c.l.b16 %v1511
    %v2245 = vunpack.c.h.b16 %v1511
    %v2246 = vunpack.c.l.b16 %v1512
    %v2247 = vunpack.c.h.b16 %v1512
    %v2248 = vunpack.c.l.b16 %v1513
    %v2249 = vunpack.c.h.b16 %v1513
    %v2250 = vunpack.c.l.b16 %v1514
    %v2251 = vunpack.c.h.b16 %v1514
    %v2252 = vunpack.c.l.b16 %v1515
    %v2253 = vunpack.c.h.b16 %v1515
    %v2254 = vunpack.c.l.b16 %v1516
    %v2255 = vunpack.c.h.b16 %v1516
    %v2256 = vunpack.c.l.b16 %v1517
    %v2257 = vunpack.c.h.b16 %v1517
    %v2258 = vunpack.c.l.b16 %v1518
    %v2259 = vunpack.c.h.b16 %v1518
    %v2260 = vunpack.c.l.b16 %v1519
    %v2261 = vunpack.c.h.b16 %v1519
    %v2262 = vunpack.c.l.b16 %v1520
    %v2263 = vunpack.c.h.b16 %v1520
    %v2264 = vunpack.c.l.b16 %v1521
    %v2265 = vunpack.c.h.b16 %v1521
    %v2266 = vunpack.c.l.b16 %v1522
    %v2267 = vunpack.c.h.b16 %v1522
    %v2268 = vunpack.c.l.b16 %v1523
    %v2269 = vunpack.c.h.b16 %v1523
    %v2270 = vunpack.c.l.b16 %v1524
    %v2271 = vunpack.c.h.b16 %v1524
    %v2272 = vunpack.c.l.b16 %v1525
    %v2273 = vunpack.c.h.b16 %v1525
    %v2274 = vunpack.c.l.b16 %v1526
    %v2275 = vunpack.c.h.b16 %v1526
    %v2276 = vunpack.c.l.b16 %v1527
    %v2277 = vunpack.c.h.b16 %v1527
    %v2278 = vunpack.c.l.b16 %v1528
    %v2279 = vunpack.c.h.b16 %v1528
    %v2280 = vunpack.c.l.b16 %v1529
    %v2281 = vunpack.c.h.b16 %v1529
    %v2282 = vunpack.c.l.b16 %v1530
    %v2283 = vunpack.c.h.b16 %v1530
    %v2284 = vunpack.c.l.b16 %v1531
    %v2285 = vunpack.c.h.b16 %v1531
    %v2286 = vunpack.c.l.b16 %v1532
    %v2287 = vunpack.c.h.b16 %v1532
    %v2288 = vunpack.c.l.b16 %v1533
    %v2289 = vunpack.c.h.b16 %v1533
    %v2290 = vunpack.c.l.b16 %v1534
    %v2291 = vunpack.c.h.b16 %v1534
    %v2292 = vunpack.c.l.b16 %v1535
    %v2293 = vunpack.c.h.b16 %v1535
    %v2294 = vunpack.c.l.b16 %v1536
    %v2295 = vunpack.c.h.b16 %v1536
    %v2296 = vunpack.c.l.b16 %v1537
    %v2297 = vunpack.c.h.b16 %v1537
    %v2298 = vunpack.c.l.b16 %v1538
    %v2299 = vunpack.c.h.b16 %v1538
    %v2300 = vunpack.c.l.b16 %v1539
    %v2301 = vunpack.c.h.b16 %v1539
    %v2302 = vunpack.c.l.b16 %v1540
    %v2303 = vunpack.c.h.b16 %v1540
    %v2304 = vunpack.c.l.b16 %v1541
    %v2305 = vunpack.c.h.b16 %v1541
    %v2306 = vunpack.c.l.b16 %v1542
    %v2307 = vunpack.c.h.b16 %v1542
    %v2308 = vunpack.c.l.b16 %v1543
    %v2309 = vunpack.c.h.b16 %v1543
    %v2310 = vunpack.c.l.b16 %v1544
    %v2311 = vunpack.c.h.b16 %v1544
    %v2312 = vunpack.c.l.b16 %v1545
    %v2313 = vunpack.c.h.b16 %v1545
    %v2314 = vunpack.c.l.b16 %v1546
    %v2315 = vunpack.c.h.b16 %v1546
    %v2316 = vunpack.c.l.b16 %v1547
    %v2317 = vunpack.c.h.b16 %v1547
    %v2318 = vunpack.c.l.b16 %v1548
    %v2319 = vunpack.c.h.b16 %v1548
    %v2320 = vunpack.c.l.b16 %v1549
    %v2321 = vunpack.c.h.b16 %v1549
    %v2322 = vunpack.c.l.b16 %v1550
    %v2323 = vunpack.c.h.b16 %v1550
    %v2324 = vunpack.c.l.b16 %v1551
    %v2325 = vunpack.c.h.b16 %v1551
    %v2326 = vunpack.c.l.b16 %v1552
    %v2327 = vunpack.c.h.b16 %v1552
    %v2328 = vunpack.c.l.b16 %v1553
    %v2329 = vunpack.c.h.b16 %v1553
    %v2330 = vunpack.c.l.b16 %v1554
    %v2331 = vunpack.c.h.b16 %v1554
    %v2332 = vunpack.c.l.b16 %v1555
    %v2333 = vunpack.c.h.b16 %v1555
    %v2334 = vunpack.c.l.b16 %v1556
    %v2335 = vunpack.c.h.b16 %v1556
    %v2336 = vunpack.c.l.b16 %v1557
    %v2337 = vunpack.c.h.b16 %v1557
    %v2338 = vunpack.c.l.b16 %v1558
    %v2339 = vunpack.c.h.b16 %v1558
    %v2340 = vunpack.c.l.b16 %v1559
    %v2341 = vunpack.c.h.b16 %v1559
    %v2342 = vunpack.c.l.b16 %v1560
    %v2343 = vunpack.c.h.b16 %v1560
    %v2344 = vunpack.c.l.b16 %v1561
    %v2345 = vunpack.c.h.b16 %v1561
    %v2346 = vunpack.c.l.b16 %v1562
    %v2347 = vunpack.c.h.b16 %v1562
    %v2348 = vunpack.c.l.b16 %v1563
    %v2349 = vunpack.c.h.b16 %v1563
    %v2350 = vpack.c.b16 %v1846, %v1838
    %v2351 = vpack.c.b16 %v1847, %v1839
    %v2352 = vpack.c.b16 %v1848, %v1840
    %v2353 = vpack.c.b16 %v1849, %v1841
    %v2354 = vpack.c.b16 %v1850, %v1842
    %v2355 = vpack.c.b16 %v1851, %v1843
    %v2356 = vpack.c.b16 %v1852, %v1844
    %v2357 = vpack.c.b16 %v1853, %v1845
    %v2358 = vpack.c.b16 %v1862, %v1854
    %v2359 = vpack.c.b16 %v1863, %v1855
    %v2360 = vpack.c.b16 %v1864, %v1856
    %v2361 = vpack.c.b16 %v1865, %v1857
    %v2362 = vpack.c.b16 %v1866, %v1858
    %v2363 = vpack.c.b16 %v1867, %v1859
    %v2364 = vpack.c.b16 %v1868, %v1860
    %v2365 = vpack.c.b16 %v1869, %v1861
    %v2366 = vpack.c.b16 %v1878, %v1870
    %v2367 = vpack.c.b16 %v1879, %v1871
    %v2368 = vpack.c.b16 %v1880, %v1872
    %v2369 = vpack.c.b16 %v1881, %v1873
    %v2370 = vpack.c.b16 %v1882, %v1874
    %v2371 = vpack.c.b16 %v1883, %v1875
    %v2372 = vpack.c.b16 %v1884, %v1876
    %v2373 = vpack.c.b16 %v1885, %v1877
    %v2374 = vpack.c.b16 %v1894, %v1886
    %v2375 = vpack.c.b16 %v1895, %v1887
    %v2376 = vpack.c.b16 %v1896, %v1888
    %v2377 = vpack.c.b16 %v1897, %v1889
    %v2378 = vpack.c.b16 %v1898, %v1890
    %v2379 = vpack.c.b16 %v1899, %v1891
    %v2380 = vpack.c.b16 %v1900, %v1892
    %v2381 = vpack.c.b16 %v1901, %v1893
    %v2382 = vpack.c.b16 %v1910, %v1902
    %v2383 = vpack.c.b16 %v1911, %v1903
    %v2384 = vpack.c.b16 %v1912, %v1904
    %v2385 = vpack.c.b16 %v1913, %v1905
    %v2386 = vpack.c.b16 %v1914, %v1906
    %v2387 = vpack.c.b16 %v1915, %v1907
    %v2388 = vpack.c.b16 %v1916, %v1908
    %v2389 = vpack.c.b16 %v1917, %v1909
    %v2390 = vpack.c.b16 %v1926, %v1918
    %v2391 = vpack.c.b16 %v1927, %v1919
    %v2392 = vpack.c.b16 %v1928, %v1920
    %v2393 = vpack.c.b16 %v1929, %v1921
    %v2394 = vpack.c.b16 %v1930, %v1922
    %v2395 = vpack.c.b16 %v1931, %v1923
    %v2396 = vpack.c.b16 %v1932, %v1924
    %v2397 = vpack.c.b16 %v1933, %v1925
    %v2398 = vpack.c.b16 %v1942, %v1934
    %v2399 = vpack.c.b16 %v1943, %v1935
    %v2400 = vpack.c.b16 %v1944, %v1936
    %v2401 = vpack.c.b16 %v1945, %v1937
    %v2402 = vpack.c.b16 %v1946, %v1938
    %v2403 = vpack.c.b16 %v1947, %v1939
    %v2404 = vpack.c.b16 %v1948, %v1940
    %v2405 = vpack.c.b16 %v1949, %v1941
    %v2406 = vpack.c.b16 %v1958, %v1950
    %v2407 = vpack.c.b16 %v1959, %v1951
    %v2408 = vpack.c.b16 %v1960, %v1952
    %v2409 = vpack.c.b16 %v1961, %v1953
    %v2410 = vpack.c.b16 %v1962, %v1954
    %v2411 = vpack.c.b16 %v1963, %v1955
    %v2412 = vpack.c.b16 %v1964, %v1956
    %v2413 = vpack.c.b16 %v1965, %v1957
    %v2414 = vpack.c.b16 %v1974, %v1966
    %v2415 = vpack.c.b16 %v1975, %v1967
    %v2416 = vpack.c.b16 %v1976, %v1968
    %v2417 = vpack.c.b16 %v1977, %v1969
    %v2418 = vpack.c.b16 %v1978, %v1970
    %v2419 = vpack.c.b16 %v1979, %v1971
    %v2420 = vpack.c.b16 %v1980, %v1972
    %v2421 = vpack.c.b16 %v1981, %v1973
    %v2422 = vpack.c.b16 %v1990, %v1982
    %v2423 = vpack.c.b16 %v1991, %v1983
    %v2424 = vpack.c.b16 %v1992, %v1984
    %v2425 = vpack.c.b16 %v1993, %v1985
    %v2426 = vpack.c.b16 %v1994, %v1986
    %v2427 = vpack.c.b16 %v1995, %v1987
    %v2428 = vpack.c.b16 %v1996, %v1988
    %v2429 = vpack.c.b16 %v1997, %v1989
    %v2430 = vpack.c.b16 %v2006, %v1998
    %v2431 = vpack.c.b16 %v2007, %v1999
    %v2432 = vpack.c.b16 %v2008, %v2000
    %v2433 = vpack.c.b16 %v2009, %v2001
    %v2434 = vpack.c.b16 %v2010, %v2002
    %v2435 = vpack.c.b16 %v2011, %v2003
    %v2436 = vpack.c.b16 %v2012, %v2004
    %v2437 = vpack.c.b16 %v2013, %v2005
    %v2438 = vpack.c.b16 %v2022, %v2014
    %v2439 = vpack.c.b16 %v2023, %v2015
    %v2440 = vpack.c.b16 %v2024, %v2016
    %v2441 = vpack.c.b16 %v2025, %v2017
    %v2442 = vpack.c.b16 %v2026, %v2018
    %v2443 = vpack.c.b16 %v2027, %v2019
    %v2444 = vpack.c.b16 %v2028, %v2020
    %v2445 = vpack.c.b16 %v2029, %v2021
    %v2446 = vpack.c.b16 %v2038, %v2030
    %v2447 = vpack.c.b16 %v2039, %v2031
    %v2448 = vpack.c.b16 %v2040, %v2032
    %v2449 = vpack.c.b16 %v2041, %v2033
    %v2450 = vpack.c.b16 %v2042, %v2034
    %v2451 = vpack.c.b16 %v2043, %v2035
    %v2452 = vpack.c.b16 %v2044, %v2036
    %v2453 = vpack.c.b16 %v2045, %v2037
    %v2454 = vpack.c.b16 %v2054, %v2046
    %v2455 = vpack.c.b16 %v2055, %v2047
    %v2456 = vpack.c.b16 %v2056, %v2048
    %v2457 = vpack.c.b16 %v2057, %v2049
    %v2458 = vpack.c.b16 %v2058, %v2050
    %v2459 = vpack.c.b16 %v2059, %v2051
    %v2460 = vpack.c.b16 %v2060, %v2052
    %v2461 = vpack.c.b16 %v2061, %v2053
    %v2462 = vpack.c.b16 %v2070, %v2062
    %v2463 = vpack.c.b16 %v2071, %v2063
    %v2464 = vpack.c.b16 %v2072, %v2064
    %v2465 = vpack.c.b16 %v2073, %v2065
    %v2466 = vpack.c.b16 %v2074, %v2066
    %v2467 = vpack.c.b16 %v2075, %v2067
    %v2468 = vpack.c.b16 %v2076, %v2068
    %v2469 = vpack.c.b16 %v2077, %v2069
    %v2470 = vpack.c.b16 %v2086, %v2078
    %v2471 = vpack.c.b16 %v2087, %v2079
    %v2472 = vpack.c.b16 %v2088, %v2080
    %v2473 = vpack.c.b16 %v2089, %v2081
    %v2474 = vpack.c.b16 %v2090, %v2082
    %v2475 = vpack.c.b16 %v2091, %v2083
    %v2476 = vpack.c.b16 %v2092, %v2084
    %v2477 = vpack.c.b16 %v2093, %v2085
    %v2478 = vpack.c.b16 %v2102, %v2094
    %v2479 = vpack.c.b16 %v2103, %v2095
    %v2480 = vpack.c.b16 %v2104, %v2096
    %v2481 = vpack.c.b16 %v2105, %v2097
    %v2482 = vpack.c.b16 %v2106, %v2098
    %v2483 = vpack.c.b16 %v2107, %v2099
    %v2484 = vpack.c.b16 %v2108, %v2100
    %v2485 = vpack.c.b16 %v2109, %v2101
    %v2486 = vpack.c.b16 %v2118, %v2110
    %v2487 = vpack.c.b16 %v2119, %v2111
    %v2488 = vpack.c.b16 %v2120, %v2112
    %v2489 = vpack.c.b16 %v2121, %v2113
    %v2490 = vpack.c.b16 %v2122, %v2114
    %v2491 = vpack.c.b16 %v2123, %v2115
    %v2492 = vpack.c.b16 %v2124, %v2116
    %v2493 = vpack.c.b16 %v2125, %v2117
    %v2494 = vpack.c.b16 %v2134, %v2126
    %v2495 = vpack.c.b16 %v2135, %v2127
    %v2496 = vpack.c.b16 %v2136, %v2128
    %v2497 = vpack.c.b16 %v2137, %v2129
    %v2498 = vpack.c.b16 %v2138, %v2130
    %v2499 = vpack.c.b16 %v2139, %v2131
    %v2500 = vpack.c.b16 %v2140, %v2132
    %v2501 = vpack.c.b16 %v2141, %v2133
    %v2502 = vpack.c.b16 %v2150, %v2142
    %v2503 = vpack.c.b16 %v2151, %v2143
    %v2504 = vpack.c.b16 %v2152, %v2144
    %v2505 = vpack.c.b16 %v2153, %v2145
    %v2506 = vpack.c.b16 %v2154, %v2146
    %v2507 = vpack.c.b16 %v2155, %v2147
    %v2508 = vpack.c.b16 %v2156, %v2148
    %v2509 = vpack.c.b16 %v2157, %v2149
    %v2510 = vpack.c.b16 %v2166, %v2158
    %v2511 = vpack.c.b16 %v2167, %v2159
    %v2512 = vpack.c.b16 %v2168, %v2160
    %v2513 = vpack.c.b16 %v2169, %v2161
    %v2514 = vpack.c.b16 %v2170, %v2162
    %v2515 = vpack.c.b16 %v2171, %v2163
    %v2516 = vpack.c.b16 %v2172, %v2164
    %v2517 = vpack.c.b16 %v2173, %v2165
    %v2518 = vpack.c.b16 %v2182, %v2174
    %v2519 = vpack.c.b16 %v2183, %v2175
    %v2520 = vpack.c.b16 %v2184, %v2176
    %v2521 = vpack.c.b16 %v2185, %v2177
    %v2522 = vpack.c.b16 %v2186, %v2178
    %v2523 = vpack.c.b16 %v2187, %v2179
    %v2524 = vpack.c.b16 %v2188, %v2180
    %v2525 = vpack.c.b16 %v2189, %v2181
    %v2526 = vpack.c.b16 %v2198, %v2190
    %v2527 = vpack.c.b16 %v2199, %v2191
    %v2528 = vpack.c.b16 %v2200, %v2192
    %v2529 = vpack.c.b16 %v2201, %v2193
    %v2530 = vpack.c.b16 %v2202, %v2194
    %v2531 = vpack.c.b16 %v2203, %v2195
    %v2532 = vpack.c.b16 %v2204, %v2196
    %v2533 = vpack.c.b16 %v2205, %v2197
    %v2534 = vpack.c.b16 %v2214, %v2206
    %v2535 = vpack.c.b16 %v2215, %v2207
    %v2536 = vpack.c.b16 %v2216, %v2208
    %v2537 = vpack.c.b16 %v2217, %v2209
    %v2538 = vpack.c.b16 %v2218, %v2210
    %v2539 = vpack.c.b16 %v2219, %v2211
    %v2540 = vpack.c.b16 %v2220, %v2212
    %v2541 = vpack.c.b16 %v2221, %v2213
    %v2542 = vpack.c.b16 %v2230, %v2222
    %v2543 = vpack.c.b16 %v2231, %v2223
    %v2544 = vpack.c.b16 %v2232, %v2224
    %v2545 = vpack.c.b16 %v2233, %v2225
    %v2546 = vpack.c.b16 %v2234, %v2226
    %v2547 = vpack.c.b16 %v2235, %v2227
    %v2548 = vpack.c.b16 %v2236, %v2228
    %v2549 = vpack.c.b16 %v2237, %v2229
    %v2550 = vpack.c.b16 %v2246, %v2238
    %v2551 = vpack.c.b16 %v2247, %v2239
    %v2552 = vpack.c.b16 %v2248, %v2240
    %v2553 = vpack.c.b16 %v2249, %v2241
    %v2554 = vpack.c.b16 %v2250, %v2242
    %v2555 = vpack.c.b16 %v2251, %v2243
    %v2556 = vpack.c.b16 %v2252, %v2244
    %v2557 = vpack.c.b16 %v2253, %v2245
    %v2558 = vpack.c.b16 %v2262, %v2254
    %v2559 = vpack.c.b16 %v2263, %v2255
    %v2560 = vpack.c.b16 %v2264, %v2256
    %v2561 = vpack.c.b16 %v2265, %v2257
    %v2562 = vpack.c.b16 %v2266, %v2258
    %v2563 = vpack.c.b16 %v2267, %v2259
    %v2564 = vpack.c.b16 %v2268, %v2260
    %v2565 = vpack.c.b16 %v2269, %v2261
    %v2566 = vpack.c.b16 %v2278, %v2270
    %v2567 = vpack.c.b16 %v2279, %v2271
    %v2568 = vpack.c.b16 %v2280, %v2272
    %v2569 = vpack.c.b16 %v2281, %v2273
    %v2570 = vpack.c.b16 %v2282, %v2274
    %v2571 = vpack.c.b16 %v2283, %v2275
    %v2572 = vpack.c.b16 %v2284, %v2276
    %v2573 = vpack.c.b16 %v2285, %v2277
    %v2574 = vpack.c.b16 %v2294, %v2286
    %v2575 = vpack.c.b16 %v2295, %v2287
    %v2576 = vpack.c.b16 %v2296, %v2288
    %v2577 = vpack.c.b16 %v2297, %v2289
    %v2578 = vpack.c.b16 %v2298, %v2290
    %v2579 = vpack.c.b16 %v2299, %v2291
    %v2580 = vpack.c.b16 %v2300, %v2292
    %v2581 = vpack.c.b16 %v2301, %v2293
    %v2582 = vpack.c.b16 %v2310, %v2302
    %v2583 = vpack.c.b16 %v2311, %v2303
    %v2584 = vpack.c.b16 %v2312, %v2304
    %v2585 = vpack.c.b16 %v2313, %v2305
    %v2586 = vpack.c.b16 %v2314, %v2306
    %v2587 = vpack.c.b16 %v2315, %v2307
    %v2588 = vpack.c.b16 %v2316, %v2308
    %v2589 = vpack.c.b16 %v2317, %v2309
    %v2590 = vpack.c.b16 %v2326, %v2318
    %v2591 = vpack.c.b16 %v2327, %v2319
    %v2592 = vpack.c.b16 %v2328, %v2320
    %v2593 = vpack.c.b16 %v2329, %v2321
    %v2594 = vpack.c.b16 %v2330, %v2322
    %v2595 = vpack.c.b16 %v2331, %v2323
    %v2596 = vpack.c.b16 %v2332, %v2324
    %v2597 = vpack.c.b16 %v2333, %v2325
    %v2598 = vpack.c.b16 %v2342, %v2334
    %v2599 = vpack.c.b16 %v2343, %v2335
    %v2600 = vpack.c.b16 %v2344, %v2336
    %v2601 = vpack.c.b16 %v2345, %v2337
    %v2602 = vpack.c.b16 %v2346, %v2338
    %v2603 = vpack.c.b16 %v2347, %v2339
    %v2604 = vpack.c.b16 %v2348, %v2340
    %v2605 = vpack.c.b16 %v2349, %v2341
    %2862 = vmatpush.bf16.msra.mxu0 %v2406
    %2863 = vmatpush.bf16.msra.mxu0 %v2398
    %2864 = vmatpush.bf16.msra.mxu0 %v2390
    %2865 = vmatpush.bf16.msra.mxu0 %v2382
    %2866 = vmatpush.bf16.msra.mxu0 %v2374
    %2867 = vmatpush.bf16.msra.mxu0 %v2366
    %2868 = vmatpush.bf16.msra.mxu0 %v2358
    %2869 = vmatpush.bf16.msra.mxu0 %v2350
    %2870 = vmatmul.bf16.gmra.mxu0 %v1304
    %v2871 = vpop.f32.mrf.mxu0
    %v2872 = vadd.f32 %v1566, %v2871
    %v2873 = vpop.f32.mrf.mxu0
    %v2874 = vadd.f32 %v1566, %v2873
    %2875 = vdwg.mxu0
    %2876 = vmatpush.bf16.msra.mxu0 %v2470
    %2877 = vmatpush.bf16.msra.mxu0 %v2462
    %2878 = vmatpush.bf16.msra.mxu0 %v2454
    %2879 = vmatpush.bf16.msra.mxu0 %v2446
    %2880 = vmatpush.bf16.msra.mxu0 %v2438
    %2881 = vmatpush.bf16.msra.mxu0 %v2430
    %2882 = vmatpush.bf16.msra.mxu0 %v2422
    %2883 = vmatpush.bf16.msra.mxu0 %v2414
    %2884 = vmatmul.bf16.gmra.mxu0 %v1305
    %v2885 = vpop.f32.mrf.mxu0
    %v2886 = vadd.f32 %v2872, %v2885
    %v2887 = vpop.f32.mrf.mxu0
    %v2888 = vadd.f32 %v2874, %v2887
    %2889 = vdwg.mxu0
    %2890 = vmatpush.bf16.msra.mxu0 %v2534
    %2891 = vmatpush.bf16.msra.mxu0 %v2526
    %2892 = vmatpush.bf16.msra.mxu0 %v2518
    %2893 = vmatpush.bf16.msra.mxu0 %v2510
    %2894 = vmatpush.bf16.msra.mxu0 %v2502
    %2895 = vmatpush.bf16.msra.mxu0 %v2494
    %2896 = vmatpush.bf16.msra.mxu0 %v2486
    %2897 = vmatpush.bf16.msra.mxu0 %v2478
    %2898 = vmatmul.bf16.gmra.mxu0 %v1306
    %v2899 = vpop.f32.mrf.mxu0
    %v2900 = vadd.f32 %v2886, %v2899
    %v2901 = vpop.f32.mrf.mxu0
    %v2902 = vadd.f32 %v2888, %v2901
    %2903 = vdwg.mxu0
    %2904 = vmatpush.bf16.msra.mxu0 %v2598
    %2905 = vmatpush.bf16.msra.mxu0 %v2590
    %2906 = vmatpush.bf16.msra.mxu0 %v2582
    %2907 = vmatpush.bf16.msra.mxu0 %v2574
    %2908 = vmatpush.bf16.msra.mxu0 %v2566
    %2909 = vmatpush.bf16.msra.mxu0 %v2558
    %2910 = vmatpush.bf16.msra.mxu0 %v2550
    %2911 = vmatpush.bf16.msra.mxu0 %v2542
    %2912 = vmatmul.bf16.gmra.mxu0 %v1307
    %v2913 = vpop.f32.mrf.mxu0
    %v2914 = vadd.f32 %v2900, %v2913
    %v2915 = vpop.f32.mrf.mxu0
    %v2916 = vadd.f32 %v2902, %v2915
    %2917 = vdwg.mxu0
    %2918 = vmatpush.bf16.msra.mxu0 %v2407
    %2919 = vmatpush.bf16.msra.mxu0 %v2399
    %2920 = vmatpush.bf16.msra.mxu0 %v2391
    %2921 = vmatpush.bf16.msra.mxu0 %v2383
    %2922 = vmatpush.bf16.msra.mxu0 %v2375
    %2923 = vmatpush.bf16.msra.mxu0 %v2367
    %2924 = vmatpush.bf16.msra.mxu0 %v2359
    %2925 = vmatpush.bf16.msra.mxu0 %v2351
    %2926 = vmatmul.bf16.gmra.mxu0 %v1304
    %v2927 = vpop.f32.mrf.mxu0
    %v2928 = vadd.f32 %v1567, %v2927
    %v2929 = vpop.f32.mrf.mxu0
    %v2930 = vadd.f32 %v1567, %v2929
    %2931 = vdwg.mxu0
    %2932 = vmatpush.bf16.msra.mxu0 %v2471
    %2933 = vmatpush.bf16.msra.mxu0 %v2463
    %2934 = vmatpush.bf16.msra.mxu0 %v2455
    %2935 = vmatpush.bf16.msra.mxu0 %v2447
    %2936 = vmatpush.bf16.msra.mxu0 %v2439
    %2937 = vmatpush.bf16.msra.mxu0 %v2431
    %2938 = vmatpush.bf16.msra.mxu0 %v2423
    %2939 = vmatpush.bf16.msra.mxu0 %v2415
    %2940 = vmatmul.bf16.gmra.mxu0 %v1305
    %v2941 = vpop.f32.mrf.mxu0
    %v2942 = vadd.f32 %v2928, %v2941
    %v2943 = vpop.f32.mrf.mxu0
    %v2944 = vadd.f32 %v2930, %v2943
    %2945 = vdwg.mxu0
    %2946 = vmatpush.bf16.msra.mxu0 %v2535
    %2947 = vmatpush.bf16.msra.mxu0 %v2527
    %2948 = vmatpush.bf16.msra.mxu0 %v2519
    %2949 = vmatpush.bf16.msra.mxu0 %v2511
    %2950 = vmatpush.bf16.msra.mxu0 %v2503
    %2951 = vmatpush.bf16.msra.mxu0 %v2495
    %2952 = vmatpush.bf16.msra.mxu0 %v2487
    %2953 = vmatpush.bf16.msra.mxu0 %v2479
    %2954 = vmatmul.bf16.gmra.mxu0 %v1306
    %v2955 = vpop.f32.mrf.mxu0
    %v2956 = vadd.f32 %v2942, %v2955
    %v2957 = vpop.f32.mrf.mxu0
    %v2958 = vadd.f32 %v2944, %v2957
    %2959 = vdwg.mxu0
    %2960 = vmatpush.bf16.msra.mxu0 %v2599
    %2961 = vmatpush.bf16.msra.mxu0 %v2591
    %2962 = vmatpush.bf16.msra.mxu0 %v2583
    %2963 = vmatpush.bf16.msra.mxu0 %v2575
    %2964 = vmatpush.bf16.msra.mxu0 %v2567
    %2965 = vmatpush.bf16.msra.mxu0 %v2559
    %2966 = vmatpush.bf16.msra.mxu0 %v2551
    %2967 = vmatpush.bf16.msra.mxu0 %v2543
    %2968 = vmatmul.bf16.gmra.mxu0 %v1307
    %v2969 = vpop.f32.mrf.mxu0
    %v2970 = vadd.f32 %v2956, %v2969
    %v2971 = vpop.f32.mrf.mxu0
    %v2972 = vadd.f32 %v2958, %v2971
    %2973 = vdwg.mxu0
    %2974 = vmatpush.bf16.msra.mxu0 %v2408
    %2975 = vmatpush.bf16.msra.mxu0 %v2400
    %2976 = vmatpush.bf16.msra.mxu0 %v2392
    %2977 = vmatpush.bf16.msra.mxu0 %v2384
    %2978 = vmatpush.bf16.msra.mxu0 %v2376
    %2979 = vmatpush.bf16.msra.mxu0 %v2368
    %2980 = vmatpush.bf16.msra.mxu0 %v2360
    %2981 = vmatpush.bf16.msra.mxu0 %v2352
    %2982 = vmatmul.bf16.gmra.mxu0 %v1304
    %v2983 = vpop.f32.mrf.mxu0
    %v2984 = vadd.f32 %v1568, %v2983
    %v2985 = vpop.f32.mrf.mxu0
    %v2986 = vadd.f32 %v1568, %v2985
    %2987 = vdwg.mxu0
    %2988 = vmatpush.bf16.msra.mxu0 %v2472
    %2989 = vmatpush.bf16.msra.mxu0 %v2464
    %2990 = vmatpush.bf16.msra.mxu0 %v2456
    %2991 = vmatpush.bf16.msra.mxu0 %v2448
    %2992 = vmatpush.bf16.msra.mxu0 %v2440
    %2993 = vmatpush.bf16.msra.mxu0 %v2432
    %2994 = vmatpush.bf16.msra.mxu0 %v2424
    %2995 = vmatpush.bf16.msra.mxu0 %v2416
    %2996 = vmatmul.bf16.gmra.mxu0 %v1305
    %v2997 = vpop.f32.mrf.mxu0
    %v2998 = vadd.f32 %v2984, %v2997
    %v2999 = vpop.f32.mrf.mxu0
    %v3000 = vadd.f32 %v2986, %v2999
    %3001 = vdwg.mxu0
    %3002 = vmatpush.bf16.msra.mxu0 %v2536
    %3003 = vmatpush.bf16.msra.mxu0 %v2528
    %3004 = vmatpush.bf16.msra.mxu0 %v2520
    %3005 = vmatpush.bf16.msra.mxu0 %v2512
    %3006 = vmatpush.bf16.msra.mxu0 %v2504
    %3007 = vmatpush.bf16.msra.mxu0 %v2496
    %3008 = vmatpush.bf16.msra.mxu0 %v2488
    %3009 = vmatpush.bf16.msra.mxu0 %v2480
    %3010 = vmatmul.bf16.gmra.mxu0 %v1306
    %v3011 = vpop.f32.mrf.mxu0
    %v3012 = vadd.f32 %v2998, %v3011
    %v3013 = vpop.f32.mrf.mxu0
    %v3014 = vadd.f32 %v3000, %v3013
    %3015 = vdwg.mxu0
    %3016 = vmatpush.bf16.msra.mxu0 %v2600
    %3017 = vmatpush.bf16.msra.mxu0 %v2592
    %3018 = vmatpush.bf16.msra.mxu0 %v2584
    %3019 = vmatpush.bf16.msra.mxu0 %v2576
    %3020 = vmatpush.bf16.msra.mxu0 %v2568
    %3021 = vmatpush.bf16.msra.mxu0 %v2560
    %3022 = vmatpush.bf16.msra.mxu0 %v2552
    %3023 = vmatpush.bf16.msra.mxu0 %v2544
    %3024 = vmatmul.bf16.gmra.mxu0 %v1307
    %v3025 = vpop.f32.mrf.mxu0
    %v3026 = vadd.f32 %v3012, %v3025
    %v3027 = vpop.f32.mrf.mxu0
    %v3028 = vadd.f32 %v3014, %v3027
    %3029 = vdwg.mxu0
    %3030 = vmatpush.bf16.msra.mxu0 %v2409
    %3031 = vmatpush.bf16.msra.mxu0 %v2401
    %3032 = vmatpush.bf16.msra.mxu0 %v2393
    %3033 = vmatpush.bf16.msra.mxu0 %v2385
    %3034 = vmatpush.bf16.msra.mxu0 %v2377
    %3035 = vmatpush.bf16.msra.mxu0 %v2369
    %3036 = vmatpush.bf16.msra.mxu0 %v2361
    %3037 = vmatpush.bf16.msra.mxu0 %v2353
    %3038 = vmatmul.bf16.gmra.mxu0 %v1304
    %v3039 = vpop.f32.mrf.mxu0
    %v3040 = vadd.f32 %v1569, %v3039
    %v3041 = vpop.f32.mrf.mxu0
    %v3042 = vadd.f32 %v1569, %v3041
    %3043 = vdwg.mxu0
    %3044 = vmatpush.bf16.msra.mxu0 %v2473
    %3045 = vmatpush.bf16.msra.mxu0 %v2465
    %3046 = vmatpush.bf16.msra.mxu0 %v2457
    %3047 = vmatpush.bf16.msra.mxu0 %v2449
    %3048 = vmatpush.bf16.msra.mxu0 %v2441
    %3049 = vmatpush.bf16.msra.mxu0 %v2433
    %3050 = vmatpush.bf16.msra.mxu0 %v2425
    %3051 = vmatpush.bf16.msra.mxu0 %v2417
    %3052 = vmatmul.bf16.gmra.mxu0 %v1305
    %v3053 = vpop.f32.mrf.mxu0
    %v3054 = vadd.f32 %v3040, %v3053
    %v3055 = vpop.f32.mrf.mxu0
    %v3056 = vadd.f32 %v3042, %v3055
    %3057 = vdwg.mxu0
    %3058 = vmatpush.bf16.msra.mxu0 %v2537
    %3059 = vmatpush.bf16.msra.mxu0 %v2529
    %3060 = vmatpush.bf16.msra.mxu0 %v2521
    %3061 = vmatpush.bf16.msra.mxu0 %v2513
    %3062 = vmatpush.bf16.msra.mxu0 %v2505
    %3063 = vmatpush.bf16.msra.mxu0 %v2497
    %3064 = vmatpush.bf16.msra.mxu0 %v2489
    %3065 = vmatpush.bf16.msra.mxu0 %v2481
    %3066 = vmatmul.bf16.gmra.mxu0 %v1306
    %v3067 = vpop.f32.mrf.mxu0
    %v3068 = vadd.f32 %v3054, %v3067
    %v3069 = vpop.f32.mrf.mxu0
    %v3070 = vadd.f32 %v3056, %v3069
    %3071 = vdwg.mxu0
    %3072 = vmatpush.bf16.msra.mxu0 %v2601
    %3073 = vmatpush.bf16.msra.mxu0 %v2593
    %3074 = vmatpush.bf16.msra.mxu0 %v2585
    %3075 = vmatpush.bf16.msra.mxu0 %v2577
    %3076 = vmatpush.bf16.msra.mxu0 %v2569
    %3077 = vmatpush.bf16.msra.mxu0 %v2561
    %3078 = vmatpush.bf16.msra.mxu0 %v2553
    %3079 = vmatpush.bf16.msra.mxu0 %v2545
    %3080 = vmatmul.bf16.gmra.mxu0 %v1307
    %v3081 = vpop.f32.mrf.mxu0
    %v3082 = vadd.f32 %v3068, %v3081
    %v3083 = vpop.f32.mrf.mxu0
    %v3084 = vadd.f32 %v3070, %v3083
    %3085 = vdwg.mxu0
    %3086 = vmatpush.bf16.msra.mxu0 %v2410
    %3087 = vmatpush.bf16.msra.mxu0 %v2402
    %3088 = vmatpush.bf16.msra.mxu0 %v2394
    %3089 = vmatpush.bf16.msra.mxu0 %v2386
    %3090 = vmatpush.bf16.msra.mxu0 %v2378
    %3091 = vmatpush.bf16.msra.mxu0 %v2370
    %3092 = vmatpush.bf16.msra.mxu0 %v2362
    %3093 = vmatpush.bf16.msra.mxu0 %v2354
    %3094 = vmatmul.bf16.gmra.mxu0 %v1304
    %v3095 = vpop.f32.mrf.mxu0
    %v3096 = vadd.f32 %v1570, %v3095
    %v3097 = vpop.f32.mrf.mxu0
    %v3098 = vadd.f32 %v1570, %v3097
    %3099 = vdwg.mxu0
    %3100 = vmatpush.bf16.msra.mxu0 %v2474
    %3101 = vmatpush.bf16.msra.mxu0 %v2466
    %3102 = vmatpush.bf16.msra.mxu0 %v2458
    %3103 = vmatpush.bf16.msra.mxu0 %v2450
    %3104 = vmatpush.bf16.msra.mxu0 %v2442
    %3105 = vmatpush.bf16.msra.mxu0 %v2434
    %3106 = vmatpush.bf16.msra.mxu0 %v2426
    %3107 = vmatpush.bf16.msra.mxu0 %v2418
    %3108 = vmatmul.bf16.gmra.mxu0 %v1305
    %v3109 = vpop.f32.mrf.mxu0
    %v3110 = vadd.f32 %v3096, %v3109
    %v3111 = vpop.f32.mrf.mxu0
    %v3112 = vadd.f32 %v3098, %v3111
    %3113 = vdwg.mxu0
    %3114 = vmatpush.bf16.msra.mxu0 %v2538
    %3115 = vmatpush.bf16.msra.mxu0 %v2530
    %3116 = vmatpush.bf16.msra.mxu0 %v2522
    %3117 = vmatpush.bf16.msra.mxu0 %v2514
    %3118 = vmatpush.bf16.msra.mxu0 %v2506
    %3119 = vmatpush.bf16.msra.mxu0 %v2498
    %3120 = vmatpush.bf16.msra.mxu0 %v2490
    %3121 = vmatpush.bf16.msra.mxu0 %v2482
    %3122 = vmatmul.bf16.gmra.mxu0 %v1306
    %v3123 = vpop.f32.mrf.mxu0
    %v3124 = vadd.f32 %v3110, %v3123
    %v3125 = vpop.f32.mrf.mxu0
    %v3126 = vadd.f32 %v3112, %v3125
    %3127 = vdwg.mxu0
    %3128 = vmatpush.bf16.msra.mxu0 %v2602
    %3129 = vmatpush.bf16.msra.mxu0 %v2594
    %3130 = vmatpush.bf16.msra.mxu0 %v2586
    %3131 = vmatpush.bf16.msra.mxu0 %v2578
    %3132 = vmatpush.bf16.msra.mxu0 %v2570
    %3133 = vmatpush.bf16.msra.mxu0 %v2562
    %3134 = vmatpush.bf16.msra.mxu0 %v2554
    %3135 = vmatpush.bf16.msra.mxu0 %v2546
    %3136 = vmatmul.bf16.gmra.mxu0 %v1307
    %v3137 = vpop.f32.mrf.mxu0
    %v3138 = vadd.f32 %v3124, %v3137
    %v3139 = vpop.f32.mrf.mxu0
    %v3140 = vadd.f32 %v3126, %v3139
    %3141 = vdwg.mxu0
    %3142 = vmatpush.bf16.msra.mxu0 %v2411
    %3143 = vmatpush.bf16.msra.mxu0 %v2403
    %3144 = vmatpush.bf16.msra.mxu0 %v2395
    %3145 = vmatpush.bf16.msra.mxu0 %v2387
    %3146 = vmatpush.bf16.msra.mxu0 %v2379
    %3147 = vmatpush.bf16.msra.mxu0 %v2371
    %3148 = vmatpush.bf16.msra.mxu0 %v2363
    %3149 = vmatpush.bf16.msra.mxu0 %v2355
    %3150 = vmatmul.bf16.gmra.mxu0 %v1304
    %v3151 = vpop.f32.mrf.mxu0
    %v3152 = vadd.f32 %v1571, %v3151
    %v3153 = vpop.f32.mrf.mxu0
    %v3154 = vadd.f32 %v1571, %v3153
    %3155 = vdwg.mxu0
    %3156 = vmatpush.bf16.msra.mxu0 %v2475
    %3157 = vmatpush.bf16.msra.mxu0 %v2467
    %3158 = vmatpush.bf16.msra.mxu0 %v2459
    %3159 = vmatpush.bf16.msra.mxu0 %v2451
    %3160 = vmatpush.bf16.msra.mxu0 %v2443
    %3161 = vmatpush.bf16.msra.mxu0 %v2435
    %3162 = vmatpush.bf16.msra.mxu0 %v2427
    %3163 = vmatpush.bf16.msra.mxu0 %v2419
    %3164 = vmatmul.bf16.gmra.mxu0 %v1305
    %v3165 = vpop.f32.mrf.mxu0
    %v3166 = vadd.f32 %v3152, %v3165
    %v3167 = vpop.f32.mrf.mxu0
    %v3168 = vadd.f32 %v3154, %v3167
    %3169 = vdwg.mxu0
    %3170 = vmatpush.bf16.msra.mxu0 %v2539
    %3171 = vmatpush.bf16.msra.mxu0 %v2531
    %3172 = vmatpush.bf16.msra.mxu0 %v2523
    %3173 = vmatpush.bf16.msra.mxu0 %v2515
    %3174 = vmatpush.bf16.msra.mxu0 %v2507
    %3175 = vmatpush.bf16.msra.mxu0 %v2499
    %3176 = vmatpush.bf16.msra.mxu0 %v2491
    %3177 = vmatpush.bf16.msra.mxu0 %v2483
    %3178 = vmatmul.bf16.gmra.mxu0 %v1306
    %v3179 = vpop.f32.mrf.mxu0
    %v3180 = vadd.f32 %v3166, %v3179
    %v3181 = vpop.f32.mrf.mxu0
    %v3182 = vadd.f32 %v3168, %v3181
    %3183 = vdwg.mxu0
    %3184 = vmatpush.bf16.msra.mxu0 %v2603
    %3185 = vmatpush.bf16.msra.mxu0 %v2595
    %3186 = vmatpush.bf16.msra.mxu0 %v2587
    %3187 = vmatpush.bf16.msra.mxu0 %v2579
    %3188 = vmatpush.bf16.msra.mxu0 %v2571
    %3189 = vmatpush.bf16.msra.mxu0 %v2563
    %3190 = vmatpush.bf16.msra.mxu0 %v2555
    %3191 = vmatpush.bf16.msra.mxu0 %v2547
    %3192 = vmatmul.bf16.gmra.mxu0 %v1307
    %v3193 = vpop.f32.mrf.mxu0
    %v3194 = vadd.f32 %v3180, %v3193
    %v3195 = vpop.f32.mrf.mxu0
    %v3196 = vadd.f32 %v3182, %v3195
    %3197 = vdwg.mxu0
    %3198 = vmatpush.bf16.msra.mxu0 %v2412
    %3199 = vmatpush.bf16.msra.mxu0 %v2404
    %3200 = vmatpush.bf16.msra.mxu0 %v2396
    %3201 = vmatpush.bf16.msra.mxu0 %v2388
    %3202 = vmatpush.bf16.msra.mxu0 %v2380
    %3203 = vmatpush.bf16.msra.mxu0 %v2372
    %3204 = vmatpush.bf16.msra.mxu0 %v2364
    %3205 = vmatpush.bf16.msra.mxu0 %v2356
    %3206 = vmatmul.bf16.gmra.mxu0 %v1304
    %v3207 = vpop.f32.mrf.mxu0
    %v3208 = vadd.f32 %v1572, %v3207
    %v3209 = vpop.f32.mrf.mxu0
    %v3210 = vadd.f32 %v1572, %v3209
    %3211 = vdwg.mxu0
    %3212 = vmatpush.bf16.msra.mxu0 %v2476
    %3213 = vmatpush.bf16.msra.mxu0 %v2468
    %3214 = vmatpush.bf16.msra.mxu0 %v2460
    %3215 = vmatpush.bf16.msra.mxu0 %v2452
    %3216 = vmatpush.bf16.msra.mxu0 %v2444
    %3217 = vmatpush.bf16.msra.mxu0 %v2436
    %3218 = vmatpush.bf16.msra.mxu0 %v2428
    %3219 = vmatpush.bf16.msra.mxu0 %v2420
    %3220 = vmatmul.bf16.gmra.mxu0 %v1305
    %v3221 = vpop.f32.mrf.mxu0
    %v3222 = vadd.f32 %v3208, %v3221
    %v3223 = vpop.f32.mrf.mxu0
    %v3224 = vadd.f32 %v3210, %v3223
    %3225 = vdwg.mxu0
    %3226 = vmatpush.bf16.msra.mxu0 %v2540
    %3227 = vmatpush.bf16.msra.mxu0 %v2532
    %3228 = vmatpush.bf16.msra.mxu0 %v2524
    %3229 = vmatpush.bf16.msra.mxu0 %v2516
    %3230 = vmatpush.bf16.msra.mxu0 %v2508
    %3231 = vmatpush.bf16.msra.mxu0 %v2500
    %3232 = vmatpush.bf16.msra.mxu0 %v2492
    %3233 = vmatpush.bf16.msra.mxu0 %v2484
    %3234 = vmatmul.bf16.gmra.mxu0 %v1306
    %v3235 = vpop.f32.mrf.mxu0
    %v3236 = vadd.f32 %v3222, %v3235
    %v3237 = vpop.f32.mrf.mxu0
    %v3238 = vadd.f32 %v3224, %v3237
    %3239 = vdwg.mxu0
    %3240 = vmatpush.bf16.msra.mxu0 %v2604
    %3241 = vmatpush.bf16.msra.mxu0 %v2596
    %3242 = vmatpush.bf16.msra.mxu0 %v2588
    %3243 = vmatpush.bf16.msra.mxu0 %v2580
    %3244 = vmatpush.bf16.msra.mxu0 %v2572
    %3245 = vmatpush.bf16.msra.mxu0 %v2564
    %3246 = vmatpush.bf16.msra.mxu0 %v2556
    %3247 = vmatpush.bf16.msra.mxu0 %v2548
    %3248 = vmatmul.bf16.gmra.mxu0 %v1307
    %v3249 = vpop.f32.mrf.mxu0
    %v3250 = vadd.f32 %v3236, %v3249
    %v3251 = vpop.f32.mrf.mxu0
    %v3252 = vadd.f32 %v3238, %v3251
    %3253 = vdwg.mxu0
    %3254 = vmatpush.bf16.msra.mxu0 %v2413
    %3255 = vmatpush.bf16.msra.mxu0 %v2405
    %3256 = vmatpush.bf16.msra.mxu0 %v2397
    %3257 = vmatpush.bf16.msra.mxu0 %v2389
    %3258 = vmatpush.bf16.msra.mxu0 %v2381
    %3259 = vmatpush.bf16.msra.mxu0 %v2373
    %3260 = vmatpush.bf16.msra.mxu0 %v2365
    %3261 = vmatpush.bf16.msra.mxu0 %v2357
    %3262 = vmatmul.bf16.gmra.mxu0 %v1304
    %v3263 = vpop.f32.mrf.mxu0
    %v3264 = vadd.f32 %v1573, %v3263
    %v3265 = vpop.f32.mrf.mxu0
    %v3266 = vadd.f32 %v1573, %v3265
    %3267 = vdwg.mxu0
    %3268 = vmatpush.bf16.msra.mxu0 %v2477
    %3269 = vmatpush.bf16.msra.mxu0 %v2469
    %3270 = vmatpush.bf16.msra.mxu0 %v2461
    %3271 = vmatpush.bf16.msra.mxu0 %v2453
    %3272 = vmatpush.bf16.msra.mxu0 %v2445
    %3273 = vmatpush.bf16.msra.mxu0 %v2437
    %3274 = vmatpush.bf16.msra.mxu0 %v2429
    %3275 = vmatpush.bf16.msra.mxu0 %v2421
    %3276 = vmatmul.bf16.gmra.mxu0 %v1305
    %v3277 = vpop.f32.mrf.mxu0
    %v3278 = vadd.f32 %v3264, %v3277
    %v3279 = vpop.f32.mrf.mxu0
    %v3280 = vadd.f32 %v3266, %v3279
    %3281 = vdwg.mxu0
    %3282 = vmatpush.bf16.msra.mxu0 %v2541
    %3283 = vmatpush.bf16.msra.mxu0 %v2533
    %3284 = vmatpush.bf16.msra.mxu0 %v2525
    %3285 = vmatpush.bf16.msra.mxu0 %v2517
    %3286 = vmatpush.bf16.msra.mxu0 %v2509
    %3287 = vmatpush.bf16.msra.mxu0 %v2501
    %3288 = vmatpush.bf16.msra.mxu0 %v2493
    %3289 = vmatpush.bf16.msra.mxu0 %v2485
    %3290 = vmatmul.bf16.gmra.mxu0 %v1306
    %v3291 = vpop.f32.mrf.mxu0
    %v3292 = vadd.f32 %v3278, %v3291
    %v3293 = vpop.f32.mrf.mxu0
    %v3294 = vadd.f32 %v3280, %v3293
    %3295 = vdwg.mxu0
    %3296 = vmatpush.bf16.msra.mxu0 %v2605
    %3297 = vmatpush.bf16.msra.mxu0 %v2597
    %3298 = vmatpush.bf16.msra.mxu0 %v2589
    %3299 = vmatpush.bf16.msra.mxu0 %v2581
    %3300 = vmatpush.bf16.msra.mxu0 %v2573
    %3301 = vmatpush.bf16.msra.mxu0 %v2565
    %3302 = vmatpush.bf16.msra.mxu0 %v2557
    %3303 = vmatpush.bf16.msra.mxu0 %v2549
    %3304 = vmatmul.bf16.gmra.mxu0 %v1307
    %v3305 = vpop.f32.mrf.mxu0
    %v3306 = vadd.f32 %v3292, %v3305
    %v3307 = vpop.f32.mrf.mxu0
    %v3308 = vadd.f32 %v3294, %v3307
    %3309 = vdwg.mxu0
    %v3310 = vadd.f32 %v2914, %v2916
    %v3311 = vrot.slane %v3310, 4
    %v3312 = vadd.f32 %v3310, %v3311
    %v3313 = vrot.slane %v3312, 2
    %v3314 = vadd.f32 %v3312, %v3313
    %v3315 = vrot.slane %v3314, 1
    %v3316 = vadd.f32 %v3314, %v3315
    %v3317 = vadd.f32 %v2970, %v2972
    %v3318 = vrot.slane %v3317, 4
    %v3319 = vadd.f32 %v3317, %v3318
    %v3320 = vrot.slane %v3319, 2
    %v3321 = vadd.f32 %v3319, %v3320
    %v3322 = vrot.slane %v3321, 1
    %v3323 = vadd.f32 %v3321, %v3322
    %v3324 = vadd.f32 %v3026, %v3028
    %v3325 = vrot.slane %v3324, 4
    %v3326 = vadd.f32 %v3324, %v3325
    %v3327 = vrot.slane %v3326, 2
    %v3328 = vadd.f32 %v3326, %v3327
    %v3329 = vrot.slane %v3328, 1
    %v3330 = vadd.f32 %v3328, %v3329
    %v3331 = vadd.f32 %v3082, %v3084
    %v3332 = vrot.slane %v3331, 4
    %v3333 = vadd.f32 %v3331, %v3332
    %v3334 = vrot.slane %v3333, 2
    %v3335 = vadd.f32 %v3333, %v3334
    %v3336 = vrot.slane %v3335, 1
    %v3337 = vadd.f32 %v3335, %v3336
    %v3338 = vadd.f32 %v3138, %v3140
    %v3339 = vrot.slane %v3338, 4
    %v3340 = vadd.f32 %v3338, %v3339
    %v3341 = vrot.slane %v3340, 2
    %v3342 = vadd.f32 %v3340, %v3341
    %v3343 = vrot.slane %v3342, 1
    %v3344 = vadd.f32 %v3342, %v3343
    %v3345 = vadd.f32 %v3194, %v3196
    %v3346 = vrot.slane %v3345, 4
    %v3347 = vadd.f32 %v3345, %v3346
    %v3348 = vrot.slane %v3347, 2
    %v3349 = vadd.f32 %v3347, %v3348
    %v3350 = vrot.slane %v3349, 1
    %v3351 = vadd.f32 %v3349, %v3350
    %v3352 = vadd.f32 %v3250, %v3252
    %v3353 = vrot.slane %v3352, 4
    %v3354 = vadd.f32 %v3352, %v3353
    %v3355 = vrot.slane %v3354, 2
    %v3356 = vadd.f32 %v3354, %v3355
    %v3357 = vrot.slane %v3356, 1
    %v3358 = vadd.f32 %v3356, %v3357
    %v3359 = vadd.f32 %v3306, %v3308
    %v3360 = vrot.slane %v3359, 4
    %v3361 = vadd.f32 %v3359, %v3360
    %v3362 = vrot.slane %v3361, 2
    %v3363 = vadd.f32 %v3361, %v3362
    %v3364 = vrot.slane %v3363, 1
    %v3365 = vadd.f32 %v3363, %v3364
    %v3366 = vmul.f32 %v3316, %v492
    %v3367 = vmul.f32 %v3323, %v492
    %v3368 = vmul.f32 %v3330, %v492
    %v3369 = vmul.f32 %v3337, %v492
    %v3370 = vmul.f32 %v3344, %v492
    %v3371 = vmul.f32 %v3351, %v492
    %v3372 = vmul.f32 %v3358, %v492
    %v3373 = vmul.f32 %v3365, %v492
    %v3374 = vmul.f32 %v2914, %v2914
    %v3375 = vmul.f32 %v2970, %v2970
    %v3376 = vmul.f32 %v3026, %v3026
    %v3377 = vmul.f32 %v3082, %v3082
    %v3378 = vmul.f32 %v3138, %v3138
    %v3379 = vmul.f32 %v3194, %v3194
    %v3380 = vmul.f32 %v3250, %v3250
    %v3381 = vmul.f32 %v3306, %v3306
    %v3382 = vmul.f32 %v2916, %v2916
    %v3383 = vmul.f32 %v2972, %v2972
    %v3384 = vmul.f32 %v3028, %v3028
    %v3385 = vmul.f32 %v3084, %v3084
    %v3386 = vmul.f32 %v3140, %v3140
    %v3387 = vmul.f32 %v3196, %v3196
    %v3388 = vmul.f32 %v3252, %v3252
    %v3389 = vmul.f32 %v3308, %v3308
    %v3390 = vadd.f32 %v3374, %v3382
    %v3391 = vrot.slane %v3390, 4
    %v3392 = vadd.f32 %v3390, %v3391
    %v3393 = vrot.slane %v3392, 2
    %v3394 = vadd.f32 %v3392, %v3393
    %v3395 = vrot.slane %v3394, 1
    %v3396 = vadd.f32 %v3394, %v3395
    %v3397 = vadd.f32 %v3375, %v3383
    %v3398 = vrot.slane %v3397, 4
    %v3399 = vadd.f32 %v3397, %v3398
    %v3400 = vrot.slane %v3399, 2
    %v3401 = vadd.f32 %v3399, %v3400
    %v3402 = vrot.slane %v3401, 1
    %v3403 = vadd.f32 %v3401, %v3402
    %v3404 = vadd.f32 %v3376, %v3384
    %v3405 = vrot.slane %v3404, 4
    %v3406 = vadd.f32 %v3404, %v3405
    %v3407 = vrot.slane %v3406, 2
    %v3408 = vadd.f32 %v3406, %v3407
    %v3409 = vrot.slane %v3408, 1
    %v3410 = vadd.f32 %v3408, %v3409
    %v3411 = vadd.f32 %v3377, %v3385
    %v3412 = vrot.slane %v3411, 4
    %v3413 = vadd.f32 %v3411, %v3412
    %v3414 = vrot.slane %v3413, 2
    %v3415 = vadd.f32 %v3413, %v3414
    %v3416 = vrot.slane %v3415, 1
    %v3417 = vadd.f32 %v3415, %v3416
    %v3418 = vadd.f32 %v3378, %v3386
    %v3419 = vrot.slane %v3418, 4
    %v3420 = vadd.f32 %v3418, %v3419
    %v3421 = vrot.slane %v3420, 2
    %v3422 = vadd.f32 %v3420, %v3421
    %v3423 = vrot.slane %v3422, 1
    %v3424 = vadd.f32 %v3422, %v3423
    %v3425 = vadd.f32 %v3379, %v3387
    %v3426 = vrot.slane %v3425, 4
    %v3427 = vadd.f32 %v3425, %v3426
    %v3428 = vrot.slane %v3427, 2
    %v3429 = vadd.f32 %v3427, %v3428
    %v3430 = vrot.slane %v3429, 1
    %v3431 = vadd.f32 %v3429, %v3430
    %v3432 = vadd.f32 %v3380, %v3388
    %v3433 = vrot.slane %v3432, 4
    %v3434 = vadd.f32 %v3432, %v3433
    %v3435 = vrot.slane %v3434, 2
    %v3436 = vadd.f32 %v3434, %v3435
    %v3437 = vrot.slane %v3436, 1
    %v3438 = vadd.f32 %v3436, %v3437
    %v3439 = vadd.f32 %v3381, %v3389
    %v3440 = vrot.slane %v3439, 4
    %v3441 = vadd.f32 %v3439, %v3440
    %v3442 = vrot.slane %v3441, 2
    %v3443 = vadd.f32 %v3441, %v3442
    %v3444 = vrot.slane %v3443, 1
    %v3445 = vadd.f32 %v3443, %v3444
    %v3446 = vmul.f32 %v3396, %v492
    %v3447 = vmul.f32 %v3403, %v492
    %v3448 = vmul.f32 %v3410, %v492
    %v3449 = vmul.f32 %v3417, %v492
    %v3450 = vmul.f32 %v3424, %v492
    %v3451 = vmul.f32 %v3431, %v492
    %v3452 = vmul.f32 %v3438, %v492
    %v3453 = vmul.f32 %v3445, %v492
    %v3454 = vmul.f32 %v3366, %v3366
    %v3455 = vmul.f32 %v3367, %v3367
    %v3456 = vmul.f32 %v3368, %v3368
    %v3457 = vmul.f32 %v3369, %v3369
    %v3458 = vmul.f32 %v3370, %v3370
    %v3459 = vmul.f32 %v3371, %v3371
    %v3460 = vmul.f32 %v3372, %v3372
    %v3461 = vmul.f32 %v3373, %v3373
    %v3462 = vsub.f32 %v3446, %v3454
    %v3463 = vsub.f32 %v3447, %v3455
    %v3464 = vsub.f32 %v3448, %v3456
    %v3465 = vsub.f32 %v3449, %v3457
    %v3466 = vsub.f32 %v3450, %v3458
    %v3467 = vsub.f32 %v3451, %v3459
    %v3468 = vsub.f32 %v3452, %v3460
    %v3469 = vsub.f32 %v3453, %v3461
    %v3470 = vmax.f32 %v3462, 0.0
    %v3471 = vmax.f32 %v3463, 0.0
    %v3472 = vmax.f32 %v3464, 0.0
    %v3473 = vmax.f32 %v3465, 0.0
    %v3474 = vmax.f32 %v3466, 0.0
    %v3475 = vmax.f32 %v3467, 0.0
    %v3476 = vmax.f32 %v3468, 0.0
    %v3477 = vmax.f32 %v3469, 0.0
    %v3478 = vld [vmem:[#allocation25] sm:$0xff]
    %v3479 = vadd.f32 %v3470, 0.8
    %v3480 = vadd.f32 %v3471, 0.8
    %v3481 = vadd.f32 %v3472, 0.8
    %v3482 = vadd.f32 %v3473, 0.8
    %v3483 = vadd.f32 %v3474, 0.8
    %v3484 = vadd.f32 %v3475, 0.8
    %v3485 = vadd.f32 %v3476, 0.8
    %v3486 = vadd.f32 %v3477, 0.8
    %v3487 = vrsqrt.pop %v3479
    %v3488 = vmul.f32 %v3487, %v3479
    %v3489 = vmul.f32 %v3488, %v3487
    %v3490 = vmul.f32 0.5, %v3489
    %v3491 = vsub.f32 1.5, %v3490
    %v3492 = vmul.f32 %v3487, %v3491
    %vm3493 = vweird.f32 %v3479
    %vm3494 = vweird.f32 %v3487
    %vm3495 = vmor %vm3493, %vm3494
    %v3496 = vsel %vm3495, %v3487, %v3492
    %v3497 = vrsqrt.pop %v3480
    %v3498 = vmul.f32 %v3497, %v3480
    %v3499 = vmul.f32 %v3498, %v3497
    %v3500 = vmul.f32 0.5, %v3499
    %v3501 = vsub.f32 1.5, %v3500
    %v3502 = vmul.f32 %v3497, %v3501
    %vm3503 = vweird.f32 %v3480
    %vm3504 = vweird.f32 %v3497
    %vm3505 = vmor %vm3503, %vm3504
    %v3506 = vsel %vm3505, %v3497, %v3502
    %v3507 = vrsqrt.pop %v3481
    %v3508 = vmul.f32 %v3507, %v3481
    %v3509 = vmul.f32 %v3508, %v3507
    %v3510 = vmul.f32 0.5, %v3509
    %v3511 = vsub.f32 1.5, %v3510
    %v3512 = vmul.f32 %v3507, %v3511
    %vm3513 = vweird.f32 %v3481
    %vm3514 = vweird.f32 %v3507
    %vm3515 = vmor %vm3513, %vm3514
    %v3516 = vsel %vm3515, %v3507, %v3512
    %v3517 = vrsqrt.pop %v3482
    %v3518 = vmul.f32 %v3517, %v3482
    %v3519 = vmul.f32 %v3518, %v3517
    %v3520 = vmul.f32 0.5, %v3519
    %v3521 = vsub.f32 1.5, %v3520
    %v3522 = vmul.f32 %v3517, %v3521
    %vm3523 = vweird.f32 %v3482
    %vm3524 = vweird.f32 %v3517
    %vm3525 = vmor %vm3523, %vm3524
    %v3526 = vsel %vm3525, %v3517, %v3522
    %v3527 = vrsqrt.pop %v3483
    %v3528 = vmul.f32 %v3527, %v3483
    %v3529 = vmul.f32 %v3528, %v3527
    %v3530 = vmul.f32 0.5, %v3529
    %v3531 = vsub.f32 1.5, %v3530
    %v3532 = vmul.f32 %v3527, %v3531
    %vm3533 = vweird.f32 %v3483
    %vm3534 = vweird.f32 %v3527
    %vm3535 = vmor %vm3533, %vm3534
    %v3536 = vsel %vm3535, %v3527, %v3532
    %v3537 = vrsqrt.pop %v3484
    %v3538 = vmul.f32 %v3537, %v3484
    %v3539 = vmul.f32 %v3538, %v3537
    %v3540 = vmul.f32 0.5, %v3539
    %v3541 = vsub.f32 1.5, %v3540
    %v3542 = vmul.f32 %v3537, %v3541
    %vm3543 = vweird.f32 %v3484
    %vm3544 = vweird.f32 %v3537
    %vm3545 = vmor %vm3543, %vm3544
    %v3546 = vsel %vm3545, %v3537, %v3542
    %v3547 = vrsqrt.pop %v3485
    %v3548 = vmul.f32 %v3547, %v3485
    %v3549 = vmul.f32 %v3548, %v3547
    %v3550 = vmul.f32 0.5, %v3549
    %v3551 = vsub.f32 1.5, %v3550
    %v3552 = vmul.f32 %v3547, %v3551
    %vm3553 = vweird.f32 %v3485
    %vm3554 = vweird.f32 %v3547
    %vm3555 = vmor %vm3553, %vm3554
    %v3556 = vsel %vm3555, %v3547, %v3552
    %v3557 = vrsqrt.pop %v3486
    %v3558 = vmul.f32 %v3557, %v3486
    %v3559 = vmul.f32 %v3558, %v3557
    %v3560 = vmul.f32 0.5, %v3559
    %v3561 = vsub.f32 1.5, %v3560
    %v3562 = vmul.f32 %v3557, %v3561
    %vm3563 = vweird.f32 %v3486
    %vm3564 = vweird.f32 %v3557
    %vm3565 = vmor %vm3563, %vm3564
    %v3566 = vsel %vm3565, %v3557, %v3562
    %v3575 = vrot.slane %v3506, 7
    %v3576 = vrot.slane %v3516, 6
    %v3577 = vrot.slane %v3526, 5
    %v3578 = vrot.slane %v3536, 4
    %v3579 = vrot.slane %v3546, 3
    %v3580 = vrot.slane %v3556, 2
    %v3581 = vrot.slane %v3566, 1
    %v3582 = vsel %vm547, %v3496, %v3575
    %v3583 = vsel %vm1231, %v3576, %v3577
    %v3584 = vsel %vm1233, %v3582, %v3583
    %vm3585 = vcmask 1044484
    %v3586 = vsel %vm3585, %v3578, %v3579
    %vm3587 = vcmask 1046534
    %v3588 = vsel %vm3587, %v3580, %v3581
    %vm3589 = vcmask 1045508
    %v3590 = vsel %vm3589, %v3586, %v3588
    %vm3591 = vcmask 1043456
    %v3592 = vsel %vm3591, %v3584, %v3590
    %v3594 = vmul.f32 %v3478, %v3592
    %v3595 = vld [vmem:[#allocation27] sm:$0xff]
    %v3597 = vperm.slane %v3594, 0
    %v3598 = vperm.slane %v3594, 1
    %v3599 = vperm.slane %v3594, 2
    %v3600 = vperm.slane %v3594, 3
    %v3601 = vperm.slane %v3594, 4
    %v3602 = vperm.slane %v3594, 5
    %v3603 = vperm.slane %v3594, 6
    %v3604 = vperm.slane %v3594, 7
    %v3613 = vmul.f32 %v3366, %v3597
    %v3614 = vmul.f32 %v3367, %v3598
    %v3615 = vmul.f32 %v3368, %v3599
    %v3616 = vmul.f32 %v3369, %v3600
    %v3617 = vmul.f32 %v3370, %v3601
    %v3618 = vmul.f32 %v3371, %v3602
    %v3619 = vmul.f32 %v3372, %v3603
    %v3620 = vmul.f32 %v3373, %v3604
    %v3629 = vrot.slane %v3614, 7
    %v3630 = vrot.slane %v3615, 6
    %v3631 = vrot.slane %v3616, 5
    %v3632 = vrot.slane %v3617, 4
    %v3633 = vrot.slane %v3618, 3
    %v3634 = vrot.slane %v3619, 2
    %v3635 = vrot.slane %v3620, 1
    %v3636 = vsel %vm547, %v3613, %v3629
    %v3637 = vsel %vm1231, %v3630, %v3631
    %v3638 = vsel %vm1233, %v3636, %v3637
    %v3639 = vsel %vm3585, %v3632, %v3633
    %v3640 = vsel %vm3587, %v3634, %v3635
    %v3641 = vsel %vm3589, %v3639, %v3640
    %v3642 = vsel %vm3591, %v3638, %v3641
    %v3644 = vsub.f32 %v3595, %v3642
    %v3645 = vmul.f32 %v2914, %v3597
    %v3646 = vmul.f32 %v2970, %v3598
    %v3647 = vmul.f32 %v3026, %v3599
    %v3648 = vmul.f32 %v3082, %v3600
    %v3649 = vmul.f32 %v3138, %v3601
    %v3650 = vmul.f32 %v3194, %v3602
    %v3651 = vmul.f32 %v3250, %v3603
    %v3652 = vmul.f32 %v3306, %v3604
    %v3653 = vmul.f32 %v2916, %v3597
    %v3654 = vmul.f32 %v2972, %v3598
    %v3655 = vmul.f32 %v3028, %v3599
    %v3656 = vmul.f32 %v3084, %v3600
    %v3657 = vmul.f32 %v3140, %v3601
    %v3658 = vmul.f32 %v3196, %v3602
    %v3659 = vmul.f32 %v3252, %v3603
    %v3660 = vmul.f32 %v3308, %v3604
    %v3662 = vperm.slane %v3644, 0
    %v3663 = vperm.slane %v3644, 1
    %v3664 = vperm.slane %v3644, 2
    %v3665 = vperm.slane %v3644, 3
    %v3666 = vperm.slane %v3644, 4
    %v3667 = vperm.slane %v3644, 5
    %v3668 = vperm.slane %v3644, 6
    %v3669 = vperm.slane %v3644, 7
    %v3678 = vadd.f32 %v3645, %v3662
    %v3679 = vadd.f32 %v3646, %v3663
    %v3680 = vadd.f32 %v3647, %v3664
    %v3681 = vadd.f32 %v3648, %v3665
    %v3682 = vadd.f32 %v3649, %v3666
    %v3683 = vadd.f32 %v3650, %v3667
    %v3684 = vadd.f32 %v3651, %v3668
    %v3685 = vadd.f32 %v3652, %v3669
    %v3686 = vadd.f32 %v3653, %v3662
    %v3687 = vadd.f32 %v3654, %v3663
    %v3688 = vadd.f32 %v3655, %v3664
    %v3689 = vadd.f32 %v3656, %v3665
    %v3690 = vadd.f32 %v3657, %v3666
    %v3691 = vadd.f32 %v3658, %v3667
    %v3692 = vadd.f32 %v3659, %v3668
    %v3693 = vadd.f32 %v3660, %v3669
    %v3694 = vmul.f32 %v3678, 0.2
    %v3695 = vmul.f32 %v3679, 0.2
    %v3696 = vmul.f32 %v3680, 0.2
    %v3697 = vmul.f32 %v3681, 0.2
    %v3698 = vmul.f32 %v3682, 0.2
    %v3699 = vmul.f32 %v3683, 0.2
    %v3700 = vmul.f32 %v3684, 0.2
    %v3701 = vmul.f32 %v3685, 0.2
    %v3702 = vmul.f32 %v3686, 0.2
    %v3703 = vmul.f32 %v3687, 0.2
    %v3704 = vmul.f32 %v3688, 0.2
    %v3705 = vmul.f32 %v3689, 0.2
    %v3706 = vmul.f32 %v3690, 0.2
    %v3707 = vmul.f32 %v3691, 0.2
    %v3708 = vmul.f32 %v3692, 0.2
    %v3709 = vmul.f32 %v3693, 0.2
    %v3710 = vmax.f32 %v3678, %v3694
    %v3711 = vmax.f32 %v3679, %v3695
    %v3712 = vmax.f32 %v3680, %v3696
    %v3713 = vmax.f32 %v3681, %v3697
    %v3714 = vmax.f32 %v3682, %v3698
    %v3715 = vmax.f32 %v3683, %v3699
    %v3716 = vmax.f32 %v3684, %v3700
    %v3717 = vmax.f32 %v3685, %v3701
    %v3718 = vmax.f32 %v3686, %v3702
    %v3719 = vmax.f32 %v3687, %v3703
    %v3720 = vmax.f32 %v3688, %v3704
    %v3721 = vmax.f32 %v3689, %v3705
    %v3722 = vmax.f32 %v3690, %v3706
    %v3723 = vmax.f32 %v3691, %v3707
    %v3724 = vmax.f32 %v3692, %v3708
    %v3725 = vmax.f32 %v3693, %v3709
    %v3726 = vpack.c.bf16 %v3718, %v3710
    %v3727 = vpack.c.bf16 %v3719, %v3711
    %v3728 = vpack.c.bf16 %v3720, %v3712
    %v3729 = vpack.c.bf16 %v3721, %v3713
    %v3730 = vpack.c.bf16 %v3722, %v3714
    %v3731 = vpack.c.bf16 %v3723, %v3715
    %v3732 = vpack.c.bf16 %v3724, %v3716
    %v3733 = vpack.c.bf16 %v3725, %v3717
    loop: start=0, step=1, limit=4
    $region134: #{tpu_custom_call.1} parent=1 // loop_pre_header
      _
    $region135: #{tpu_custom_call.1} parent=1 // loop_header
      %s3735 = sphi 0, %s3739
      %p3736 = scmp.ge.s32.totalorder %s3735, 4
    $region136: #{tpu_custom_call.1} parent=1 // loop_header_branch
      %3738 = sbr.rel (%p3736) target = $region140
    $region137: #{tpu_custom_call.1} parent=1 // loop_body
      %s3740 = sand.u32 %s3735, 1
      %s3741 = smul.u32 %s3740, 256
      %s3742 = smul.addr %s3741, 4
      %s3743 = scalar_lea.vmem [#allocation2], %s3742
      %s3744 = scalar_lea.sflag [#allocation3], %s3740
      %s3745 = smul.u32 4, 128
      %s3746 = smul.u32 %s3745, 2
      %s3747 = sshll.u32 %s3746, 4
      %3748 = dma.done %s3744, %s3747
      %s3749 = sadd.s32 %s3735, 1
      %p3750 = scmp.lt.s32.totalorder %s3749, 4
      // Predicated region
      $region141: #{tpu_custom_call.1} parent=137 // pred_check
        %p3751 = pneg %p3750
      $region142: #{tpu_custom_call.1} parent=137 // pred_check_branch
        %3753 = sbr.rel (%p3751) target = $region144
      $region143: #{tpu_custom_call.1} parent=137 // pred_region
        %s3754 = ssub.s32 1, %s3740
        %s3755 = smul.u32 %s3749, 256
        %s3756 = smul.addr %s3755, 4
        %s3757 = scalar_lea.hbm %s16, %s3756
        %s3758 = smul.u32 %s3754, 256
        %s3759 = smul.addr %s3758, 4
        %s3760 = scalar_lea.vmem [#allocation2], %s3759
        %s3761 = scalar_lea.sflag [#allocation3], %s3754
        // Predicated region
        $region145: #{tpu_custom_call.1} parent=143 // pred_check
          _
        $region146: #{tpu_custom_call.1} parent=143 // pred_check_branch
          %3763 = sbr.rel target = $region148
        $region147: #{tpu_custom_call.1} parent=143 // pred_region
          %3764 = sst [smem:[#allocation33]] [#allocation36]
          %3765 = sst [smem:[#allocation34]] [#allocation35]
        $region148: #{tpu_custom_call.1} parent=143 // pred_fallthru
          _
        %3767 = shalt.err (0)
        %s3769 = sshll.u32 %s3757, 4
        %s3770 = int_to_ptr.hbm [resolvable:$true] %s3769
        %s3771 = sshll.u32 %s3760, 4
        %s3772 = int_to_ptr.vmem [resolvable:$true] %s3771
        %3774 = dma.hbm_to_vmem [thread:$0]  %s3770, 16384, %s3772, %s3761
      $region144: #{tpu_custom_call.1} parent=137 // pred_fallthru
        _
      %s3775 = smul.u32 %s3735, 256
      %v3776 = vld [vmem:[%s3743] sm:$0xff]
      %v3777 = vld [vmem:[%s3743 + $0x8] sm:$0xff]
      %v3778 = vld [vmem:[%s3743 + $0x10] sm:$0xff]
      %v3779 = vld [vmem:[%s3743 + $0x18] sm:$0xff]
      %v3780 = vld [vmem:[%s3743 + $0x20] sm:$0xff]
      %v3781 = vld [vmem:[%s3743 + $0x28] sm:$0xff]
      %v3782 = vld [vmem:[%s3743 + $0x30] sm:$0xff]
      %v3783 = vld [vmem:[%s3743 + $0x38] sm:$0xff]
      %v3784 = vld [vmem:[%s3743 + $0x40] sm:$0xff]
      %v3785 = vld [vmem:[%s3743 + $0x48] sm:$0xff]
      %v3786 = vld [vmem:[%s3743 + $0x50] sm:$0xff]
      %v3787 = vld [vmem:[%s3743 + $0x58] sm:$0xff]
      %v3788 = vld [vmem:[%s3743 + $0x60] sm:$0xff]
      %v3789 = vld [vmem:[%s3743 + $0x68] sm:$0xff]
      %v3790 = vld [vmem:[%s3743 + $0x70] sm:$0xff]
      %v3791 = vld [vmem:[%s3743 + $0x78] sm:$0xff]
      %v3792 = vld [vmem:[%s3743 + $0x80] sm:$0xff]
      %v3793 = vld [vmem:[%s3743 + $0x88] sm:$0xff]
      %v3794 = vld [vmem:[%s3743 + $0x90] sm:$0xff]
      %v3795 = vld [vmem:[%s3743 + $0x98] sm:$0xff]
      %v3796 = vld [vmem:[%s3743 + $0xa0] sm:$0xff]
      %v3797 = vld [vmem:[%s3743 + $0xa8] sm:$0xff]
      %v3798 = vld [vmem:[%s3743 + $0xb0] sm:$0xff]
      %v3799 = vld [vmem:[%s3743 + $0xb8] sm:$0xff]
      %v3800 = vld [vmem:[%s3743 + $0xc0] sm:$0xff]
      %v3801 = vld [vmem:[%s3743 + $0xc8] sm:$0xff]
      %v3802 = vld [vmem:[%s3743 + $0xd0] sm:$0xff]
      %v3803 = vld [vmem:[%s3743 + $0xd8] sm:$0xff]
      %v3804 = vld [vmem:[%s3743 + $0xe0] sm:$0xff]
      %v3805 = vld [vmem:[%s3743 + $0xe8] sm:$0xff]
      %v3806 = vld [vmem:[%s3743 + $0xf0] sm:$0xff]
      %v3807 = vld [vmem:[%s3743 + $0xf8] sm:$0xff]
      %v3808 = vld [vmem:[%s3743 + $0x100] sm:$0xff]
      %v3809 = vld [vmem:[%s3743 + $0x108] sm:$0xff]
      %v3810 = vld [vmem:[%s3743 + $0x110] sm:$0xff]
      %v3811 = vld [vmem:[%s3743 + $0x118] sm:$0xff]
      %v3812 = vld [vmem:[%s3743 + $0x120] sm:$0xff]
      %v3813 = vld [vmem:[%s3743 + $0x128] sm:$0xff]
      %v3814 = vld [vmem:[%s3743 + $0x130] sm:$0xff]
      %v3815 = vld [vmem:[%s3743 + $0x138] sm:$0xff]
      %v3816 = vld [vmem:[%s3743 + $0x140] sm:$0xff]
      %v3817 = vld [vmem:[%s3743 + $0x148] sm:$0xff]
      %v3818 = vld [vmem:[%s3743 + $0x150] sm:$0xff]
      %v3819 = vld [vmem:[%s3743 + $0x158] sm:$0xff]
      %v3820 = vld [vmem:[%s3743 + $0x160] sm:$0xff]
      %v3821 = vld [vmem:[%s3743 + $0x168] sm:$0xff]
      %v3822 = vld [vmem:[%s3743 + $0x170] sm:$0xff]
      %v3823 = vld [vmem:[%s3743 + $0x178] sm:$0xff]
      %v3824 = vld [vmem:[%s3743 + $0x180] sm:$0xff]
      %v3825 = vld [vmem:[%s3743 + $0x188] sm:$0xff]
      %v3826 = vld [vmem:[%s3743 + $0x190] sm:$0xff]
      %v3827 = vld [vmem:[%s3743 + $0x198] sm:$0xff]
      %v3828 = vld [vmem:[%s3743 + $0x1a0] sm:$0xff]
      %v3829 = vld [vmem:[%s3743 + $0x1a8] sm:$0xff]
      %v3830 = vld [vmem:[%s3743 + $0x1b0] sm:$0xff]
      %v3831 = vld [vmem:[%s3743 + $0x1b8] sm:$0xff]
      %v3832 = vld [vmem:[%s3743 + $0x1c0] sm:$0xff]
      %v3833 = vld [vmem:[%s3743 + $0x1c8] sm:$0xff]
      %v3834 = vld [vmem:[%s3743 + $0x1d0] sm:$0xff]
      %v3835 = vld [vmem:[%s3743 + $0x1d8] sm:$0xff]
      %v3836 = vld [vmem:[%s3743 + $0x1e0] sm:$0xff]
      %v3837 = vld [vmem:[%s3743 + $0x1e8] sm:$0xff]
      %v3838 = vld [vmem:[%s3743 + $0x1f0] sm:$0xff]
      %v3839 = vld [vmem:[%s3743 + $0x1f8] sm:$0xff]
      %v3840 = vld [vmem:[%s3743 + $0x200] sm:$0xff]
      %v3841 = vld [vmem:[%s3743 + $0x208] sm:$0xff]
      %v3842 = vld [vmem:[%s3743 + $0x210] sm:$0xff]
      %v3843 = vld [vmem:[%s3743 + $0x218] sm:$0xff]
      %v3844 = vld [vmem:[%s3743 + $0x220] sm:$0xff]
      %v3845 = vld [vmem:[%s3743 + $0x228] sm:$0xff]
      %v3846 = vld [vmem:[%s3743 + $0x230] sm:$0xff]
      %v3847 = vld [vmem:[%s3743 + $0x238] sm:$0xff]
      %v3848 = vld [vmem:[%s3743 + $0x240] sm:$0xff]
      %v3849 = vld [vmem:[%s3743 + $0x248] sm:$0xff]
      %v3850 = vld [vmem:[%s3743 + $0x250] sm:$0xff]
      %v3851 = vld [vmem:[%s3743 + $0x258] sm:$0xff]
      %v3852 = vld [vmem:[%s3743 + $0x260] sm:$0xff]
      %v3853 = vld [vmem:[%s3743 + $0x268] sm:$0xff]
      %v3854 = vld [vmem:[%s3743 + $0x270] sm:$0xff]
      %v3855 = vld [vmem:[%s3743 + $0x278] sm:$0xff]
      %v3856 = vld [vmem:[%s3743 + $0x280] sm:$0xff]
      %v3857 = vld [vmem:[%s3743 + $0x288] sm:$0xff]
      %v3858 = vld [vmem:[%s3743 + $0x290] sm:$0xff]
      %v3859 = vld [vmem:[%s3743 + $0x298] sm:$0xff]
      %v3860 = vld [vmem:[%s3743 + $0x2a0] sm:$0xff]
      %v3861 = vld [vmem:[%s3743 + $0x2a8] sm:$0xff]
      %v3862 = vld [vmem:[%s3743 + $0x2b0] sm:$0xff]
      %v3863 = vld [vmem:[%s3743 + $0x2b8] sm:$0xff]
      %v3864 = vld [vmem:[%s3743 + $0x2c0] sm:$0xff]
      %v3865 = vld [vmem:[%s3743 + $0x2c8] sm:$0xff]
      %v3866 = vld [vmem:[%s3743 + $0x2d0] sm:$0xff]
      %v3867 = vld [vmem:[%s3743 + $0x2d8] sm:$0xff]
      %v3868 = vld [vmem:[%s3743 + $0x2e0] sm:$0xff]
      %v3869 = vld [vmem:[%s3743 + $0x2e8] sm:$0xff]
      %v3870 = vld [vmem:[%s3743 + $0x2f0] sm:$0xff]
      %v3871 = vld [vmem:[%s3743 + $0x2f8] sm:$0xff]
      %v3872 = vld [vmem:[%s3743 + $0x300] sm:$0xff]
      %v3873 = vld [vmem:[%s3743 + $0x308] sm:$0xff]
      %v3874 = vld [vmem:[%s3743 + $0x310] sm:$0xff]
      %v3875 = vld [vmem:[%s3743 + $0x318] sm:$0xff]
      %v3876 = vld [vmem:[%s3743 + $0x320] sm:$0xff]
      %v3877 = vld [vmem:[%s3743 + $0x328] sm:$0xff]
      %v3878 = vld [vmem:[%s3743 + $0x330] sm:$0xff]
      %v3879 = vld [vmem:[%s3743 + $0x338] sm:$0xff]
      %v3880 = vld [vmem:[%s3743 + $0x340] sm:$0xff]
      %v3881 = vld [vmem:[%s3743 + $0x348] sm:$0xff]
      %v3882 = vld [vmem:[%s3743 + $0x350] sm:$0xff]
      %v3883 = vld [vmem:[%s3743 + $0x358] sm:$0xff]
      %v3884 = vld [vmem:[%s3743 + $0x360] sm:$0xff]
      %v3885 = vld [vmem:[%s3743 + $0x368] sm:$0xff]
      %v3886 = vld [vmem:[%s3743 + $0x370] sm:$0xff]
      %v3887 = vld [vmem:[%s3743 + $0x378] sm:$0xff]
      %v3888 = vld [vmem:[%s3743 + $0x380] sm:$0xff]
      %v3889 = vld [vmem:[%s3743 + $0x388] sm:$0xff]
      %v3890 = vld [vmem:[%s3743 + $0x390] sm:$0xff]
      %v3891 = vld [vmem:[%s3743 + $0x398] sm:$0xff]
      %v3892 = vld [vmem:[%s3743 + $0x3a0] sm:$0xff]
      %v3893 = vld [vmem:[%s3743 + $0x3a8] sm:$0xff]
      %v3894 = vld [vmem:[%s3743 + $0x3b0] sm:$0xff]
      %v3895 = vld [vmem:[%s3743 + $0x3b8] sm:$0xff]
      %v3896 = vld [vmem:[%s3743 + $0x3c0] sm:$0xff]
      %v3897 = vld [vmem:[%s3743 + $0x3c8] sm:$0xff]
      %v3898 = vld [vmem:[%s3743 + $0x3d0] sm:$0xff]
      %v3899 = vld [vmem:[%s3743 + $0x3d8] sm:$0xff]
      %v3900 = vld [vmem:[%s3743 + $0x3e0] sm:$0xff]
      %v3901 = vld [vmem:[%s3743 + $0x3e8] sm:$0xff]
      %v3902 = vld [vmem:[%s3743 + $0x3f0] sm:$0xff]
      %v3903 = vld [vmem:[%s3743 + $0x3f8] sm:$0xff]
      %s3904 = sshra.s32 %s3775, 7
      %s3905 = sand.u32 %s3775, 127
      %s3906 = scalar_lea.vmem [#allocation28], %s3904
      %v3907 = vld [vmem:[%s3906] sm:$0x3]
      %v3909 = vperm.slane %v3907, 0
      %v3910 = vperm.slane %v3907, 1
      %v4041 = vunpack.c.l.b16 %v3776
      %v4042 = vunpack.c.h.b16 %v3776
      %v4043 = vunpack.c.l.b16 %v3777
      %v4044 = vunpack.c.h.b16 %v3777
      %v4045 = vunpack.c.l.b16 %v3778
      %v4046 = vunpack.c.h.b16 %v3778
      %v4047 = vunpack.c.l.b16 %v3779
      %v4048 = vunpack.c.h.b16 %v3779
      %v4049 = vunpack.c.l.b16 %v3780
      %v4050 = vunpack.c.h.b16 %v3780
      %v4051 = vunpack.c.l.b16 %v3781
      %v4052 = vunpack.c.h.b16 %v3781
      %v4053 = vunpack.c.l.b16 %v3782
      %v4054 = vunpack.c.h.b16 %v3782
      %v4055 = vunpack.c.l.b16 %v3783
      %v4056 = vunpack.c.h.b16 %v3783
      %v4057 = vunpack.c.l.b16 %v3784
      %v4058 = vunpack.c.h.b16 %v3784
      %v4059 = vunpack.c.l.b16 %v3785
      %v4060 = vunpack.c.h.b16 %v3785
      %v4061 = vunpack.c.l.b16 %v3786
      %v4062 = vunpack.c.h.b16 %v3786
      %v4063 = vunpack.c.l.b16 %v3787
      %v4064 = vunpack.c.h.b16 %v3787
      %v4065 = vunpack.c.l.b16 %v3788
      %v4066 = vunpack.c.h.b16 %v3788
      %v4067 = vunpack.c.l.b16 %v3789
      %v4068 = vunpack.c.h.b16 %v3789
      %v4069 = vunpack.c.l.b16 %v3790
      %v4070 = vunpack.c.h.b16 %v3790
      %v4071 = vunpack.c.l.b16 %v3791
      %v4072 = vunpack.c.h.b16 %v3791
      %v4073 = vunpack.c.l.b16 %v3792
      %v4074 = vunpack.c.h.b16 %v3792
      %v4075 = vunpack.c.l.b16 %v3793
      %v4076 = vunpack.c.h.b16 %v3793
      %v4077 = vunpack.c.l.b16 %v3794
      %v4078 = vunpack.c.h.b16 %v3794
      %v4079 = vunpack.c.l.b16 %v3795
      %v4080 = vunpack.c.h.b16 %v3795
      %v4081 = vunpack.c.l.b16 %v3796
      %v4082 = vunpack.c.h.b16 %v3796
      %v4083 = vunpack.c.l.b16 %v3797
      %v4084 = vunpack.c.h.b16 %v3797
      %v4085 = vunpack.c.l.b16 %v3798
      %v4086 = vunpack.c.h.b16 %v3798
      %v4087 = vunpack.c.l.b16 %v3799
      %v4088 = vunpack.c.h.b16 %v3799
      %v4089 = vunpack.c.l.b16 %v3800
      %v4090 = vunpack.c.h.b16 %v3800
      %v4091 = vunpack.c.l.b16 %v3801
      %v4092 = vunpack.c.h.b16 %v3801
      %v4093 = vunpack.c.l.b16 %v3802
      %v4094 = vunpack.c.h.b16 %v3802
      %v4095 = vunpack.c.l.b16 %v3803
      %v4096 = vunpack.c.h.b16 %v3803
      %v4097 = vunpack.c.l.b16 %v3804
      %v4098 = vunpack.c.h.b16 %v3804
      %v4099 = vunpack.c.l.b16 %v3805
      %v4100 = vunpack.c.h.b16 %v3805
      %v4101 = vunpack.c.l.b16 %v3806
      %v4102 = vunpack.c.h.b16 %v3806
      %v4103 = vunpack.c.l.b16 %v3807
      %v4104 = vunpack.c.h.b16 %v3807
      %v4105 = vunpack.c.l.b16 %v3808
      %v4106 = vunpack.c.h.b16 %v3808
      %v4107 = vunpack.c.l.b16 %v3809
      %v4108 = vunpack.c.h.b16 %v3809
      %v4109 = vunpack.c.l.b16 %v3810
      %v4110 = vunpack.c.h.b16 %v3810
      %v4111 = vunpack.c.l.b16 %v3811
      %v4112 = vunpack.c.h.b16 %v3811
      %v4113 = vunpack.c.l.b16 %v3812
      %v4114 = vunpack.c.h.b16 %v3812
      %v4115 = vunpack.c.l.b16 %v3813
      %v4116 = vunpack.c.h.b16 %v3813
      %v4117 = vunpack.c.l.b16 %v3814
      %v4118 = vunpack.c.h.b16 %v3814
      %v4119 = vunpack.c.l.b16 %v3815
      %v4120 = vunpack.c.h.b16 %v3815
      %v4121 = vunpack.c.l.b16 %v3816
      %v4122 = vunpack.c.h.b16 %v3816
      %v4123 = vunpack.c.l.b16 %v3817
      %v4124 = vunpack.c.h.b16 %v3817
      %v4125 = vunpack.c.l.b16 %v3818
      %v4126 = vunpack.c.h.b16 %v3818
      %v4127 = vunpack.c.l.b16 %v3819
      %v4128 = vunpack.c.h.b16 %v3819
      %v4129 = vunpack.c.l.b16 %v3820
      %v4130 = vunpack.c.h.b16 %v3820
      %v4131 = vunpack.c.l.b16 %v3821
      %v4132 = vunpack.c.h.b16 %v3821
      %v4133 = vunpack.c.l.b16 %v3822
      %v4134 = vunpack.c.h.b16 %v3822
      %v4135 = vunpack.c.l.b16 %v3823
      %v4136 = vunpack.c.h.b16 %v3823
      %v4137 = vunpack.c.l.b16 %v3824
      %v4138 = vunpack.c.h.b16 %v3824
      %v4139 = vunpack.c.l.b16 %v3825
      %v4140 = vunpack.c.h.b16 %v3825
      %v4141 = vunpack.c.l.b16 %v3826
      %v4142 = vunpack.c.h.b16 %v3826
      %v4143 = vunpack.c.l.b16 %v3827
      %v4144 = vunpack.c.h.b16 %v3827
      %v4145 = vunpack.c.l.b16 %v3828
      %v4146 = vunpack.c.h.b16 %v3828
      %v4147 = vunpack.c.l.b16 %v3829
      %v4148 = vunpack.c.h.b16 %v3829
      %v4149 = vunpack.c.l.b16 %v3830
      %v4150 = vunpack.c.h.b16 %v3830
      %v4151 = vunpack.c.l.b16 %v3831
      %v4152 = vunpack.c.h.b16 %v3831
      %v4153 = vunpack.c.l.b16 %v3832
      %v4154 = vunpack.c.h.b16 %v3832
      %v4155 = vunpack.c.l.b16 %v3833
      %v4156 = vunpack.c.h.b16 %v3833
      %v4157 = vunpack.c.l.b16 %v3834
      %v4158 = vunpack.c.h.b16 %v3834
      %v4159 = vunpack.c.l.b16 %v3835
      %v4160 = vunpack.c.h.b16 %v3835
      %v4161 = vunpack.c.l.b16 %v3836
      %v4162 = vunpack.c.h.b16 %v3836
      %v4163 = vunpack.c.l.b16 %v3837
      %v4164 = vunpack.c.h.b16 %v3837
      %v4165 = vunpack.c.l.b16 %v3838
      %v4166 = vunpack.c.h.b16 %v3838
      %v4167 = vunpack.c.l.b16 %v3839
      %v4168 = vunpack.c.h.b16 %v3839
      %v4169 = vunpack.c.l.b16 %v3840
      %v4170 = vunpack.c.h.b16 %v3840
      %v4171 = vunpack.c.l.b16 %v3841
      %v4172 = vunpack.c.h.b16 %v3841
      %v4173 = vunpack.c.l.b16 %v3842
      %v4174 = vunpack.c.h.b16 %v3842
      %v4175 = vunpack.c.l.b16 %v3843
      %v4176 = vunpack.c.h.b16 %v3843
      %v4177 = vunpack.c.l.b16 %v3844
      %v4178 = vunpack.c.h.b16 %v3844
      %v4179 = vunpack.c.l.b16 %v3845
      %v4180 = vunpack.c.h.b16 %v3845
      %v4181 = vunpack.c.l.b16 %v3846
      %v4182 = vunpack.c.h.b16 %v3846
      %v4183 = vunpack.c.l.b16 %v3847
      %v4184 = vunpack.c.h.b16 %v3847
      %v4185 = vunpack.c.l.b16 %v3848
      %v4186 = vunpack.c.h.b16 %v3848
      %v4187 = vunpack.c.l.b16 %v3849
      %v4188 = vunpack.c.h.b16 %v3849
      %v4189 = vunpack.c.l.b16 %v3850
      %v4190 = vunpack.c.h.b16 %v3850
      %v4191 = vunpack.c.l.b16 %v3851
      %v4192 = vunpack.c.h.b16 %v3851
      %v4193 = vunpack.c.l.b16 %v3852
      %v4194 = vunpack.c.h.b16 %v3852
      %v4195 = vunpack.c.l.b16 %v3853
      %v4196 = vunpack.c.h.b16 %v3853
      %v4197 = vunpack.c.l.b16 %v3854
      %v4198 = vunpack.c.h.b16 %v3854
      %v4199 = vunpack.c.l.b16 %v3855
      %v4200 = vunpack.c.h.b16 %v3855
      %v4201 = vunpack.c.l.b16 %v3856
      %v4202 = vunpack.c.h.b16 %v3856
      %v4203 = vunpack.c.l.b16 %v3857
      %v4204 = vunpack.c.h.b16 %v3857
      %v4205 = vunpack.c.l.b16 %v3858
      %v4206 = vunpack.c.h.b16 %v3858
      %v4207 = vunpack.c.l.b16 %v3859
      %v4208 = vunpack.c.h.b16 %v3859
      %v4209 = vunpack.c.l.b16 %v3860
      %v4210 = vunpack.c.h.b16 %v3860
      %v4211 = vunpack.c.l.b16 %v3861
      %v4212 = vunpack.c.h.b16 %v3861
      %v4213 = vunpack.c.l.b16 %v3862
      %v4214 = vunpack.c.h.b16 %v3862
      %v4215 = vunpack.c.l.b16 %v3863
      %v4216 = vunpack.c.h.b16 %v3863
      %v4217 = vunpack.c.l.b16 %v3864
      %v4218 = vunpack.c.h.b16 %v3864
      %v4219 = vunpack.c.l.b16 %v3865
      %v4220 = vunpack.c.h.b16 %v3865
      %v4221 = vunpack.c.l.b16 %v3866
      %v4222 = vunpack.c.h.b16 %v3866
      %v4223 = vunpack.c.l.b16 %v3867
      %v4224 = vunpack.c.h.b16 %v3867
      %v4225 = vunpack.c.l.b16 %v3868
      %v4226 = vunpack.c.h.b16 %v3868
      %v4227 = vunpack.c.l.b16 %v3869
      %v4228 = vunpack.c.h.b16 %v3869
      %v4229 = vunpack.c.l.b16 %v3870
      %v4230 = vunpack.c.h.b16 %v3870
      %v4231 = vunpack.c.l.b16 %v3871
      %v4232 = vunpack.c.h.b16 %v3871
      %v4233 = vunpack.c.l.b16 %v3872
      %v4234 = vunpack.c.h.b16 %v3872
      %v4235 = vunpack.c.l.b16 %v3873
      %v4236 = vunpack.c.h.b16 %v3873
      %v4237 = vunpack.c.l.b16 %v3874
      %v4238 = vunpack.c.h.b16 %v3874
      %v4239 = vunpack.c.l.b16 %v3875
      %v4240 = vunpack.c.h.b16 %v3875
      %v4241 = vunpack.c.l.b16 %v3876
      %v4242 = vunpack.c.h.b16 %v3876
      %v4243 = vunpack.c.l.b16 %v3877
      %v4244 = vunpack.c.h.b16 %v3877
      %v4245 = vunpack.c.l.b16 %v3878
      %v4246 = vunpack.c.h.b16 %v3878
      %v4247 = vunpack.c.l.b16 %v3879
      %v4248 = vunpack.c.h.b16 %v3879
      %v4249 = vunpack.c.l.b16 %v3880
      %v4250 = vunpack.c.h.b16 %v3880
      %v4251 = vunpack.c.l.b16 %v3881
      %v4252 = vunpack.c.h.b16 %v3881
      %v4253 = vunpack.c.l.b16 %v3882
      %v4254 = vunpack.c.h.b16 %v3882
      %v4255 = vunpack.c.l.b16 %v3883
      %v4256 = vunpack.c.h.b16 %v3883
      %v4257 = vunpack.c.l.b16 %v3884
      %v4258 = vunpack.c.h.b16 %v3884
      %v4259 = vunpack.c.l.b16 %v3885
      %v4260 = vunpack.c.h.b16 %v3885
      %v4261 = vunpack.c.l.b16 %v3886
      %v4262 = vunpack.c.h.b16 %v3886
      %v4263 = vunpack.c.l.b16 %v3887
      %v4264 = vunpack.c.h.b16 %v3887
      %v4265 = vunpack.c.l.b16 %v3888
      %v4266 = vunpack.c.h.b16 %v3888
      %v4267 = vunpack.c.l.b16 %v3889
      %v4268 = vunpack.c.h.b16 %v3889
      %v4269 = vunpack.c.l.b16 %v3890
      %v4270 = vunpack.c.h.b16 %v3890
      %v4271 = vunpack.c.l.b16 %v3891
      %v4272 = vunpack.c.h.b16 %v3891
      %v4273 = vunpack.c.l.b16 %v3892
      %v4274 = vunpack.c.h.b16 %v3892
      %v4275 = vunpack.c.l.b16 %v3893
      %v4276 = vunpack.c.h.b16 %v3893
      %v4277 = vunpack.c.l.b16 %v3894
      %v4278 = vunpack.c.h.b16 %v3894
      %v4279 = vunpack.c.l.b16 %v3895
      %v4280 = vunpack.c.h.b16 %v3895
      %v4281 = vunpack.c.l.b16 %v3896
      %v4282 = vunpack.c.h.b16 %v3896
      %v4283 = vunpack.c.l.b16 %v3897
      %v4284 = vunpack.c.h.b16 %v3897
      %v4285 = vunpack.c.l.b16 %v3898
      %v4286 = vunpack.c.h.b16 %v3898
      %v4287 = vunpack.c.l.b16 %v3899
      %v4288 = vunpack.c.h.b16 %v3899
      %v4289 = vunpack.c.l.b16 %v3900
      %v4290 = vunpack.c.h.b16 %v3900
      %v4291 = vunpack.c.l.b16 %v3901
      %v4292 = vunpack.c.h.b16 %v3901
      %v4293 = vunpack.c.l.b16 %v3902
      %v4294 = vunpack.c.h.b16 %v3902
      %v4295 = vunpack.c.l.b16 %v3903
      %v4296 = vunpack.c.h.b16 %v3903
      %v4297 = vpack.c.b16 %v4043, %v4041
      %v4298 = vpack.c.b16 %v4044, %v4042
      %v4299 = vpack.c.b16 %v4047, %v4045
      %v4300 = vpack.c.b16 %v4048, %v4046
      %v4301 = vpack.c.b16 %v4051, %v4049
      %v4302 = vpack.c.b16 %v4052, %v4050
      %v4303 = vpack.c.b16 %v4055, %v4053
      %v4304 = vpack.c.b16 %v4056, %v4054
      %v4305 = vpack.c.b16 %v4059, %v4057
      %v4306 = vpack.c.b16 %v4060, %v4058
      %v4307 = vpack.c.b16 %v4063, %v4061
      %v4308 = vpack.c.b16 %v4064, %v4062
      %v4309 = vpack.c.b16 %v4067, %v4065
      %v4310 = vpack.c.b16 %v4068, %v4066
      %v4311 = vpack.c.b16 %v4071, %v4069
      %v4312 = vpack.c.b16 %v4072, %v4070
      %v4313 = vpack.c.b16 %v4075, %v4073
      %v4314 = vpack.c.b16 %v4076, %v4074
      %v4315 = vpack.c.b16 %v4079, %v4077
      %v4316 = vpack.c.b16 %v4080, %v4078
      %v4317 = vpack.c.b16 %v4083, %v4081
      %v4318 = vpack.c.b16 %v4084, %v4082
      %v4319 = vpack.c.b16 %v4087, %v4085
      %v4320 = vpack.c.b16 %v4088, %v4086
      %v4321 = vpack.c.b16 %v4091, %v4089
      %v4322 = vpack.c.b16 %v4092, %v4090
      %v4323 = vpack.c.b16 %v4095, %v4093
      %v4324 = vpack.c.b16 %v4096, %v4094
      %v4325 = vpack.c.b16 %v4099, %v4097
      %v4326 = vpack.c.b16 %v4100, %v4098
      %v4327 = vpack.c.b16 %v4103, %v4101
      %v4328 = vpack.c.b16 %v4104, %v4102
      %v4329 = vpack.c.b16 %v4107, %v4105
      %v4330 = vpack.c.b16 %v4108, %v4106
      %v4331 = vpack.c.b16 %v4111, %v4109
      %v4332 = vpack.c.b16 %v4112, %v4110
      %v4333 = vpack.c.b16 %v4115, %v4113
      %v4334 = vpack.c.b16 %v4116, %v4114
      %v4335 = vpack.c.b16 %v4119, %v4117
      %v4336 = vpack.c.b16 %v4120, %v4118
      %v4337 = vpack.c.b16 %v4123, %v4121
      %v4338 = vpack.c.b16 %v4124, %v4122
      %v4339 = vpack.c.b16 %v4127, %v4125
      %v4340 = vpack.c.b16 %v4128, %v4126
      %v4341 = vpack.c.b16 %v4131, %v4129
      %v4342 = vpack.c.b16 %v4132, %v4130
      %v4343 = vpack.c.b16 %v4135, %v4133
      %v4344 = vpack.c.b16 %v4136, %v4134
      %v4345 = vpack.c.b16 %v4139, %v4137
      %v4346 = vpack.c.b16 %v4140, %v4138
      %v4347 = vpack.c.b16 %v4143, %v4141
      %v4348 = vpack.c.b16 %v4144, %v4142
      %v4349 = vpack.c.b16 %v4147, %v4145
      %v4350 = vpack.c.b16 %v4148, %v4146
      %v4351 = vpack.c.b16 %v4151, %v4149
      %v4352 = vpack.c.b16 %v4152, %v4150
      %v4353 = vpack.c.b16 %v4155, %v4153
      %v4354 = vpack.c.b16 %v4156, %v4154
      %v4355 = vpack.c.b16 %v4159, %v4157
      %v4356 = vpack.c.b16 %v4160, %v4158
      %v4357 = vpack.c.b16 %v4163, %v4161
      %v4358 = vpack.c.b16 %v4164, %v4162
      %v4359 = vpack.c.b16 %v4167, %v4165
      %v4360 = vpack.c.b16 %v4168, %v4166
      %v4361 = vpack.c.b16 %v4171, %v4169
      %v4362 = vpack.c.b16 %v4172, %v4170
      %v4363 = vpack.c.b16 %v4175, %v4173
      %v4364 = vpack.c.b16 %v4176, %v4174
      %v4365 = vpack.c.b16 %v4179, %v4177
      %v4366 = vpack.c.b16 %v4180, %v4178
      %v4367 = vpack.c.b16 %v4183, %v4181
      %v4368 = vpack.c.b16 %v4184, %v4182
      %v4369 = vpack.c.b16 %v4187, %v4185
      %v4370 = vpack.c.b16 %v4188, %v4186
      %v4371 = vpack.c.b16 %v4191, %v4189
      %v4372 = vpack.c.b16 %v4192, %v4190
      %v4373 = vpack.c.b16 %v4195, %v4193
      %v4374 = vpack.c.b16 %v4196, %v4194
      %v4375 = vpack.c.b16 %v4199, %v4197
      %v4376 = vpack.c.b16 %v4200, %v4198
      %v4377 = vpack.c.b16 %v4203, %v4201
      %v4378 = vpack.c.b16 %v4204, %v4202
      %v4379 = vpack.c.b16 %v4207, %v4205
      %v4380 = vpack.c.b16 %v4208, %v4206
      %v4381 = vpack.c.b16 %v4211, %v4209
      %v4382 = vpack.c.b16 %v4212, %v4210
      %v4383 = vpack.c.b16 %v4215, %v4213
      %v4384 = vpack.c.b16 %v4216, %v4214
      %v4385 = vpack.c.b16 %v4219, %v4217
      %v4386 = vpack.c.b16 %v4220, %v4218
      %v4387 = vpack.c.b16 %v4223, %v4221
      %v4388 = vpack.c.b16 %v4224, %v4222
      %v4389 = vpack.c.b16 %v4227, %v4225
      %v4390 = vpack.c.b16 %v4228, %v4226
      %v4391 = vpack.c.b16 %v4231, %v4229
      %v4392 = vpack.c.b16 %v4232, %v4230
      %v4393 = vpack.c.b16 %v4235, %v4233
      %v4394 = vpack.c.b16 %v4236, %v4234
      %v4395 = vpack.c.b16 %v4239, %v4237
      %v4396 = vpack.c.b16 %v4240, %v4238
      %v4397 = vpack.c.b16 %v4243, %v4241
      %v4398 = vpack.c.b16 %v4244, %v4242
      %v4399 = vpack.c.b16 %v4247, %v4245
      %v4400 = vpack.c.b16 %v4248, %v4246
      %v4401 = vpack.c.b16 %v4251, %v4249
      %v4402 = vpack.c.b16 %v4252, %v4250
      %v4403 = vpack.c.b16 %v4255, %v4253
      %v4404 = vpack.c.b16 %v4256, %v4254
      %v4405 = vpack.c.b16 %v4259, %v4257
      %v4406 = vpack.c.b16 %v4260, %v4258
      %v4407 = vpack.c.b16 %v4263, %v4261
      %v4408 = vpack.c.b16 %v4264, %v4262
      %v4409 = vpack.c.b16 %v4267, %v4265
      %v4410 = vpack.c.b16 %v4268, %v4266
      %v4411 = vpack.c.b16 %v4271, %v4269
      %v4412 = vpack.c.b16 %v4272, %v4270
      %v4413 = vpack.c.b16 %v4275, %v4273
      %v4414 = vpack.c.b16 %v4276, %v4274
      %v4415 = vpack.c.b16 %v4279, %v4277
      %v4416 = vpack.c.b16 %v4280, %v4278
      %v4417 = vpack.c.b16 %v4283, %v4281
      %v4418 = vpack.c.b16 %v4284, %v4282
      %v4419 = vpack.c.b16 %v4287, %v4285
      %v4420 = vpack.c.b16 %v4288, %v4286
      %v4421 = vpack.c.b16 %v4291, %v4289
      %v4422 = vpack.c.b16 %v4292, %v4290
      %v4423 = vpack.c.b16 %v4295, %v4293
      %v4424 = vpack.c.b16 %v4296, %v4294
      %4553 = vmatpush.bf16.msra.mxu0 %v4311
      %4554 = vmatpush.bf16.msra.mxu0 %v4309
      %4555 = vmatpush.bf16.msra.mxu0 %v4307
      %4556 = vmatpush.bf16.msra.mxu0 %v4305
      %4557 = vmatpush.bf16.msra.mxu0 %v4303
      %4558 = vmatpush.bf16.msra.mxu0 %v4301
      %4559 = vmatpush.bf16.msra.mxu0 %v4299
      %4560 = vmatpush.bf16.msra.mxu0 %v4297
      %4561 = vmatmul.bf16.gmra.mxu0 %v3726
      %v4562 = vpop.f32.mrf.mxu0
      %v4563 = vadd.f32 %v3909, %v4562
      %v4564 = vpop.f32.mrf.mxu0
      %v4565 = vadd.f32 %v3909, %v4564
      %4566 = vdwg.mxu0
      %4567 = vmatpush.bf16.msra.mxu0 %v4327
      %4568 = vmatpush.bf16.msra.mxu0 %v4325
      %4569 = vmatpush.bf16.msra.mxu0 %v4323
      %4570 = vmatpush.bf16.msra.mxu0 %v4321
      %4571 = vmatpush.bf16.msra.mxu0 %v4319
      %4572 = vmatpush.bf16.msra.mxu0 %v4317
      %4573 = vmatpush.bf16.msra.mxu0 %v4315
      %4574 = vmatpush.bf16.msra.mxu0 %v4313
      %4575 = vmatmul.bf16.gmra.mxu0 %v3727
      %v4576 = vpop.f32.mrf.mxu0
      %v4577 = vadd.f32 %v4563, %v4576
      %v4578 = vpop.f32.mrf.mxu0
      %v4579 = vadd.f32 %v4565, %v4578
      %4580 = vdwg.mxu0
      %4581 = vmatpush.bf16.msra.mxu0 %v4343
      %4582 = vmatpush.bf16.msra.mxu0 %v4341
      %4583 = vmatpush.bf16.msra.mxu0 %v4339
      %4584 = vmatpush.bf16.msra.mxu0 %v4337
      %4585 = vmatpush.bf16.msra.mxu0 %v4335
      %4586 = vmatpush.bf16.msra.mxu0 %v4333
      %4587 = vmatpush.bf16.msra.mxu0 %v4331
      %4588 = vmatpush.bf16.msra.mxu0 %v4329
      %4589 = vmatmul.bf16.gmra.mxu0 %v3728
      %v4590 = vpop.f32.mrf.mxu0
      %v4591 = vadd.f32 %v4577, %v4590
      %v4592 = vpop.f32.mrf.mxu0
      %v4593 = vadd.f32 %v4579, %v4592
      %4594 = vdwg.mxu0
      %4595 = vmatpush.bf16.msra.mxu0 %v4359
      %4596 = vmatpush.bf16.msra.mxu0 %v4357
      %4597 = vmatpush.bf16.msra.mxu0 %v4355
      %4598 = vmatpush.bf16.msra.mxu0 %v4353
      %4599 = vmatpush.bf16.msra.mxu0 %v4351
      %4600 = vmatpush.bf16.msra.mxu0 %v4349
      %4601 = vmatpush.bf16.msra.mxu0 %v4347
      %4602 = vmatpush.bf16.msra.mxu0 %v4345
      %4603 = vmatmul.bf16.gmra.mxu0 %v3729
      %v4604 = vpop.f32.mrf.mxu0
      %v4605 = vadd.f32 %v4591, %v4604
      %v4606 = vpop.f32.mrf.mxu0
      %v4607 = vadd.f32 %v4593, %v4606
      %4608 = vdwg.mxu0
      %4609 = vmatpush.bf16.msra.mxu0 %v4375
      %4610 = vmatpush.bf16.msra.mxu0 %v4373
      %4611 = vmatpush.bf16.msra.mxu0 %v4371
      %4612 = vmatpush.bf16.msra.mxu0 %v4369
      %4613 = vmatpush.bf16.msra.mxu0 %v4367
      %4614 = vmatpush.bf16.msra.mxu0 %v4365
      %4615 = vmatpush.bf16.msra.mxu0 %v4363
      %4616 = vmatpush.bf16.msra.mxu0 %v4361
      %4617 = vmatmul.bf16.gmra.mxu0 %v3730
      %v4618 = vpop.f32.mrf.mxu0
      %v4619 = vadd.f32 %v4605, %v4618
      %v4620 = vpop.f32.mrf.mxu0
      %v4621 = vadd.f32 %v4607, %v4620
      %4622 = vdwg.mxu0
      %4623 = vmatpush.bf16.msra.mxu0 %v4391
      %4624 = vmatpush.bf16.msra.mxu0 %v4389
      %4625 = vmatpush.bf16.msra.mxu0 %v4387
      %4626 = vmatpush.bf16.msra.mxu0 %v4385
      %4627 = vmatpush.bf16.msra.mxu0 %v4383
      %4628 = vmatpush.bf16.msra.mxu0 %v4381
      %4629 = vmatpush.bf16.msra.mxu0 %v4379
      %4630 = vmatpush.bf16.msra.mxu0 %v4377
      %4631 = vmatmul.bf16.gmra.mxu0 %v3731
      %v4632 = vpop.f32.mrf.mxu0
      %v4633 = vadd.f32 %v4619, %v4632
      %v4634 = vpop.f32.mrf.mxu0
      %v4635 = vadd.f32 %v4621, %v4634
      %4636 = vdwg.mxu0
      %4637 = vmatpush.bf16.msra.mxu0 %v4407
      %4638 = vmatpush.bf16.msra.mxu0 %v4405
      %4639 = vmatpush.bf16.msra.mxu0 %v4403
      %4640 = vmatpush.bf16.msra.mxu0 %v4401
      %4641 = vmatpush.bf16.msra.mxu0 %v4399
      %4642 = vmatpush.bf16.msra.mxu0 %v4397
      %4643 = vmatpush.bf16.msra.mxu0 %v4395
      %4644 = vmatpush.bf16.msra.mxu0 %v4393
      %4645 = vmatmul.bf16.gmra.mxu0 %v3732
      %v4646 = vpop.f32.mrf.mxu0
      %v4647 = vadd.f32 %v4633, %v4646
      %v4648 = vpop.f32.mrf.mxu0
      %v4649 = vadd.f32 %v4635, %v4648
      %4650 = vdwg.mxu0
      %4651 = vmatpush.bf16.msra.mxu0 %v4423
      %4652 = vmatpush.bf16.msra.mxu0 %v4421
      %4653 = vmatpush.bf16.msra.mxu0 %v4419
      %4654 = vmatpush.bf16.msra.mxu0 %v4417
      %4655 = vmatpush.bf16.msra.mxu0 %v4415
      %4656 = vmatpush.bf16.msra.mxu0 %v4413
      %4657 = vmatpush.bf16.msra.mxu0 %v4411
      %4658 = vmatpush.bf16.msra.mxu0 %v4409
      %4659 = vmatmul.bf16.gmra.mxu0 %v3733
      %v4660 = vpop.f32.mrf.mxu0
      %v4661 = vadd.f32 %v4647, %v4660
      %v4662 = vpop.f32.mrf.mxu0
      %v4663 = vadd.f32 %v4649, %v4662
      %4664 = vdwg.mxu0
      %4665 = vmatpush.bf16.msra.mxu0 %v4312
      %4666 = vmatpush.bf16.msra.mxu0 %v4310
      %4667 = vmatpush.bf16.msra.mxu0 %v4308
      %4668 = vmatpush.bf16.msra.mxu0 %v4306
      %4669 = vmatpush.bf16.msra.mxu0 %v4304
      %4670 = vmatpush.bf16.msra.mxu0 %v4302
      %4671 = vmatpush.bf16.msra.mxu0 %v4300
      %4672 = vmatpush.bf16.msra.mxu0 %v4298
      %4673 = vmatmul.bf16.gmra.mxu0 %v3726
      %v4674 = vpop.f32.mrf.mxu0
      %v4675 = vadd.f32 %v3910, %v4674
      %v4676 = vpop.f32.mrf.mxu0
      %v4677 = vadd.f32 %v3910, %v4676
      %4678 = vdwg.mxu0
      %4679 = vmatpush.bf16.msra.mxu0 %v4328
      %4680 = vmatpush.bf16.msra.mxu0 %v4326
      %4681 = vmatpush.bf16.msra.mxu0 %v4324
      %4682 = vmatpush.bf16.msra.mxu0 %v4322
      %4683 = vmatpush.bf16.msra.mxu0 %v4320
      %4684 = vmatpush.bf16.msra.mxu0 %v4318
      %4685 = vmatpush.bf16.msra.mxu0 %v4316
      %4686 = vmatpush.bf16.msra.mxu0 %v4314
      %4687 = vmatmul.bf16.gmra.mxu0 %v3727
      %v4688 = vpop.f32.mrf.mxu0
      %v4689 = vadd.f32 %v4675, %v4688
      %v4690 = vpop.f32.mrf.mxu0
      %v4691 = vadd.f32 %v4677, %v4690
      %4692 = vdwg.mxu0
      %4693 = vmatpush.bf16.msra.mxu0 %v4344
      %4694 = vmatpush.bf16.msra.mxu0 %v4342
      %4695 = vmatpush.bf16.msra.mxu0 %v4340
      %4696 = vmatpush.bf16.msra.mxu0 %v4338
      %4697 = vmatpush.bf16.msra.mxu0 %v4336
      %4698 = vmatpush.bf16.msra.mxu0 %v4334
      %4699 = vmatpush.bf16.msra.mxu0 %v4332
      %4700 = vmatpush.bf16.msra.mxu0 %v4330
      %4701 = vmatmul.bf16.gmra.mxu0 %v3728
      %v4702 = vpop.f32.mrf.mxu0
      %v4703 = vadd.f32 %v4689, %v4702
      %v4704 = vpop.f32.mrf.mxu0
      %v4705 = vadd.f32 %v4691, %v4704
      %4706 = vdwg.mxu0
      %4707 = vmatpush.bf16.msra.mxu0 %v4360
      %4708 = vmatpush.bf16.msra.mxu0 %v4358
      %4709 = vmatpush.bf16.msra.mxu0 %v4356
      %4710 = vmatpush.bf16.msra.mxu0 %v4354
      %4711 = vmatpush.bf16.msra.mxu0 %v4352
      %4712 = vmatpush.bf16.msra.mxu0 %v4350
      %4713 = vmatpush.bf16.msra.mxu0 %v4348
      %4714 = vmatpush.bf16.msra.mxu0 %v4346
      %4715 = vmatmul.bf16.gmra.mxu0 %v3729
      %v4716 = vpop.f32.mrf.mxu0
      %v4717 = vadd.f32 %v4703, %v4716
      %v4718 = vpop.f32.mrf.mxu0
      %v4719 = vadd.f32 %v4705, %v4718
      %4720 = vdwg.mxu0
      %4721 = vmatpush.bf16.msra.mxu0 %v4376
      %4722 = vmatpush.bf16.msra.mxu0 %v4374
      %4723 = vmatpush.bf16.msra.mxu0 %v4372
      %4724 = vmatpush.bf16.msra.mxu0 %v4370
      %4725 = vmatpush.bf16.msra.mxu0 %v4368
      %4726 = vmatpush.bf16.msra.mxu0 %v4366
      %4727 = vmatpush.bf16.msra.mxu0 %v4364
      %4728 = vmatpush.bf16.msra.mxu0 %v4362
      %4729 = vmatmul.bf16.gmra.mxu0 %v3730
      %v4730 = vpop.f32.mrf.mxu0
      %v4731 = vadd.f32 %v4717, %v4730
      %v4732 = vpop.f32.mrf.mxu0
      %v4733 = vadd.f32 %v4719, %v4732
      %4734 = vdwg.mxu0
      %4735 = vmatpush.bf16.msra.mxu0 %v4392
      %4736 = vmatpush.bf16.msra.mxu0 %v4390
      %4737 = vmatpush.bf16.msra.mxu0 %v4388
      %4738 = vmatpush.bf16.msra.mxu0 %v4386
      %4739 = vmatpush.bf16.msra.mxu0 %v4384
      %4740 = vmatpush.bf16.msra.mxu0 %v4382
      %4741 = vmatpush.bf16.msra.mxu0 %v4380
      %4742 = vmatpush.bf16.msra.mxu0 %v4378
      %4743 = vmatmul.bf16.gmra.mxu0 %v3731
      %v4744 = vpop.f32.mrf.mxu0
      %v4745 = vadd.f32 %v4731, %v4744
      %v4746 = vpop.f32.mrf.mxu0
      %v4747 = vadd.f32 %v4733, %v4746
      %4748 = vdwg.mxu0
      %4749 = vmatpush.bf16.msra.mxu0 %v4408
      %4750 = vmatpush.bf16.msra.mxu0 %v4406
      %4751 = vmatpush.bf16.msra.mxu0 %v4404
      %4752 = vmatpush.bf16.msra.mxu0 %v4402
      %4753 = vmatpush.bf16.msra.mxu0 %v4400
      %4754 = vmatpush.bf16.msra.mxu0 %v4398
      %4755 = vmatpush.bf16.msra.mxu0 %v4396
      %4756 = vmatpush.bf16.msra.mxu0 %v4394
      %4757 = vmatmul.bf16.gmra.mxu0 %v3732
      %v4758 = vpop.f32.mrf.mxu0
      %v4759 = vadd.f32 %v4745, %v4758
      %v4760 = vpop.f32.mrf.mxu0
      %v4761 = vadd.f32 %v4747, %v4760
      %4762 = vdwg.mxu0
      %4763 = vmatpush.bf16.msra.mxu0 %v4424
      %4764 = vmatpush.bf16.msra.mxu0 %v4422
      %4765 = vmatpush.bf16.msra.mxu0 %v4420
      %4766 = vmatpush.bf16.msra.mxu0 %v4418
      %4767 = vmatpush.bf16.msra.mxu0 %v4416
      %4768 = vmatpush.bf16.msra.mxu0 %v4414
      %4769 = vmatpush.bf16.msra.mxu0 %v4412
      %4770 = vmatpush.bf16.msra.mxu0 %v4410
      %4771 = vmatmul.bf16.gmra.mxu0 %v3733
      %v4772 = vpop.f32.mrf.mxu0
      %v4773 = vadd.f32 %v4759, %v4772
      %v4774 = vpop.f32.mrf.mxu0
      %v4775 = vadd.f32 %v4761, %v4774
      %4776 = vdwg.mxu0
      %v4777 = vtanh.pop %v4661
      %v4778 = vtanh.pop %v4773
      %v4779 = vtanh.pop %v4663
      %v4780 = vtanh.pop %v4775
      %s4781 = smul.addr %s3904, 8
      %s4782 = scalar_lea.vmem [#allocation30], %s4781
      %4783 = vst [vmem:[%s4782] sm:$0xff] %v4777
      %4784 = vst [vmem:[%s4782 + $0x8] sm:$0xff] %v4778
      %4785 = vst [vmem:[%s4782 + $0x40] sm:$0xff] %v4779
      %4786 = vst [vmem:[%s4782 + $0x48] sm:$0xff] %v4780
    $region138: #{tpu_custom_call.1} parent=1 // loop_footer
      %s3739 = sadd.s32 1, %s3735
    $region139: #{tpu_custom_call.1} parent=1 // loop_footer_branch
      %3734 = sbr.rel target = $region135
    $region140: #{tpu_custom_call.1} parent=1 // loop_exit
      _
    // Predicated region
    $region149: #{tpu_custom_call.1} parent=1 // pred_check
      _
    $region150: #{tpu_custom_call.1} parent=1 // pred_check_branch
      %4788 = sbr.rel (0) target = $region152
    $region151: #{tpu_custom_call.1} parent=1 // pred_region
      %4790 = vsyncadd [#allocation6], 0
      %s4791 = sshll.u32 [#allocation30], 4
      %s4792 = int_to_ptr.vmem [resolvable:$true] %s4791
      %s4793 = sshll.u32 %s17, 4
      %s4794 = int_to_ptr.hbm [resolvable:$true] %s4793
      %4799 = dma.vmem_to_hbm [thread:$0]  %s4792, 2048, %s4794, [#allocation6], 1024, 1024, 64
    $region152: #{tpu_custom_call.1} parent=1 // pred_fallthru
      _
    // Predicated region
    $region153: #{tpu_custom_call.1} parent=1 // pred_check
      _
    $region154: #{tpu_custom_call.1} parent=1 // pred_check_branch
      %4801 = sbr.rel (0) target = $region156
    $region155: #{tpu_custom_call.1} parent=1 // pred_region
      %4803 = dma.done [#allocation6], 2048
    $region156: #{tpu_custom_call.1} parent=1 // pred_fallthru
      _
    %4804 = vsyncpa [#allocation5], 1
    %4805 = vsyncpa [#allocation8], 1
    %4806 = vsyncpa [#allocation11], 1
    %4807 = vsyncpa [#allocation14], 1
    %4808 = vsyncpa [#allocation17], 1
    %4809 = vsyncpa [#allocation20], 1
    %4810 = vsyncpa [#allocation23], 1
    %4811 = vsyncpa [#allocation26], 1
    %4812 = vsyncpa [#allocation29], 1
    %4813 = vsyncpa [#allocation6], 1
  %4814 = vsyncmov [#allocation3]
  %s4815 = vpop.sfrf %4814
  %p4816 = scmp.eq.s32.totalorder %s4815, 0
  %p4817 = pneg %p4816
  %4819 = shalt.err (%p4817)
  %s4820 = scalar_lea.sflag [#allocation3], 1
  %4821 = vsyncmov %s4820
  %s4822 = vpop.sfrf %4821
  %p4823 = scmp.eq.s32.totalorder %s4822, 0
  %p4824 = pneg %p4823
  %4826 = shalt.err (%p4824)

</llo_original>
